<compile_context>
chip_gen: v7x
topology: tpu7x:2x2x1
jax: 0.10.0
libtpu: 0.0.40
codegen_flags: <defaults>
</compile_context>

<pallas_src>
import functools

import jax
import jax.numpy as jnp
from jax import lax
from jax.experimental import pallas as pl
from jax.experimental.pallas import tpu as pltpu


def _round_up(x, m):
    return (x + m - 1) // m * m


def _vmem_cap_bytes():
    """Generation-aware VMEM budget: ~75% of physical, capped at 100 MiB.

    v5e/v6e (128 MiB physical) -> ~96 MiB; v7x (64 MiB) -> 48 MiB; unknown -> 48 MiB."""
    try:
        phys = int(pltpu.get_tpu_info().vmem_capacity_bytes)
    except Exception:
        phys = 64 << 20
    return min((phys * 3) // 4, 100 << 20)


def _conv_block(x_refs, w_ref, j, *, n_taps, stride, v_p, tt, fold):
    """Conv output tile (tt*v_p rows, C_out_p) as an f32 VALUE (no output-ref RMW).

    Tap k reads residue stream r = k % stride at temporal offset q = k // stride; every
    row slice is a v_p-aligned (v_p % 8 == 0) dynamic sublane slice of the VMEM slab."""
    rows = tt * v_p
    taps = []
    for k in range(n_taps):
        r = k % stride
        q = k // stride
        start = pl.multiple_of((j * tt + q) * v_p, 8)
        taps.append(x_refs[r][0, pl.ds(start, rows), :])
    if fold:
        # Fold the K taps into one deep (K*C_in) MXU contraction; the lane concat is
        # alignment-free because C_in % 128 == 0 in this path.
        lhs = jnp.concatenate(taps, axis=-1)                      # (rows, K*C_in)
        return jnp.dot(lhs, w_ref[...], preferred_element_type=jnp.float32)
    # Fallback (small / unaligned C_in): K matmuls accumulated in a value; on v7x the
    # MRB accumulates the dot chain in place, and there is no per-tap VMEM round trip.
    acc = jnp.dot(taps[0], w_ref[0], preferred_element_type=jnp.float32)
    for k in range(1, n_taps):
        acc = acc + jnp.dot(taps[k], w_ref[k], preferred_element_type=jnp.float32)
    return acc


def _stats_kernel(*refs, n_taps, stride, v_p, tt, fold):
    """Per-(sample, temporal-tile) conv recompute + channel [sum, sumsq] accumulation."""
    x_refs = refs[:stride]
    w_ref = refs[stride]
    sum_ref = refs[stride + 1]       # (1, 1, C_out_p), VMEM-resident across j
    ssq_ref = refs[stride + 2]       # (1, 1, C_out_p)
    j = pl.program_id(1)

    y = _conv_block(x_refs, w_ref, j, n_taps=n_taps, stride=stride,
                    v_p=v_p, tt=tt, fold=fold)

    @pl.when(j == 0)
    def _():
        sum_ref[...] = jnp.zeros_like(sum_ref)
        ssq_ref[...] = jnp.zeros_like(ssq_ref)

    sum_ref[0] += jnp.sum(y, axis=0, keepdims=True)
    ssq_ref[0] += jnp.sum(y * y, axis=0, keepdims=True)


def _conv_bn_kernel(*refs, n_taps, stride, v_p, tt, fold, c_out):
    """Fused conv recompute + BN apply, stored directly as an NCHW block."""
    x_refs = refs[:stride]
    w_ref = refs[stride]
    scale_ref = refs[stride + 1]     # (1, C_out_p)
    shift_ref = refs[stride + 2]     # (1, C_out_p)
    o_ref = refs[stride + 3]         # (1, C_out, tt*v_p)
    j = pl.program_id(1)

    y = _conv_block(x_refs, w_ref, j, n_taps=n_taps, stride=stride,
                    v_p=v_p, tt=tt, fold=fold)
    y = y * scale_ref[...] + shift_ref[...]
    # In-kernel (rows, C_out_p) -> (C_out_p, rows) transpose: the output minor dim
    # becomes tt*v_p (lane-dense, multiple of 128 by tile choice) and the trailing
    # XLA transpose is eliminated.  Only the real C_out rows are stored.
    o_ref[0] = jnp.transpose(y, (1, 0))[:c_out, :]


def unit_tcn_forward(x, weight, bias, gamma, beta, *, kernel_size=9, stride=1,
                     eps=1e-5, matmul_dtype=jnp.bfloat16, max_rows=2048):
    """forward(x) = BatchNorm2d(Conv2d(x, kernel=(K,1), pad=(K//2,0), stride=(s,1))).

    BatchNorm uses training-mode (biased) batch statistics, matching the PyTorch
    module's default forward.  NOTE: the conv bias is mathematically annihilated by
    batch-statistics BN, so `bias` does not affect the output; accepted for API fidelity.
    """
    N, C_in, T, V = x.shape
    C_out = weight.shape[0]
    K = int(kernel_size)
    s = int(stride)
    pad = (K - 1) // 2
    T_pad = T + 2 * pad
    T_out = (T_pad - K) // s + 1

    V_p = _round_up(V, 8)              # sublane-aligned row groups (e.g. V=25 -> 32)
    C_out_p = _round_up(C_out, 128)    # lane-dense matmul RHS only; never stored to HBM
    fold = (C_in % 128 == 0)           # fold taps into one deep matmul when lane-aligned
    itemsize = jnp.dtype(matmul_dtype).itemsize

    # ---- layout prep (plain JAX; ~1x the input bytes, no K-fold im2col) ----
    x_t = jnp.transpose(x, (0, 2, 3, 1))                              # (N, T, V, C_in)
    x_t = jnp.pad(x_t, ((0, 0), (pad, pad), (0, V_p - V), (0, 0)))    # (N, T_pad, V_p, C_in)
    x_t = x_t.astype(matmul_dtype)
    # Stride-s conv == s stride-1 partial convs on temporal-residue streams.
    x_rows = []
    for r in range(s):
        xr = x_t[:, r::s]                                             # (N, T_r, V_p, C_in)
        x_rows.append(xr.reshape(N, xr.shape[1] * V_p, C_in))

    # weight (C_out, C_in, K, 1) -> (K, C_in, C_out_p) (or (K*C_in, C_out_p) when folded).
    w = jnp.transpose(weight.reshape(C_out, C_in, K), (2, 1, 0))
    w = jnp.pad(w, ((0, 0), (0, 0), (0, C_out_p - C_out))).astype(matmul_dtype)
    w_kernel = w.reshape(K * C_in, C_out_p) if fold else w

    # ---- tile selection (legal, lane-aligned, VMEM-budget aware) ----
    x_bytes = sum(xr.shape[1] * C_in for xr in x_rows) * itemsize
    w_bytes = w_kernel.size * itemsize
    cap = _vmem_cap_bytes()

    def est_vmem(rows):
        live = 4 * rows * C_out_p * 4                 # conv acc + BN value + transpose
        if fold:
            live += rows * K * C_in * itemsize        # concatenated LHS
        out_blk = 2 * C_out * rows * 4                # double-buffered NCHW out block
        small = 16 * C_out_p * 4
        return 2 * (x_bytes + w_bytes) + live + out_blk + small

    # Divisors of T_out whose row count is a multiple of 128 give legal, unmasked
    # NCHW output blocks; the full extent is the always-legal fallback.
    cands = [d for d in range(T_out, 0, -1)
             if T_out % d == 0 and (d * V_p) % 128 == 0]
    if not cands:
        cands = [T_out]  # TODO(synk): ragged T_out with tiny V may want masked tail tiles
    TT = cands[-1]
    for d in cands:
        if d * V_p <= max_rows and est_vmem(d * V_p) <= cap - (4 << 20):
            TT = d
            break
    n_tt = T_out // TT
    vmem_limit = int(min(max(est_vmem(TT * V_p) + (4 << 20), 32 << 20), cap))

    grid = (N, n_tt)
    x_specs = [pl.BlockSpec((1, xr.shape[1], C_in), lambda n, j: (n, 0, 0))
               for xr in x_rows]
    w_spec = pl.BlockSpec(w_kernel.shape, lambda n, j, _nd=w_kernel.ndim: (0,) * _nd)
    cparams = pltpu.CompilerParams(
        # Shard on N (v7x megacore): the whole-sample x slabs are indexed by n only, so
        # sharding j would duplicate their DMA; j is the sequential stats-accum axis.
        dimension_semantics=("parallel", "arbitrary"),
        vmem_limit_bytes=vmem_limit)

    # ---- pass 1: stats only (per-sample channel sum / sum-of-squares) ----
    sum_out, ssq_out = pl.pallas_call(
        functools.partial(_stats_kernel, n_taps=K, stride=s, v_p=V_p, tt=TT, fold=fold),
        out_shape=(jax.ShapeDtypeStruct((N, 1, C_out_p), jnp.float32),
                   jax.ShapeDtypeStruct((N, 1, C_out_p), jnp.float32)),
        grid=grid,
        in_specs=x_specs + [w_spec],
        out_specs=(pl.BlockSpec((1, 1, C_out_p), lambda n, j: (n, 0, 0)),
                   pl.BlockSpec((1, 1, C_out_p), lambda n, j: (n, 0, 0))),
        compiler_params=cparams,
    )(*x_rows, w_kernel)

    # ---- per-channel BN statistics (tiny scalar math, plain JAX glue) ----
    # Per-sample f32 sums + Chan-style combine across samples to soften the
    # E[x^2] - E[x]^2 cancellation; padded-V rows are zero and excluded via `cnt`.
    cnt = jnp.float32(T_out * V)
    sum_n = sum_out[:, 0, :]                         # (N, C_out_p)
    ssq_n = ssq_out[:, 0, :]
    mean_n = sum_n / cnt
    m2_n = jnp.maximum(ssq_n - cnt * mean_n * mean_n, 0.0)
    mean = jnp.mean(mean_n, axis=0)
    m2 = jnp.sum(m2_n, axis=0) + cnt * jnp.sum((mean_n - mean) ** 2, axis=0)
    var = m2 / (N * cnt)                             # biased (training-mode) variance
    inv_std = lax.rsqrt(var + eps)
    gamma_p = jnp.pad(gamma.astype(jnp.float32), (0, C_out_p - C_out))
    beta_p = jnp.pad(beta.astype(jnp.float32), (0, C_out_p - C_out))
    scale = (gamma_p * inv_std).reshape(1, C_out_p)
    # out = gamma*((x@w + b) - (mean_y + b))*inv_std + beta  ==>  conv bias drops.
    shift = (beta_p - mean * gamma_p * inv_std).reshape(1, C_out_p)

    # ---- pass 2: fused conv recompute + BN apply, written once, directly in NCHW ----
    out3 = pl.pallas_call(
        functools.partial(_conv_bn_kernel, n_taps=K, stride=s, v_p=V_p, tt=TT,
                          fold=fold, c_out=C_out),
        out_shape=jax.ShapeDtypeStruct((N, C_out, T_out * V_p), jnp.float32),
        grid=grid,
        in_specs=x_specs + [w_spec,
                            pl.BlockSpec((1, C_out_p), lambda n, j: (0, 0)),
                            pl.BlockSpec((1, C_out_p), lambda n, j: (0, 0))],
        out_specs=pl.BlockSpec((1, C_out, TT * V_p), lambda n, j: (n, 0, j)),
        compiler_params=cparams,
    )(*x_rows, w_kernel, scale, shift)

    if V_p == V:
        return out3.reshape(N, C_out, T_out, V)      # free reshape, no data movement
    # TODO(synk): for V % 8 != 0 (e.g. V=25) this slice is one extra XLA copy of the
    # output; folding it away requires masked width-V stores in pass 2.
    return out3.reshape(N, C_out, T_out, V_p)[..., :V]


def _reference_forward(x, weight, bias, gamma, beta, kernel_size=9, stride=1,
                       eps=1e-5):
    """Pure-JAX reference of unit_tcn.forward (training-mode BN)."""
    pad = (kernel_size - 1) // 2
    y = lax.conv_general_dilated(
        x.astype(jnp.float32), weight.astype(jnp.float32),
        window_strides=(stride, 1), padding=((pad, pad), (0, 0)),
        dimension_numbers=("NCHW", "OIHW", "NCHW"))
    y = y + bias.reshape(1, -1, 1, 1)
    mean = y.mean(axis=(0, 2, 3), keepdims=True)
    var = y.var(axis=(0, 2, 3), keepdims=True)
    return ((y - mean) / jnp.sqrt(var + eps)) * gamma.reshape(1, -1, 1, 1) \
        + beta.reshape(1, -1, 1, 1)


if __name__ == "__main__":
    # Small shapes consistent with unit_tcn's NCHW = (N, C, T, V) convention.
    N, C_in, C_out, T, V = 2, 4, 8, 16, 16
    K = 9

    key = jax.random.PRNGKey(0)
    kx, kw = jax.random.split(key)

    x = jax.random.normal(kx, (N, C_in, T, V), dtype=jnp.float32)

    # conv_init: kaiming_normal_(mode='fan_out') -> std = sqrt(2/(C_out*K*1)); bias = 0.
    w_std = (2.0 / (C_out * K * 1)) ** 0.5
    weight = jax.random.normal(kw, (C_out, C_in, K, 1), dtype=jnp.float32) * w_std
    bias = jnp.zeros((C_out,), dtype=jnp.float32)

    # bn_init(bn, 1): gamma = 1, beta = 0.
    gamma = jnp.ones((C_out,), dtype=jnp.float32)
    beta = jnp.zeros((C_out,), dtype=jnp.float32)

    # TODO(synk): eval-mode BN with running statistics is not implemented (the PyTorch
    # module's forward as given uses training-mode batch statistics).
    checks = [
        dict(stride=1, matmul_dtype=jnp.float32, rtol=1e-3, atol=2e-3),   # exact path
        dict(stride=1, matmul_dtype=jnp.bfloat16, rtol=2e-2, atol=2e-2),  # fast path
        dict(stride=2, matmul_dtype=jnp.float32, rtol=1e-3, atol=2e-3),   # strided conv
    ]
    for cfg in checks:
        out = unit_tcn_forward(x, weight, bias, gamma, beta, kernel_size=K,
                               stride=cfg["stride"],
                               matmul_dtype=cfg["matmul_dtype"])
        out = jax.block_until_ready(out)
        ref = _reference_forward(x, weight, bias, gamma, beta, kernel_size=K,
                                 stride=cfg["stride"])
        t_out = (T + 2 * ((K - 1) // 2) - K) // cfg["stride"] + 1
        assert out.shape == (N, C_out, t_out, V), (out.shape, cfg)
        max_err = float(jnp.max(jnp.abs(out - ref)))
        assert jnp.allclose(out, ref, rtol=cfg["rtol"], atol=cfg["atol"]), (cfg, max_err)

    print("KERNEL_OK")
</pallas_src>

<mosaic_0001>
module attributes {stable_mosaic.version = 11 : i64} {
  func.func @_stats_kernel(%arg0: i32, %arg1: i32, %arg2: memref<1x384x4xf32, #tpu.memory_space<vmem>>, %arg3: memref<9x4x128xf32, #tpu.memory_space<vmem>>, %arg4: memref<1x1x128xf32, #tpu.memory_space<vmem>>, %arg5: memref<1x1x128xf32, #tpu.memory_space<vmem>>) attributes {dimension_semantics = [#tpu.dimension_semantics<parallel>, #tpu.dimension_semantics<arbitrary>], iteration_bounds = array<i64: 2, 1>, scalar_prefetch = 0 : i64, scratch_operands = 0 : i64, tpu.core_type = #tpu.core_type<tc>, window_params = [{transform_indices = @transform_0, window_bounds = array<i64: 1, 384, 4>}, {pipeline_mode = #tpu.pipeline_mode<synchronous>, transform_indices = @transform_1, window_bounds = array<i64: 9, 4, 128>}, {transform_indices = @transform_2, window_bounds = array<i64: 1, 1, 128>}, {transform_indices = @transform_3, window_bounds = array<i64: 1, 1, 128>}]} {
    %c16_i32 = arith.constant 16 : i32
    %0 = arith.muli %arg1, %c16_i32 : i32
    %c0_i32 = arith.constant 0 : i32
    %1 = arith.addi %0, %c0_i32 : i32
    %c16_i32_0 = arith.constant 16 : i32
    %2 = arith.muli %1, %c16_i32_0 : i32
    %3 = tpu.assume_multiple %2, 8 : i32
    %c0 = arith.constant 0 : index
    %4 = arith.index_cast %3 : i32 to index
    %c0_1 = arith.constant 0 : index
    %5 = vector.load %arg2[%c0, %4, %c0_1] : memref<1x384x4xf32, #tpu.memory_space<vmem>>, vector<1x256x4xf32>
    %6 = vector.shape_cast %5 : vector<1x256x4xf32> to vector<256x4xf32>
    %c16_i32_2 = arith.constant 16 : i32
    %7 = arith.muli %arg1, %c16_i32_2 : i32
    %c1_i32 = arith.constant 1 : i32
    %8 = arith.addi %7, %c1_i32 : i32
    %c16_i32_3 = arith.constant 16 : i32
    %9 = arith.muli %8, %c16_i32_3 : i32
    %10 = tpu.assume_multiple %9, 8 : i32
    %c0_4 = arith.constant 0 : index
    %11 = arith.index_cast %10 : i32 to index
    %c0_5 = arith.constant 0 : index
    %12 = vector.load %arg2[%c0_4, %11, %c0_5] : memref<1x384x4xf32, #tpu.memory_space<vmem>>, vector<1x256x4xf32>
    %13 = vector.shape_cast %12 : vector<1x256x4xf32> to vector<256x4xf32>
    %c16_i32_6 = arith.constant 16 : i32
    %14 = arith.muli %arg1, %c16_i32_6 : i32
    %c2_i32 = arith.constant 2 : i32
    %15 = arith.addi %14, %c2_i32 : i32
    %c16_i32_7 = arith.constant 16 : i32
    %16 = arith.muli %15, %c16_i32_7 : i32
    %17 = tpu.assume_multiple %16, 8 : i32
    %c0_8 = arith.constant 0 : index
    %18 = arith.index_cast %17 : i32 to index
    %c0_9 = arith.constant 0 : index
    %19 = vector.load %arg2[%c0_8, %18, %c0_9] : memref<1x384x4xf32, #tpu.memory_space<vmem>>, vector<1x256x4xf32>
    %20 = vector.shape_cast %19 : vector<1x256x4xf32> to vector<256x4xf32>
    %c16_i32_10 = arith.constant 16 : i32
    %21 = arith.muli %arg1, %c16_i32_10 : i32
    %c3_i32 = arith.constant 3 : i32
    %22 = arith.addi %21, %c3_i32 : i32
    %c16_i32_11 = arith.constant 16 : i32
    %23 = arith.muli %22, %c16_i32_11 : i32
    %24 = tpu.assume_multiple %23, 8 : i32
    %c0_12 = arith.constant 0 : index
    %25 = arith.index_cast %24 : i32 to index
    %c0_13 = arith.constant 0 : index
    %26 = vector.load %arg2[%c0_12, %25, %c0_13] : memref<1x384x4xf32, #tpu.memory_space<vmem>>, vector<1x256x4xf32>
    %27 = vector.shape_cast %26 : vector<1x256x4xf32> to vector<256x4xf32>
    %c16_i32_14 = arith.constant 16 : i32
    %28 = arith.muli %arg1, %c16_i32_14 : i32
    %c4_i32 = arith.constant 4 : i32
    %29 = arith.addi %28, %c4_i32 : i32
    %c16_i32_15 = arith.constant 16 : i32
    %30 = arith.muli %29, %c16_i32_15 : i32
    %31 = tpu.assume_multiple %30, 8 : i32
    %c0_16 = arith.constant 0 : index
    %32 = arith.index_cast %31 : i32 to index
    %c0_17 = arith.constant 0 : index
    %33 = vector.load %arg2[%c0_16, %32, %c0_17] : memref<1x384x4xf32, #tpu.memory_space<vmem>>, vector<1x256x4xf32>
    %34 = vector.shape_cast %33 : vector<1x256x4xf32> to vector<256x4xf32>
    %c16_i32_18 = arith.constant 16 : i32
    %35 = arith.muli %arg1, %c16_i32_18 : i32
    %c5_i32 = arith.constant 5 : i32
    %36 = arith.addi %35, %c5_i32 : i32
    %c16_i32_19 = arith.constant 16 : i32
    %37 = arith.muli %36, %c16_i32_19 : i32
    %38 = tpu.assume_multiple %37, 8 : i32
    %c0_20 = arith.constant 0 : index
    %39 = arith.index_cast %38 : i32 to index
    %c0_21 = arith.constant 0 : index
    %40 = vector.load %arg2[%c0_20, %39, %c0_21] : memref<1x384x4xf32, #tpu.memory_space<vmem>>, vector<1x256x4xf32>
    %41 = vector.shape_cast %40 : vector<1x256x4xf32> to vector<256x4xf32>
    %c16_i32_22 = arith.constant 16 : i32
    %42 = arith.muli %arg1, %c16_i32_22 : i32
    %c6_i32 = arith.constant 6 : i32
    %43 = arith.addi %42, %c6_i32 : i32
    %c16_i32_23 = arith.constant 16 : i32
    %44 = arith.muli %43, %c16_i32_23 : i32
    %45 = tpu.assume_multiple %44, 8 : i32
    %c0_24 = arith.constant 0 : index
    %46 = arith.index_cast %45 : i32 to index
    %c0_25 = arith.constant 0 : index
    %47 = vector.load %arg2[%c0_24, %46, %c0_25] : memref<1x384x4xf32, #tpu.memory_space<vmem>>, vector<1x256x4xf32>
    %48 = vector.shape_cast %47 : vector<1x256x4xf32> to vector<256x4xf32>
    %c16_i32_26 = arith.constant 16 : i32
    %49 = arith.muli %arg1, %c16_i32_26 : i32
    %c7_i32 = arith.constant 7 : i32
    %50 = arith.addi %49, %c7_i32 : i32
    %c16_i32_27 = arith.constant 16 : i32
    %51 = arith.muli %50, %c16_i32_27 : i32
    %52 = tpu.assume_multiple %51, 8 : i32
    %c0_28 = arith.constant 0 : index
    %53 = arith.index_cast %52 : i32 to index
    %c0_29 = arith.constant 0 : index
    %54 = vector.load %arg2[%c0_28, %53, %c0_29] : memref<1x384x4xf32, #tpu.memory_space<vmem>>, vector<1x256x4xf32>
    %55 = vector.shape_cast %54 : vector<1x256x4xf32> to vector<256x4xf32>
    %c16_i32_30 = arith.constant 16 : i32
    %56 = arith.muli %arg1, %c16_i32_30 : i32
    %c8_i32 = arith.constant 8 : i32
    %57 = arith.addi %56, %c8_i32 : i32
    %c16_i32_31 = arith.constant 16 : i32
    %58 = arith.muli %57, %c16_i32_31 : i32
    %59 = tpu.assume_multiple %58, 8 : i32
    %c0_32 = arith.constant 0 : index
    %60 = arith.index_cast %59 : i32 to index
    %c0_33 = arith.constant 0 : index
    %61 = vector.load %arg2[%c0_32, %60, %c0_33] : memref<1x384x4xf32, #tpu.memory_space<vmem>>, vector<1x256x4xf32>
    %62 = vector.shape_cast %61 : vector<1x256x4xf32> to vector<256x4xf32>
    %c0_34 = arith.constant 0 : index
    %c0_35 = arith.constant 0 : index
    %c0_36 = arith.constant 0 : index
    %63 = vector.load %arg3[%c0_34, %c0_35, %c0_36] : memref<9x4x128xf32, #tpu.memory_space<vmem>>, vector<1x4x128xf32>
    %64 = vector.shape_cast %63 : vector<1x4x128xf32> to vector<4x128xf32>
    %cst = arith.constant dense<0.000000e+00> : vector<256x128xf32>
    %65 = tpu.matmul %6, %64, %cst {dimension_numbers = #tpu.dot_dimension_numbers<[1], [0], [0], [1], [0, 0, 1, 1], [], []>} : vector<256x4xf32>, vector<4x128xf32>, vector<256x128xf32> -> vector<256x128xf32>
    %c1 = arith.constant 1 : index
    %c0_37 = arith.constant 0 : index
    %c0_38 = arith.constant 0 : index
    %66 = vector.load %arg3[%c1, %c0_37, %c0_38] : memref<9x4x128xf32, #tpu.memory_space<vmem>>, vector<1x4x128xf32>
    %67 = vector.shape_cast %66 : vector<1x4x128xf32> to vector<4x128xf32>
    %cst_39 = arith.constant dense<0.000000e+00> : vector<256x128xf32>
    %68 = tpu.matmul %13, %67, %cst_39 {dimension_numbers = #tpu.dot_dimension_numbers<[1], [0], [0], [1], [0, 0, 1, 1], [], []>} : vector<256x4xf32>, vector<4x128xf32>, vector<256x128xf32> -> vector<256x128xf32>
    %69 = arith.addf %65, %68 : vector<256x128xf32>
    %c2 = arith.constant 2 : index
    %c0_40 = arith.constant 0 : index
    %c0_41 = arith.constant 0 : index
    %70 = vector.load %arg3[%c2, %c0_40, %c0_41] : memref<9x4x128xf32, #tpu.memory_space<vmem>>, vector<1x4x128xf32>
    %71 = vector.shape_cast %70 : vector<1x4x128xf32> to vector<4x128xf32>
    %cst_42 = arith.constant dense<0.000000e+00> : vector<256x128xf32>
    %72 = tpu.matmul %20, %71, %cst_42 {dimension_numbers = #tpu.dot_dimension_numbers<[1], [0], [0], [1], [0, 0, 1, 1], [], []>} : vector<256x4xf32>, vector<4x128xf32>, vector<256x128xf32> -> vector<256x128xf32>
    %73 = arith.addf %69, %72 : vector<256x128xf32>
    %c3 = arith.constant 3 : index
    %c0_43 = arith.constant 0 : index
    %c0_44 = arith.constant 0 : index
    %74 = vector.load %arg3[%c3, %c0_43, %c0_44] : memref<9x4x128xf32, #tpu.memory_space<vmem>>, vector<1x4x128xf32>
    %75 = vector.shape_cast %74 : vector<1x4x128xf32> to vector<4x128xf32>
    %cst_45 = arith.constant dense<0.000000e+00> : vector<256x128xf32>
    %76 = tpu.matmul %27, %75, %cst_45 {dimension_numbers = #tpu.dot_dimension_numbers<[1], [0], [0], [1], [0, 0, 1, 1], [], []>} : vector<256x4xf32>, vector<4x128xf32>, vector<256x128xf32> -> vector<256x128xf32>
    %77 = arith.addf %73, %76 : vector<256x128xf32>
    %c4 = arith.constant 4 : index
    %c0_46 = arith.constant 0 : index
    %c0_47 = arith.constant 0 : index
    %78 = vector.load %arg3[%c4, %c0_46, %c0_47] : memref<9x4x128xf32, #tpu.memory_space<vmem>>, vector<1x4x128xf32>
    %79 = vector.shape_cast %78 : vector<1x4x128xf32> to vector<4x128xf32>
    %cst_48 = arith.constant dense<0.000000e+00> : vector<256x128xf32>
    %80 = tpu.matmul %34, %79, %cst_48 {dimension_numbers = #tpu.dot_dimension_numbers<[1], [0], [0], [1], [0, 0, 1, 1], [], []>} : vector<256x4xf32>, vector<4x128xf32>, vector<256x128xf32> -> vector<256x128xf32>
    %81 = arith.addf %77, %80 : vector<256x128xf32>
    %c5 = arith.constant 5 : index
    %c0_49 = arith.constant 0 : index
    %c0_50 = arith.constant 0 : index
    %82 = vector.load %arg3[%c5, %c0_49, %c0_50] : memref<9x4x128xf32, #tpu.memory_space<vmem>>, vector<1x4x128xf32>
    %83 = vector.shape_cast %82 : vector<1x4x128xf32> to vector<4x128xf32>
    %cst_51 = arith.constant dense<0.000000e+00> : vector<256x128xf32>
    %84 = tpu.matmul %41, %83, %cst_51 {dimension_numbers = #tpu.dot_dimension_numbers<[1], [0], [0], [1], [0, 0, 1, 1], [], []>} : vector<256x4xf32>, vector<4x128xf32>, vector<256x128xf32> -> vector<256x128xf32>
    %85 = arith.addf %81, %84 : vector<256x128xf32>
    %c6 = arith.constant 6 : index
    %c0_52 = arith.constant 0 : index
    %c0_53 = arith.constant 0 : index
    %86 = vector.load %arg3[%c6, %c0_52, %c0_53] : memref<9x4x128xf32, #tpu.memory_space<vmem>>, vector<1x4x128xf32>
    %87 = vector.shape_cast %86 : vector<1x4x128xf32> to vector<4x128xf32>
    %cst_54 = arith.constant dense<0.000000e+00> : vector<256x128xf32>
    %88 = tpu.matmul %48, %87, %cst_54 {dimension_numbers = #tpu.dot_dimension_numbers<[1], [0], [0], [1], [0, 0, 1, 1], [], []>} : vector<256x4xf32>, vector<4x128xf32>, vector<256x128xf32> -> vector<256x128xf32>
    %89 = arith.addf %85, %88 : vector<256x128xf32>
    %c7 = arith.constant 7 : index
    %c0_55 = arith.constant 0 : index
    %c0_56 = arith.constant 0 : index
    %90 = vector.load %arg3[%c7, %c0_55, %c0_56] : memref<9x4x128xf32, #tpu.memory_space<vmem>>, vector<1x4x128xf32>
    %91 = vector.shape_cast %90 : vector<1x4x128xf32> to vector<4x128xf32>
    %cst_57 = arith.constant dense<0.000000e+00> : vector<256x128xf32>
    %92 = tpu.matmul %55, %91, %cst_57 {dimension_numbers = #tpu.dot_dimension_numbers<[1], [0], [0], [1], [0, 0, 1, 1], [], []>} : vector<256x4xf32>, vector<4x128xf32>, vector<256x128xf32> -> vector<256x128xf32>
    %93 = arith.addf %89, %92 : vector<256x128xf32>
    %c8 = arith.constant 8 : index
    %c0_58 = arith.constant 0 : index
    %c0_59 = arith.constant 0 : index
    %94 = vector.load %arg3[%c8, %c0_58, %c0_59] : memref<9x4x128xf32, #tpu.memory_space<vmem>>, vector<1x4x128xf32>
    %95 = vector.shape_cast %94 : vector<1x4x128xf32> to vector<4x128xf32>
    %cst_60 = arith.constant dense<0.000000e+00> : vector<256x128xf32>
    %96 = tpu.matmul %62, %95, %cst_60 {dimension_numbers = #tpu.dot_dimension_numbers<[1], [0], [0], [1], [0, 0, 1, 1], [], []>} : vector<256x4xf32>, vector<4x128xf32>, vector<256x128xf32> -> vector<256x128xf32>
    %97 = arith.addf %93, %96 : vector<256x128xf32>
    %c0_i32_61 = arith.constant 0 : i32
    %98 = arith.cmpi eq, %arg1, %c0_i32_61 : i32
    %99 = arith.extui %98 : i1 to i32
    %c0_i32_62 = arith.constant 0 : i32
    %100 = arith.cmpi ne, %99, %c0_i32_62 : i32
    scf.if %100 {
      %cst_77 = arith.constant 0.000000e+00 : f32
      %118 = vector.broadcast %cst_77 : f32 to vector<1x1x128xf32>
      %c0_78 = arith.constant 0 : index
      %c0_79 = arith.constant 0 : index
      %c0_80 = arith.constant 0 : index
      %119 = vector.load %arg4[%c0_78, %c0_79, %c0_80] : memref<1x1x128xf32, #tpu.memory_space<vmem>>, vector<1x1x128xf32>
      tpu.vector_store %arg4[%c0_78, %c0_79, %c0_80], %118 {strides = array<i32>} : memref<1x1x128xf32, #tpu.memory_space<vmem>>, vector<1x1x128xf32>,
      %cst_81 = arith.constant 0.000000e+00 : f32
      %120 = vector.broadcast %cst_81 : f32 to vector<1x1x128xf32>
      %c0_82 = arith.constant 0 : index
      %c0_83 = arith.constant 0 : index
      %c0_84 = arith.constant 0 : index
      %121 = vector.load %arg5[%c0_82, %c0_83, %c0_84] : memref<1x1x128xf32, #tpu.memory_space<vmem>>, vector<1x1x128xf32>
      tpu.vector_store %arg5[%c0_82, %c0_83, %c0_84], %120 {strides = array<i32>} : memref<1x1x128xf32, #tpu.memory_space<vmem>>, vector<1x1x128xf32>,
    } else {
    }
    %c0_63 = arith.constant 0 : index
    %c0_64 = arith.constant 0 : index
    %c0_65 = arith.constant 0 : index
    %101 = vector.load %arg4[%c0_63, %c0_64, %c0_65] : memref<1x1x128xf32, #tpu.memory_space<vmem>>, vector<1x1x128xf32>
    %102 = vector.shape_cast %101 : vector<1x1x128xf32> to vector<1x128xf32>
    %cst_66 = arith.constant dense<0.000000e+00> : vector<128xf32>
    %103 = vector.multi_reduction <add>, %97, %cst_66 [0] : vector<256x128xf32> to vector<128xf32>
    %104 = vector.shape_cast %103 : vector<128xf32> to vector<1x128xf32>
    %105 = arith.addf %102, %104 : vector<1x128xf32>
    %c0_67 = arith.constant 0 : index
    %c0_68 = arith.constant 0 : index
    %c0_69 = arith.constant 0 : index
    %106 = vector.load %arg4[%c0_67, %c0_68, %c0_69] : memref<1x1x128xf32, #tpu.memory_space<vmem>>, vector<1x1x128xf32>
    %107 = vector.shape_cast %106 : vector<1x1x128xf32> to vector<1x128xf32>
    %108 = vector.shape_cast %105 : vector<1x128xf32> to vector<1x1x128xf32>
    tpu.vector_store %arg4[%c0_67, %c0_68, %c0_69], %108 {strides = array<i32>} : memref<1x1x128xf32, #tpu.memory_space<vmem>>, vector<1x1x128xf32>,
    %c0_70 = arith.constant 0 : index
    %c0_71 = arith.constant 0 : index
    %c0_72 = arith.constant 0 : index
    %109 = vector.load %arg5[%c0_70, %c0_71, %c0_72] : memref<1x1x128xf32, #tpu.memory_space<vmem>>, vector<1x1x128xf32>
    %110 = vector.shape_cast %109 : vector<1x1x128xf32> to vector<1x128xf32>
    %111 = arith.mulf %97, %97 : vector<256x128xf32>
    %cst_73 = arith.constant dense<0.000000e+00> : vector<128xf32>
    %112 = vector.multi_reduction <add>, %111, %cst_73 [0] : vector<256x128xf32> to vector<128xf32>
    %113 = vector.shape_cast %112 : vector<128xf32> to vector<1x128xf32>
    %114 = arith.addf %110, %113 : vector<1x128xf32>
    %c0_74 = arith.constant 0 : index
    %c0_75 = arith.constant 0 : index
    %c0_76 = arith.constant 0 : index
    %115 = vector.load %arg5[%c0_74, %c0_75, %c0_76] : memref<1x1x128xf32, #tpu.memory_space<vmem>>, vector<1x1x128xf32>
    %116 = vector.shape_cast %115 : vector<1x1x128xf32> to vector<1x128xf32>
    %117 = vector.shape_cast %114 : vector<1x128xf32> to vector<1x1x128xf32>
    tpu.vector_store %arg5[%c0_74, %c0_75, %c0_76], %117 {strides = array<i32>} : memref<1x1x128xf32, #tpu.memory_space<vmem>>, vector<1x1x128xf32>,
    return
  }
  func.func @transform_0(%arg0: i32, %arg1: i32) -> (i32, i32, i32) {
    %c0_i32 = arith.constant 0 : i32
    %c0_i32_0 = arith.constant 0 : i32
    %c0_i32_1 = arith.constant 0 : i32
    return %arg0, %c0_i32, %c0_i32_0 : i32, i32, i32
  }
  func.func @transform_1(%arg0: i32, %arg1: i32) -> (i32, i32, i32) {
    %c0_i32 = arith.constant 0 : i32
    %c0_i32_0 = arith.constant 0 : i32
    %c0_i32_1 = arith.constant 0 : i32
    %c0_i32_2 = arith.constant 0 : i32
    return %c0_i32, %c0_i32_0, %c0_i32_1 : i32, i32, i32
  }
  func.func @transform_2(%arg0: i32, %arg1: i32) -> (i32, i32, i32) {
    %c0_i32 = arith.constant 0 : i32
    %c0_i32_0 = arith.constant 0 : i32
    %c0_i32_1 = arith.constant 0 : i32
    return %arg0, %c0_i32, %c0_i32_0 : i32, i32, i32
  }
  func.func @transform_3(%arg0: i32, %arg1: i32) -> (i32, i32, i32) {
    %c0_i32 = arith.constant 0 : i32
    %c0_i32_0 = arith.constant 0 : i32
    %c0_i32_1 = arith.constant 0 : i32
    return %arg0, %c0_i32, %c0_i32_0 : i32, i32, i32
  }
}

</mosaic_0001>

<llo_original>
// kernel: tpu_custom_call.1
$region0: #{tpu_custom_call.1}
  #allocation0 [shape = 'u32[]', space=smem, size = 0x4, offset = 0x4, fixed_abs, tag = 'smem constant byte address 0x4 - core index']
  #allocation1 [shape = 'u32[144,128]{1,0:T(1,128)}', space=vmem, size = 0x12000, scoped, tag = 'internal scratch']
  %s0 = inlined_call_operand.vmem [shape: f32[2,384,4], index: 0, kind: input, shape index: {}]
  %s1 = inlined_call_operand.vmem [shape: f32[9,4,128], index: 1, kind: input, shape index: {}]
  %s2 = inlined_call_operand.hbm [shape: f32[2,1,128], index: 2, kind: output, shape index: {0}]
  %s3 = inlined_call_operand.hbm [shape: f32[2,1,128], index: 3, kind: output, shape index: {1}]
  %4 = xla_tuple %s2, %s3
  %s5 = sld [smem:[#allocation0]]
  $region53: #{tpu_custom_call.1} parent=0
    _
  %s7 = ssub.s32 1, %s5
  %s8 = scalar_select 0, %s7, %s5
  $region1: #{tpu_custom_call.1} parent=0
    #allocation2 [shape = 'u8[1024]{0}', space=vmem, size = 0x400, scoped, tag = 'output window, operand 0']
    #allocation3 [shape = 's32[2]{0}', space=sflag, size = 0x8, scoped, tag = 'scoped memory for tpu_custom_call.1']
    #allocation4 [shape = 'u8[1024]{0}', space=vmem, size = 0x400, scoped, tag = 'output window, operand 1']
    #allocation5 [shape = 's32[2]{0}', space=sflag, size = 0x8, scoped, tag = 'scoped memory for tpu_custom_call.1']
    %9 = vsyncpa [#allocation3], 0
    %s10 = scalar_lea.sflag [#allocation3], 1
    %11 = vsyncpa %s10, 0
    %12 = vsyncpa [#allocation5], 0
    %s13 = scalar_lea.sflag [#allocation5], 1
    %14 = vsyncpa %s13, 0
    loop: start=0, step=1, limit=4
    $region2: #{tpu_custom_call.1} parent=1 // loop_pre_header
      _
    $region3: #{tpu_custom_call.1} parent=1 // loop_header
      %s16 = sphi 0, %s20
      %p17 = scmp.ge.s32.totalorder %s16, 4
      %s23 = sphi 0, %s35
      %s24 = sphi 0, %s31
      %s25 = sphi 0, %s23
      %s26 = sphi 0, %s24
      %s27 = sphi 0, %s25
      %s28 = sphi 0, %s26
      %s38 = sphi 0, %s40
      %s41 = sphi 0, %s38
      %s42 = sphi 0, %s41
      %s58 = sphi 0, %s42
      %s62 = sphi 0, %s62
      %s64 = sphi 0, %s62
      %s65 = sphi 0, %s64
      %s79 = sphi 0, %s65
      %s85 = sphi 0, %s87
      %s88 = sphi 0, %s85
      %s89 = sphi 0, %s88
      %s105 = sphi 0, %s89
      %s111 = sphi 0, %s113
      %s114 = sphi 0, %s111
      %s115 = sphi 0, %s114
      %s131 = sphi 0, %s115
    $region4: #{tpu_custom_call.1} parent=1 // loop_header_branch
      %19 = sbr.rel (%p17) target = $region8
    $region5: #{tpu_custom_call.1} parent=1 // loop_body
      %s21 = ssub.s32 %s16, 1
      %s22 = ssub.s32 %s16, 2
      %s29 = sadd.s32 1, %s24
      %p30 = scmp.ge.s32.totalorder %s29, 1
      %s31 = scalar_select %p30, 0, %s29
      %s32 = sadd.s32 1, %s23
      %s33 = scalar_select %p30, %s32, %s23
      %p34 = scmp.ge.s32.totalorder %s33, 2
      %s35 = scalar_select %p34, 0, %s33
      %s36 = ssub.s32 %s23, %s35
      %p37 = scmp.eq.s32.totalorder %s36, 0
      %s39 = sadd.s32 %s38, 1
      %s40 = scalar_select %p37, %s38, %s39
      %p43 = pneg %p37
      %p44 = scmp.eq.s32.totalorder %s16, 1
      %p45 = por %p43, %p44
      %p46 = scmp.ne.s32.totalorder %s38, %s41
      %p47 = scmp.eq.s32.totalorder %s16, 0
      %p48 = por %p46, %p47
      %p49 = scmp.ne.s32.totalorder %s38, %s41
      %p50 = scmp.eq.s32.totalorder %s21, 1
      %p51 = por %p49, %p50
      %p52 = scmp.ne.s32.totalorder %s41, %s42
      %p53 = scmp.eq.s32.totalorder %s21, 0
      %p54 = por %p52, %p53
      %p55 = scmp.ne.s32.totalorder %s41, %s42
      %p56 = scmp.eq.s32.totalorder %s22, 1
      %p57 = por %p55, %p56
      %p59 = scmp.ne.s32.totalorder %s42, %s58
      %p60 = scmp.eq.s32.totalorder %s22, 0
      %p61 = por %p59, %p60
      %s63 = sadd.s32 %s62, 1
      %p66 = scmp.eq.s32.totalorder %s16, 1
      %p67 = scmp.ne.s32.totalorder %s62, %s64
      %p68 = scmp.eq.s32.totalorder %s16, 0
      %p69 = por %p67, %p68
      %p70 = scmp.ne.s32.totalorder %s62, %s64
      %p71 = scmp.eq.s32.totalorder %s21, 1
      %p72 = por %p70, %p71
      %p73 = scmp.ne.s32.totalorder %s64, %s65
      %p74 = scmp.eq.s32.totalorder %s21, 0
      %p75 = por %p73, %p74
      %p76 = scmp.ne.s32.totalorder %s64, %s65
      %p77 = scmp.eq.s32.totalorder %s22, 1
      %p78 = por %p76, %p77
      %p80 = scmp.ne.s32.totalorder %s65, %s79
      %p81 = scmp.eq.s32.totalorder %s22, 0
      %p82 = por %p80, %p81
      %s83 = ssub.s32 %s23, %s35
      %p84 = scmp.eq.s32.totalorder %s83, 0
      %s86 = sadd.s32 %s85, 1
      %s87 = scalar_select %p84, %s85, %s86
      %p90 = pneg %p84
      %p91 = scmp.eq.s32.totalorder %s16, 1
      %p92 = por %p90, %p91
      %p93 = scmp.ne.s32.totalorder %s85, %s88
      %p94 = scmp.eq.s32.totalorder %s16, 0
      %p95 = por %p93, %p94
      %p96 = scmp.ne.s32.totalorder %s85, %s88
      %p97 = scmp.eq.s32.totalorder %s21, 1
      %p98 = por %p96, %p97
      %p99 = scmp.ne.s32.totalorder %s88, %s89
      %p100 = scmp.eq.s32.totalorder %s21, 0
      %p101 = por %p99, %p100
      %p102 = scmp.ne.s32.totalorder %s88, %s89
      %p103 = scmp.eq.s32.totalorder %s22, 1
      %p104 = por %p102, %p103
      %p106 = scmp.ne.s32.totalorder %s89, %s105
      %p107 = scmp.eq.s32.totalorder %s22, 0
      %p108 = por %p106, %p107
      %s109 = ssub.s32 %s23, %s35
      %p110 = scmp.eq.s32.totalorder %s109, 0
      %s112 = sadd.s32 %s111, 1
      %s113 = scalar_select %p110, %s111, %s112
      %p116 = pneg %p110
      %p117 = scmp.eq.s32.totalorder %s16, 1
      %p118 = por %p116, %p117
      %p119 = scmp.ne.s32.totalorder %s111, %s114
      %p120 = scmp.eq.s32.totalorder %s16, 0
      %p121 = por %p119, %p120
      %p122 = scmp.ne.s32.totalorder %s111, %s114
      %p123 = scmp.eq.s32.totalorder %s21, 1
      %p124 = por %p122, %p123
      %p125 = scmp.ne.s32.totalorder %s114, %s115
      %p126 = scmp.eq.s32.totalorder %s21, 0
      %p127 = por %p125, %p126
      %p128 = scmp.ne.s32.totalorder %s114, %s115
      %p129 = scmp.eq.s32.totalorder %s22, 1
      %p130 = por %p128, %p129
      %p132 = scmp.ne.s32.totalorder %s115, %s131
      %p133 = scmp.eq.s32.totalorder %s22, 0
      %p134 = por %p132, %p133
      %p135 = scmp.le.s32.totalorder 1, %s16
      %p136 = scmp.lt.s32.totalorder %s16, 3
      %p137 = pnand %p135, %p136
      %p138 = pneg %p137
      // Predicated region
      $region9: #{tpu_custom_call.1} parent=5 // pred_check
        _
      $region10: #{tpu_custom_call.1} parent=5 // pred_check_branch
        %140 = sbr.rel (%p137) target = $region12
      $region11: #{tpu_custom_call.1} parent=5 // pred_region
        %s141 = ssub.s32 %s16, 1
        // Predicated region
        $region13: #{tpu_custom_call.1} parent=11 // pred_check
          %p142 = pneg %p75
        $region14: #{tpu_custom_call.1} parent=11 // pred_check_branch
          %144 = sbr.rel (%p142) target = $region16
        $region15: #{tpu_custom_call.1} parent=11 // pred_region
          _
        $region16: #{tpu_custom_call.1} parent=11 // pred_fallthru
          _
      $region12: #{tpu_custom_call.1} parent=5 // pred_fallthru
        _
      %p145 = scmp.lt.s32.totalorder %s16, 2
      // Predicated region
      $region17: #{tpu_custom_call.1} parent=5 // pred_check
        %p146 = pneg %p145
      $region18: #{tpu_custom_call.1} parent=5 // pred_check_branch
        %148 = sbr.rel (%p146) target = $region20
      $region19: #{tpu_custom_call.1} parent=5 // pred_region
        // Predicated region
        $region21: #{tpu_custom_call.1} parent=19 // pred_check
          %p149 = pneg %p48
        $region22: #{tpu_custom_call.1} parent=19 // pred_check_branch
          %151 = sbr.rel (%p149) target = $region24
        $region23: #{tpu_custom_call.1} parent=19 // pred_region
          %p152 = scmp.lt.s32.totalorder %s23, 1
          %s153 = scalar_select %p152, %s23, 1
          %s154 = smul.addr %s153, 48
          %s155 = smul.addr %s154, 8
          %s156 = scalar_lea.vmem %s0, %s155
        $region24: #{tpu_custom_call.1} parent=19 // pred_fallthru
          _
      $region20: #{tpu_custom_call.1} parent=5 // pred_fallthru
        _
      %p157 = scmp.le.s32.totalorder 1, %s16
      %p158 = scmp.lt.s32.totalorder %s16, 3
      %p159 = pnand %p157, %p158
      %p160 = pneg %p159
      // Predicated region
      $region25: #{tpu_custom_call.1} parent=5 // pred_check
        _
      $region26: #{tpu_custom_call.1} parent=5 // pred_check_branch
        %162 = sbr.rel (%p159) target = $region28
      $region27: #{tpu_custom_call.1} parent=5 // pred_region
        %s163 = ssub.s32 %s16, 1
        %p164 = scmp.lt.s32.totalorder %s25, 1
        %s165 = scalar_select %p164, %s25, 1
        %s166 = smul.addr %s165, 48
        %s167 = smul.addr %s166, 8
        %s168 = scalar_lea.vmem %s0, %s167
        %p169 = pneg %p54
        %p170 = pneg %p51
        %p171 = pneg %p75
        %p172 = pneg %p72
        %p173 = pneg %p101
        %p174 = pneg %p98
        %s175 = sand.u32 %s88, 1
        %s176 = scalar_lea.sflag [#allocation3], %s175
        %s177 = sand.u32 %s88, 1
        %s178 = scalar_lea.vmem [#allocation2], %s177
        %p179 = pneg %p127
        %p180 = pneg %p124
        %s181 = sand.u32 %s114, 1
        %s182 = scalar_lea.sflag [#allocation5], %s181
        %s183 = sand.u32 %s114, 1
        %s184 = scalar_lea.vmem [#allocation4], %s183
        %p185 = scmp.lt.s32.totalorder %s25, 1
        %s186 = scalar_select %p185, %s25, 1
        %s187 = smul.addr %s186, 48
        %s188 = smul.addr %s187, 8
        %s189 = scalar_lea.vmem %s0, %s188
        %s190 = smul.u32 %s26, 256
        %s191 = scalar_lea.vmem %s189, %s190
        %v192 = vld [vmem:[%s191] sm:$0xff]
        %v193 = vld [vmem:[%s191 + $0x8] sm:$0xff]
        %v194 = vld [vmem:[%s191 + $0x10] sm:$0xff]
        %v195 = vld [vmem:[%s191 + $0x18] sm:$0xff]
        %v196 = vld [vmem:[%s191 + $0x20] sm:$0xff]
        %v197 = vld [vmem:[%s191 + $0x28] sm:$0xff]
        %v198 = vld [vmem:[%s191 + $0x30] sm:$0xff]
        %v199 = vld [vmem:[%s191 + $0x38] sm:$0xff]
        %v200 = vld [vmem:[%s191 + $0x40] sm:$0xff]
        %v201 = vld [vmem:[%s191 + $0x48] sm:$0xff]
        %v202 = vld [vmem:[%s191 + $0x50] sm:$0xff]
        %v203 = vld [vmem:[%s191 + $0x58] sm:$0xff]
        %v204 = vld [vmem:[%s191 + $0x60] sm:$0xff]
        %v205 = vld [vmem:[%s191 + $0x68] sm:$0xff]
        %v206 = vld [vmem:[%s191 + $0x70] sm:$0xff]
        %v207 = vld [vmem:[%s191 + $0x78] sm:$0xff]
        %v208 = vld [vmem:[%s191 + $0x80] sm:$0xff]
        %v209 = vld [vmem:[%s191 + $0x88] sm:$0xff]
        %v210 = vld [vmem:[%s191 + $0x90] sm:$0xff]
        %v211 = vld [vmem:[%s191 + $0x98] sm:$0xff]
        %v212 = vld [vmem:[%s191 + $0xa0] sm:$0xff]
        %v213 = vld [vmem:[%s191 + $0xa8] sm:$0xff]
        %v214 = vld [vmem:[%s191 + $0xb0] sm:$0xff]
        %v215 = vld [vmem:[%s191 + $0xb8] sm:$0xff]
        %v216 = vld [vmem:[%s191 + $0xc0] sm:$0xff]
        %v217 = vld [vmem:[%s191 + $0xc8] sm:$0xff]
        %v218 = vld [vmem:[%s191 + $0xd0] sm:$0xff]
        %v219 = vld [vmem:[%s191 + $0xd8] sm:$0xff]
        %v220 = vld [vmem:[%s191 + $0xe0] sm:$0xff]
        %v221 = vld [vmem:[%s191 + $0xe8] sm:$0xff]
        %v222 = vld [vmem:[%s191 + $0xf0] sm:$0xff]
        %v223 = vld [vmem:[%s191 + $0xf8] sm:$0xff]
        %s224 = smul.u32 %s26, 16
        %s225 = sadd.s32 %s224, 1
        %s226 = smul.u32 %s225, 16
        %s227 = scalar_lea.vmem %s189, %s226
        %v228 = vld [vmem:[%s227] sm:$0xff]
        %v229 = vld [vmem:[%s227 + $0x8] sm:$0xff]
        %v230 = vld [vmem:[%s227 + $0x10] sm:$0xff]
        %v231 = vld [vmem:[%s227 + $0x18] sm:$0xff]
        %v232 = vld [vmem:[%s227 + $0x20] sm:$0xff]
        %v233 = vld [vmem:[%s227 + $0x28] sm:$0xff]
        %v234 = vld [vmem:[%s227 + $0x30] sm:$0xff]
        %v235 = vld [vmem:[%s227 + $0x38] sm:$0xff]
        %v236 = vld [vmem:[%s227 + $0x40] sm:$0xff]
        %v237 = vld [vmem:[%s227 + $0x48] sm:$0xff]
        %v238 = vld [vmem:[%s227 + $0x50] sm:$0xff]
        %v239 = vld [vmem:[%s227 + $0x58] sm:$0xff]
        %v240 = vld [vmem:[%s227 + $0x60] sm:$0xff]
        %v241 = vld [vmem:[%s227 + $0x68] sm:$0xff]
        %v242 = vld [vmem:[%s227 + $0x70] sm:$0xff]
        %v243 = vld [vmem:[%s227 + $0x78] sm:$0xff]
        %v244 = vld [vmem:[%s227 + $0x80] sm:$0xff]
        %v245 = vld [vmem:[%s227 + $0x88] sm:$0xff]
        %v246 = vld [vmem:[%s227 + $0x90] sm:$0xff]
        %v247 = vld [vmem:[%s227 + $0x98] sm:$0xff]
        %v248 = vld [vmem:[%s227 + $0xa0] sm:$0xff]
        %v249 = vld [vmem:[%s227 + $0xa8] sm:$0xff]
        %v250 = vld [vmem:[%s227 + $0xb0] sm:$0xff]
        %v251 = vld [vmem:[%s227 + $0xb8] sm:$0xff]
        %v252 = vld [vmem:[%s227 + $0xc0] sm:$0xff]
        %v253 = vld [vmem:[%s227 + $0xc8] sm:$0xff]
        %v254 = vld [vmem:[%s227 + $0xd0] sm:$0xff]
        %v255 = vld [vmem:[%s227 + $0xd8] sm:$0xff]
        %v256 = vld [vmem:[%s227 + $0xe0] sm:$0xff]
        %v257 = vld [vmem:[%s227 + $0xe8] sm:$0xff]
        %v258 = vld [vmem:[%s227 + $0xf0] sm:$0xff]
        %v259 = vld [vmem:[%s227 + $0xf8] sm:$0xff]
        %s260 = sadd.s32 %s224, 2
        %s261 = smul.u32 %s260, 16
        %s262 = scalar_lea.vmem %s189, %s261
        %v263 = vld [vmem:[%s262] sm:$0xff]
        %v264 = vld [vmem:[%s262 + $0x8] sm:$0xff]
        %v265 = vld [vmem:[%s262 + $0x10] sm:$0xff]
        %v266 = vld [vmem:[%s262 + $0x18] sm:$0xff]
        %v267 = vld [vmem:[%s262 + $0x20] sm:$0xff]
        %v268 = vld [vmem:[%s262 + $0x28] sm:$0xff]
        %v269 = vld [vmem:[%s262 + $0x30] sm:$0xff]
        %v270 = vld [vmem:[%s262 + $0x38] sm:$0xff]
        %v271 = vld [vmem:[%s262 + $0x40] sm:$0xff]
        %v272 = vld [vmem:[%s262 + $0x48] sm:$0xff]
        %v273 = vld [vmem:[%s262 + $0x50] sm:$0xff]
        %v274 = vld [vmem:[%s262 + $0x58] sm:$0xff]
        %v275 = vld [vmem:[%s262 + $0x60] sm:$0xff]
        %v276 = vld [vmem:[%s262 + $0x68] sm:$0xff]
        %v277 = vld [vmem:[%s262 + $0x70] sm:$0xff]
        %v278 = vld [vmem:[%s262 + $0x78] sm:$0xff]
        %v279 = vld [vmem:[%s262 + $0x80] sm:$0xff]
        %v280 = vld [vmem:[%s262 + $0x88] sm:$0xff]
        %v281 = vld [vmem:[%s262 + $0x90] sm:$0xff]
        %v282 = vld [vmem:[%s262 + $0x98] sm:$0xff]
        %v283 = vld [vmem:[%s262 + $0xa0] sm:$0xff]
        %v284 = vld [vmem:[%s262 + $0xa8] sm:$0xff]
        %v285 = vld [vmem:[%s262 + $0xb0] sm:$0xff]
        %v286 = vld [vmem:[%s262 + $0xb8] sm:$0xff]
        %v287 = vld [vmem:[%s262 + $0xc0] sm:$0xff]
        %v288 = vld [vmem:[%s262 + $0xc8] sm:$0xff]
        %v289 = vld [vmem:[%s262 + $0xd0] sm:$0xff]
        %v290 = vld [vmem:[%s262 + $0xd8] sm:$0xff]
        %v291 = vld [vmem:[%s262 + $0xe0] sm:$0xff]
        %v292 = vld [vmem:[%s262 + $0xe8] sm:$0xff]
        %v293 = vld [vmem:[%s262 + $0xf0] sm:$0xff]
        %v294 = vld [vmem:[%s262 + $0xf8] sm:$0xff]
        %s295 = sadd.s32 %s224, 3
        %s296 = smul.u32 %s295, 16
        %s297 = scalar_lea.vmem %s189, %s296
        %v298 = vld [vmem:[%s297] sm:$0xff]
        %v299 = vld [vmem:[%s297 + $0x8] sm:$0xff]
        %v300 = vld [vmem:[%s297 + $0x10] sm:$0xff]
        %v301 = vld [vmem:[%s297 + $0x18] sm:$0xff]
        %v302 = vld [vmem:[%s297 + $0x20] sm:$0xff]
        %v303 = vld [vmem:[%s297 + $0x28] sm:$0xff]
        %v304 = vld [vmem:[%s297 + $0x30] sm:$0xff]
        %v305 = vld [vmem:[%s297 + $0x38] sm:$0xff]
        %v306 = vld [vmem:[%s297 + $0x40] sm:$0xff]
        %v307 = vld [vmem:[%s297 + $0x48] sm:$0xff]
        %v308 = vld [vmem:[%s297 + $0x50] sm:$0xff]
        %v309 = vld [vmem:[%s297 + $0x58] sm:$0xff]
        %v310 = vld [vmem:[%s297 + $0x60] sm:$0xff]
        %v311 = vld [vmem:[%s297 + $0x68] sm:$0xff]
        %v312 = vld [vmem:[%s297 + $0x70] sm:$0xff]
        %v313 = vld [vmem:[%s297 + $0x78] sm:$0xff]
        %v314 = vld [vmem:[%s297 + $0x80] sm:$0xff]
        %v315 = vld [vmem:[%s297 + $0x88] sm:$0xff]
        %v316 = vld [vmem:[%s297 + $0x90] sm:$0xff]
        %v317 = vld [vmem:[%s297 + $0x98] sm:$0xff]
        %v318 = vld [vmem:[%s297 + $0xa0] sm:$0xff]
        %v319 = vld [vmem:[%s297 + $0xa8] sm:$0xff]
        %v320 = vld [vmem:[%s297 + $0xb0] sm:$0xff]
        %v321 = vld [vmem:[%s297 + $0xb8] sm:$0xff]
        %v322 = vld [vmem:[%s297 + $0xc0] sm:$0xff]
        %v323 = vld [vmem:[%s297 + $0xc8] sm:$0xff]
        %v324 = vld [vmem:[%s297 + $0xd0] sm:$0xff]
        %v325 = vld [vmem:[%s297 + $0xd8] sm:$0xff]
        %v326 = vld [vmem:[%s297 + $0xe0] sm:$0xff]
        %v327 = vld [vmem:[%s297 + $0xe8] sm:$0xff]
        %v328 = vld [vmem:[%s297 + $0xf0] sm:$0xff]
        %v329 = vld [vmem:[%s297 + $0xf8] sm:$0xff]
        %s330 = sadd.s32 %s224, 4
        %s331 = smul.u32 %s330, 16
        %s332 = scalar_lea.vmem %s189, %s331
        %v333 = vld [vmem:[%s332] sm:$0xff]
        %v334 = vld [vmem:[%s332 + $0x8] sm:$0xff]
        %v335 = vld [vmem:[%s332 + $0x10] sm:$0xff]
        %v336 = vld [vmem:[%s332 + $0x18] sm:$0xff]
        %v337 = vld [vmem:[%s332 + $0x20] sm:$0xff]
        %v338 = vld [vmem:[%s332 + $0x28] sm:$0xff]
        %v339 = vld [vmem:[%s332 + $0x30] sm:$0xff]
        %v340 = vld [vmem:[%s332 + $0x38] sm:$0xff]
        %v341 = vld [vmem:[%s332 + $0x40] sm:$0xff]
        %v342 = vld [vmem:[%s332 + $0x48] sm:$0xff]
        %v343 = vld [vmem:[%s332 + $0x50] sm:$0xff]
        %v344 = vld [vmem:[%s332 + $0x58] sm:$0xff]
        %v345 = vld [vmem:[%s332 + $0x60] sm:$0xff]
        %v346 = vld [vmem:[%s332 + $0x68] sm:$0xff]
        %v347 = vld [vmem:[%s332 + $0x70] sm:$0xff]
        %v348 = vld [vmem:[%s332 + $0x78] sm:$0xff]
        %v349 = vld [vmem:[%s332 + $0x80] sm:$0xff]
        %v350 = vld [vmem:[%s332 + $0x88] sm:$0xff]
        %v351 = vld [vmem:[%s332 + $0x90] sm:$0xff]
        %v352 = vld [vmem:[%s332 + $0x98] sm:$0xff]
        %v353 = vld [vmem:[%s332 + $0xa0] sm:$0xff]
        %v354 = vld [vmem:[%s332 + $0xa8] sm:$0xff]
        %v355 = vld [vmem:[%s332 + $0xb0] sm:$0xff]
        %v356 = vld [vmem:[%s332 + $0xb8] sm:$0xff]
        %v357 = vld [vmem:[%s332 + $0xc0] sm:$0xff]
        %v358 = vld [vmem:[%s332 + $0xc8] sm:$0xff]
        %v359 = vld [vmem:[%s332 + $0xd0] sm:$0xff]
        %v360 = vld [vmem:[%s332 + $0xd8] sm:$0xff]
        %v361 = vld [vmem:[%s332 + $0xe0] sm:$0xff]
        %v362 = vld [vmem:[%s332 + $0xe8] sm:$0xff]
        %v363 = vld [vmem:[%s332 + $0xf0] sm:$0xff]
        %v364 = vld [vmem:[%s332 + $0xf8] sm:$0xff]
        %s365 = sadd.s32 %s224, 5
        %s366 = smul.u32 %s365, 16
        %s367 = scalar_lea.vmem %s189, %s366
        %v368 = vld [vmem:[%s367] sm:$0xff]
        %v369 = vld [vmem:[%s367 + $0x8] sm:$0xff]
        %v370 = vld [vmem:[%s367 + $0x10] sm:$0xff]
        %v371 = vld [vmem:[%s367 + $0x18] sm:$0xff]
        %v372 = vld [vmem:[%s367 + $0x20] sm:$0xff]
        %v373 = vld [vmem:[%s367 + $0x28] sm:$0xff]
        %v374 = vld [vmem:[%s367 + $0x30] sm:$0xff]
        %v375 = vld [vmem:[%s367 + $0x38] sm:$0xff]
        %v376 = vld [vmem:[%s367 + $0x40] sm:$0xff]
        %v377 = vld [vmem:[%s367 + $0x48] sm:$0xff]
        %v378 = vld [vmem:[%s367 + $0x50] sm:$0xff]
        %v379 = vld [vmem:[%s367 + $0x58] sm:$0xff]
        %v380 = vld [vmem:[%s367 + $0x60] sm:$0xff]
        %v381 = vld [vmem:[%s367 + $0x68] sm:$0xff]
        %v382 = vld [vmem:[%s367 + $0x70] sm:$0xff]
        %v383 = vld [vmem:[%s367 + $0x78] sm:$0xff]
        %v384 = vld [vmem:[%s367 + $0x80] sm:$0xff]
        %v385 = vld [vmem:[%s367 + $0x88] sm:$0xff]
        %v386 = vld [vmem:[%s367 + $0x90] sm:$0xff]
        %v387 = vld [vmem:[%s367 + $0x98] sm:$0xff]
        %v388 = vld [vmem:[%s367 + $0xa0] sm:$0xff]
        %v389 = vld [vmem:[%s367 + $0xa8] sm:$0xff]
        %v390 = vld [vmem:[%s367 + $0xb0] sm:$0xff]
        %v391 = vld [vmem:[%s367 + $0xb8] sm:$0xff]
        %v392 = vld [vmem:[%s367 + $0xc0] sm:$0xff]
        %v393 = vld [vmem:[%s367 + $0xc8] sm:$0xff]
        %v394 = vld [vmem:[%s367 + $0xd0] sm:$0xff]
        %v395 = vld [vmem:[%s367 + $0xd8] sm:$0xff]
        %v396 = vld [vmem:[%s367 + $0xe0] sm:$0xff]
        %v397 = vld [vmem:[%s367 + $0xe8] sm:$0xff]
        %v398 = vld [vmem:[%s367 + $0xf0] sm:$0xff]
        %v399 = vld [vmem:[%s367 + $0xf8] sm:$0xff]
        %s400 = sadd.s32 %s224, 6
        %s401 = smul.u32 %s400, 16
        %s402 = scalar_lea.vmem %s189, %s401
        %v403 = vld [vmem:[%s402] sm:$0xff]
        %v404 = vld [vmem:[%s402 + $0x8] sm:$0xff]
        %v405 = vld [vmem:[%s402 + $0x10] sm:$0xff]
        %v406 = vld [vmem:[%s402 + $0x18] sm:$0xff]
        %v407 = vld [vmem:[%s402 + $0x20] sm:$0xff]
        %v408 = vld [vmem:[%s402 + $0x28] sm:$0xff]
        %v409 = vld [vmem:[%s402 + $0x30] sm:$0xff]
        %v410 = vld [vmem:[%s402 + $0x38] sm:$0xff]
        %v411 = vld [vmem:[%s402 + $0x40] sm:$0xff]
        %v412 = vld [vmem:[%s402 + $0x48] sm:$0xff]
        %v413 = vld [vmem:[%s402 + $0x50] sm:$0xff]
        %v414 = vld [vmem:[%s402 + $0x58] sm:$0xff]
        %v415 = vld [vmem:[%s402 + $0x60] sm:$0xff]
        %v416 = vld [vmem:[%s402 + $0x68] sm:$0xff]
        %v417 = vld [vmem:[%s402 + $0x70] sm:$0xff]
        %v418 = vld [vmem:[%s402 + $0x78] sm:$0xff]
        %v419 = vld [vmem:[%s402 + $0x80] sm:$0xff]
        %v420 = vld [vmem:[%s402 + $0x88] sm:$0xff]
        %v421 = vld [vmem:[%s402 + $0x90] sm:$0xff]
        %v422 = vld [vmem:[%s402 + $0x98] sm:$0xff]
        %v423 = vld [vmem:[%s402 + $0xa0] sm:$0xff]
        %v424 = vld [vmem:[%s402 + $0xa8] sm:$0xff]
        %v425 = vld [vmem:[%s402 + $0xb0] sm:$0xff]
        %v426 = vld [vmem:[%s402 + $0xb8] sm:$0xff]
        %v427 = vld [vmem:[%s402 + $0xc0] sm:$0xff]
        %v428 = vld [vmem:[%s402 + $0xc8] sm:$0xff]
        %v429 = vld [vmem:[%s402 + $0xd0] sm:$0xff]
        %v430 = vld [vmem:[%s402 + $0xd8] sm:$0xff]
        %v431 = vld [vmem:[%s402 + $0xe0] sm:$0xff]
        %v432 = vld [vmem:[%s402 + $0xe8] sm:$0xff]
        %v433 = vld [vmem:[%s402 + $0xf0] sm:$0xff]
        %v434 = vld [vmem:[%s402 + $0xf8] sm:$0xff]
        %s435 = sadd.s32 %s224, 7
        %s436 = smul.u32 %s435, 16
        %s437 = scalar_lea.vmem %s189, %s436
        %v438 = vld [vmem:[%s437] sm:$0xff]
        %v439 = vld [vmem:[%s437 + $0x8] sm:$0xff]
        %v440 = vld [vmem:[%s437 + $0x10] sm:$0xff]
        %v441 = vld [vmem:[%s437 + $0x18] sm:$0xff]
        %v442 = vld [vmem:[%s437 + $0x20] sm:$0xff]
        %v443 = vld [vmem:[%s437 + $0x28] sm:$0xff]
        %v444 = vld [vmem:[%s437 + $0x30] sm:$0xff]
        %v445 = vld [vmem:[%s437 + $0x38] sm:$0xff]
        %v446 = vld [vmem:[%s437 + $0x40] sm:$0xff]
        %v447 = vld [vmem:[%s437 + $0x48] sm:$0xff]
        %v448 = vld [vmem:[%s437 + $0x50] sm:$0xff]
        %v449 = vld [vmem:[%s437 + $0x58] sm:$0xff]
        %v450 = vld [vmem:[%s437 + $0x60] sm:$0xff]
        %v451 = vld [vmem:[%s437 + $0x68] sm:$0xff]
        %v452 = vld [vmem:[%s437 + $0x70] sm:$0xff]
        %v453 = vld [vmem:[%s437 + $0x78] sm:$0xff]
        %v454 = vld [vmem:[%s437 + $0x80] sm:$0xff]
        %v455 = vld [vmem:[%s437 + $0x88] sm:$0xff]
        %v456 = vld [vmem:[%s437 + $0x90] sm:$0xff]
        %v457 = vld [vmem:[%s437 + $0x98] sm:$0xff]
        %v458 = vld [vmem:[%s437 + $0xa0] sm:$0xff]
        %v459 = vld [vmem:[%s437 + $0xa8] sm:$0xff]
        %v460 = vld [vmem:[%s437 + $0xb0] sm:$0xff]
        %v461 = vld [vmem:[%s437 + $0xb8] sm:$0xff]
        %v462 = vld [vmem:[%s437 + $0xc0] sm:$0xff]
        %v463 = vld [vmem:[%s437 + $0xc8] sm:$0xff]
        %v464 = vld [vmem:[%s437 + $0xd0] sm:$0xff]
        %v465 = vld [vmem:[%s437 + $0xd8] sm:$0xff]
        %v466 = vld [vmem:[%s437 + $0xe0] sm:$0xff]
        %v467 = vld [vmem:[%s437 + $0xe8] sm:$0xff]
        %v468 = vld [vmem:[%s437 + $0xf0] sm:$0xff]
        %v469 = vld [vmem:[%s437 + $0xf8] sm:$0xff]
        %s470 = sadd.s32 %s224, 8
        %s471 = smul.u32 %s470, 16
        %s472 = scalar_lea.vmem %s189, %s471
        %v473 = vld [vmem:[%s472] sm:$0xff]
        %v474 = vld [vmem:[%s472 + $0x8] sm:$0xff]
        %v475 = vld [vmem:[%s472 + $0x10] sm:$0xff]
        %v476 = vld [vmem:[%s472 + $0x18] sm:$0xff]
        %v477 = vld [vmem:[%s472 + $0x20] sm:$0xff]
        %v478 = vld [vmem:[%s472 + $0x28] sm:$0xff]
        %v479 = vld [vmem:[%s472 + $0x30] sm:$0xff]
        %v480 = vld [vmem:[%s472 + $0x38] sm:$0xff]
        %v481 = vld [vmem:[%s472 + $0x40] sm:$0xff]
        %v482 = vld [vmem:[%s472 + $0x48] sm:$0xff]
        %v483 = vld [vmem:[%s472 + $0x50] sm:$0xff]
        %v484 = vld [vmem:[%s472 + $0x58] sm:$0xff]
        %v485 = vld [vmem:[%s472 + $0x60] sm:$0xff]
        %v486 = vld [vmem:[%s472 + $0x68] sm:$0xff]
        %v487 = vld [vmem:[%s472 + $0x70] sm:$0xff]
        %v488 = vld [vmem:[%s472 + $0x78] sm:$0xff]
        %v489 = vld [vmem:[%s472 + $0x80] sm:$0xff]
        %v490 = vld [vmem:[%s472 + $0x88] sm:$0xff]
        %v491 = vld [vmem:[%s472 + $0x90] sm:$0xff]
        %v492 = vld [vmem:[%s472 + $0x98] sm:$0xff]
        %v493 = vld [vmem:[%s472 + $0xa0] sm:$0xff]
        %v494 = vld [vmem:[%s472 + $0xa8] sm:$0xff]
        %v495 = vld [vmem:[%s472 + $0xb0] sm:$0xff]
        %v496 = vld [vmem:[%s472 + $0xb8] sm:$0xff]
        %v497 = vld [vmem:[%s472 + $0xc0] sm:$0xff]
        %v498 = vld [vmem:[%s472 + $0xc8] sm:$0xff]
        %v499 = vld [vmem:[%s472 + $0xd0] sm:$0xff]
        %v500 = vld [vmem:[%s472 + $0xd8] sm:$0xff]
        %v501 = vld [vmem:[%s472 + $0xe0] sm:$0xff]
        %v502 = vld [vmem:[%s472 + $0xe8] sm:$0xff]
        %v503 = vld [vmem:[%s472 + $0xf0] sm:$0xff]
        %v504 = vld [vmem:[%s472 + $0xf8] sm:$0xff]
        %v505 = vld [vmem:[%s1] sm:$0xf]
        %s506 = scalar_lea.vmem %s1, 4
        %v507 = vld [vmem:[%s506] sm:$0xf]
        %vm508 = vcmask 31744
        %v510 = vsel %vm508, %v228, 0
        %v513 = vsel %vm508, %v229, 0
        %v516 = vsel %vm508, %v230, 0
        %v519 = vsel %vm508, %v231, 0
        %v522 = vsel %vm508, %v232, 0
        %v525 = vsel %vm508, %v233, 0
        %v528 = vsel %vm508, %v234, 0
        %v531 = vsel %vm508, %v235, 0
        %v534 = vsel %vm508, %v236, 0
        %v537 = vsel %vm508, %v237, 0
        %v540 = vsel %vm508, %v238, 0
        %v543 = vsel %vm508, %v239, 0
        %v546 = vsel %vm508, %v240, 0
        %v549 = vsel %vm508, %v241, 0
        %v552 = vsel %vm508, %v242, 0
        %v555 = vsel %vm508, %v243, 0
        %v558 = vsel %vm508, %v244, 0
        %v561 = vsel %vm508, %v245, 0
        %v564 = vsel %vm508, %v246, 0
        %v567 = vsel %vm508, %v247, 0
        %v570 = vsel %vm508, %v248, 0
        %v573 = vsel %vm508, %v249, 0
        %v576 = vsel %vm508, %v250, 0
        %v579 = vsel %vm508, %v251, 0
        %v582 = vsel %vm508, %v252, 0
        %v585 = vsel %vm508, %v253, 0
        %v588 = vsel %vm508, %v254, 0
        %v591 = vsel %vm508, %v255, 0
        %v594 = vsel %vm508, %v256, 0
        %v597 = vsel %vm508, %v257, 0
        %v600 = vsel %vm508, %v258, 0
        %v603 = vsel %vm508, %v259, 0
        %vm605 = vcmask 1043456
        %v607 = vsel %vm605, %v507, 0
        %609 = vmatprep.subr.mxu0 0.0
        %610 = vmatpush1.msra.mxu0 %v607
        %611 = vmatprep.subr.mxu0 0.0
        %612 = vmatpush1.msra.mxu0 0.0
        %613 = vmatprep.subr.mxu0 0.0
        %614 = vmatpush1.msra.mxu0 0.0
        %615 = vmatprep.subr.mxu0 0.0
        %616 = vmatpush1.msra.mxu0 0.0
        %617 = vmatprep.subr.mxu0 0.0
        %618 = vmatpush1.msra.mxu0 0.0
        %619 = vmatprep.subr.mxu0 0.0
        %620 = vmatpush1.msra.mxu0 0.0
        %621 = vmatprep.subr.mxu0 0.0
        %622 = vmatpush1.msra.mxu0 0.0
        %623 = vmatprep.subr.mxu0 0.0
        %624 = vmatpush1.msra.mxu0 0.0
        %625 = vmatprep.subr.mxu0 0.0
        %626 = vmatpush1.msra.mxu0 0.0
        %627 = vmatprep.subr.mxu0 0.0
        %628 = vmatpush1.msra.mxu0 0.0
        %629 = vmatprep.subr.mxu0 0.0
        %630 = vmatpush1.msra.mxu0 0.0
        %631 = vmatprep.subr.mxu0 0.0
        %632 = vmatpush1.msra.mxu0 0.0
        %633 = vmatprep.subr.mxu0 0.0
        %634 = vmatpush1.msra.mxu0 0.0
        %635 = vmatprep.subr.mxu0 0.0
        %636 = vmatpush1.msra.mxu0 0.0
        %637 = vmatprep.subr.mxu0 0.0
        %638 = vmatpush1.msra.mxu0 0.0
        %639 = vmatprep.subr.mxu0 0.0
        %640 = vmatpush1.msra.mxu0 0.0
        %641 = vmatprep.subr.mxu0 0.0
        %642 = vmatpush1.msra.mxu0 0.0
        %643 = vmatprep.subr.mxu0 0.0
        %644 = vmatpush1.msra.mxu0 0.0
        %645 = vmatprep.subr.mxu0 0.0
        %646 = vmatpush1.msra.mxu0 0.0
        %647 = vmatprep.subr.mxu0 0.0
        %648 = vmatpush1.msra.mxu0 0.0
        %649 = vmatprep.subr.mxu0 0.0
        %650 = vmatpush1.msra.mxu0 0.0
        %651 = vmatprep.subr.mxu0 0.0
        %652 = vmatpush1.msra.mxu0 0.0
        %653 = vmatprep.subr.mxu0 0.0
        %654 = vmatpush1.msra.mxu0 0.0
        %655 = vmatprep.subr.mxu0 0.0
        %656 = vmatpush1.msra.mxu0 0.0
        %657 = vmatprep.subr.mxu0 0.0
        %658 = vmatpush1.msra.mxu0 0.0
        %659 = vmatprep.subr.mxu0 0.0
        %660 = vmatpush1.msra.mxu0 0.0
        %661 = vmatprep.subr.mxu0 0.0
        %662 = vmatpush1.msra.mxu0 0.0
        %663 = vmatprep.subr.mxu0 0.0
        %664 = vmatpush1.msra.mxu0 0.0
        %665 = vmatprep.subr.mxu0 0.0
        %666 = vmatpush1.msra.mxu0 0.0
        %667 = vmatprep.subr.mxu0 0.0
        %668 = vmatpush1.msra.mxu0 0.0
        %669 = vmatprep.subr.mxu0 0.0
        %670 = vmatpush1.msra.mxu0 0.0
        %671 = vmatprep.subr.mxu0 0.0
        %672 = vmatpush1.msra.mxu0 0.0
        %673 = vmatprep.mubr.f32.mxu0 0.0
        %674 = vmatmul.mubr.f32.gmra.mrb[0].mxu0 %v510
        %v675 = vpop.f32.mrb[0].mxu0
        %v676 = vadd.f32 0.0, %v675
        %v677 = vpop.f32.mrb[0].mxu0
        %678 = vmatprep.mubr.f32.mxu0 0.0
        %679 = vmatmul.mubr.f32.gmra.mrb[0].mxu0 %v513
        %v680 = vpop.f32.mrb[0].mxu0
        %v681 = vadd.f32 0.0, %v680
        %v682 = vpop.f32.mrb[0].mxu0
        %683 = vmatprep.mubr.f32.mxu0 0.0
        %684 = vmatmul.mubr.f32.gmra.mrb[0].mxu0 %v516
        %v685 = vpop.f32.mrb[0].mxu0
        %v686 = vadd.f32 0.0, %v685
        %v687 = vpop.f32.mrb[0].mxu0
        %688 = vmatprep.mubr.f32.mxu0 0.0
        %689 = vmatmul.mubr.f32.gmra.mrb[0].mxu0 %v519
        %v690 = vpop.f32.mrb[0].mxu0
        %v691 = vadd.f32 0.0, %v690
        %v692 = vpop.f32.mrb[0].mxu0
        %693 = vmatprep.mubr.f32.mxu0 0.0
        %694 = vmatmul.mubr.f32.gmra.mrb[0].mxu0 %v522
        %v695 = vpop.f32.mrb[0].mxu0
        %v696 = vadd.f32 0.0, %v695
        %v697 = vpop.f32.mrb[0].mxu0
        %698 = vmatprep.mubr.f32.mxu0 0.0
        %699 = vmatmul.mubr.f32.gmra.mrb[0].mxu0 %v525
        %v700 = vpop.f32.mrb[0].mxu0
        %v701 = vadd.f32 0.0, %v700
        %v702 = vpop.f32.mrb[0].mxu0
        %703 = vmatprep.mubr.f32.mxu0 0.0
        %704 = vmatmul.mubr.f32.gmra.mrb[0].mxu0 %v528
        %v705 = vpop.f32.mrb[0].mxu0
        %v706 = vadd.f32 0.0, %v705
        %v707 = vpop.f32.mrb[0].mxu0
        %708 = vmatprep.mubr.f32.mxu0 0.0
        %709 = vmatmul.mubr.f32.gmra.mrb[0].mxu0 %v531
        %v710 = vpop.f32.mrb[0].mxu0
        %v711 = vadd.f32 0.0, %v710
        %v712 = vpop.f32.mrb[0].mxu0
        %713 = vmatprep.mubr.f32.mxu0 0.0
        %714 = vmatmul.mubr.f32.gmra.mrb[0].mxu0 %v534
        %v715 = vpop.f32.mrb[0].mxu0
        %v716 = vadd.f32 0.0, %v715
        %v717 = vpop.f32.mrb[0].mxu0
        %718 = vmatprep.mubr.f32.mxu0 0.0
        %719 = vmatmul.mubr.f32.gmra.mrb[0].mxu0 %v537
        %v720 = vpop.f32.mrb[0].mxu0
        %v721 = vadd.f32 0.0, %v720
        %v722 = vpop.f32.mrb[0].mxu0
        %723 = vmatprep.mubr.f32.mxu0 0.0
        %724 = vmatmul.mubr.f32.gmra.mrb[0].mxu0 %v540
        %v725 = vpop.f32.mrb[0].mxu0
        %v726 = vadd.f32 0.0, %v725
        %v727 = vpop.f32.mrb[0].mxu0
        %728 = vmatprep.mubr.f32.mxu0 0.0
        %729 = vmatmul.mubr.f32.gmra.mrb[0].mxu0 %v543
        %v730 = vpop.f32.mrb[0].mxu0
        %v731 = vadd.f32 0.0, %v730
        %v732 = vpop.f32.mrb[0].mxu0
        %733 = vmatprep.mubr.f32.mxu0 0.0
        %734 = vmatmul.mubr.f32.gmra.mrb[0].mxu0 %v546
        %v735 = vpop.f32.mrb[0].mxu0
        %v736 = vadd.f32 0.0, %v735
        %v737 = vpop.f32.mrb[0].mxu0
        %738 = vmatprep.mubr.f32.mxu0 0.0
        %739 = vmatmul.mubr.f32.gmra.mrb[0].mxu0 %v549
        %v740 = vpop.f32.mrb[0].mxu0
        %v741 = vadd.f32 0.0, %v740
        %v742 = vpop.f32.mrb[0].mxu0
        %743 = vmatprep.mubr.f32.mxu0 0.0
        %744 = vmatmul.mubr.f32.gmra.mrb[0].mxu0 %v552
        %v745 = vpop.f32.mrb[0].mxu0
        %v746 = vadd.f32 0.0, %v745
        %v747 = vpop.f32.mrb[0].mxu0
        %748 = vmatprep.mubr.f32.mxu0 0.0
        %749 = vmatmul.mubr.f32.gmra.mrb[0].mxu0 %v555
        %v750 = vpop.f32.mrb[0].mxu0
        %v751 = vadd.f32 0.0, %v750
        %v752 = vpop.f32.mrb[0].mxu0
        %753 = vmatprep.mubr.f32.mxu0 0.0
        %754 = vmatmul.mubr.f32.gmra.mrb[0].mxu0 %v558
        %v755 = vpop.f32.mrb[0].mxu0
        %v756 = vadd.f32 0.0, %v755
        %v757 = vpop.f32.mrb[0].mxu0
        %758 = vmatprep.mubr.f32.mxu0 0.0
        %759 = vmatmul.mubr.f32.gmra.mrb[0].mxu0 %v561
        %v760 = vpop.f32.mrb[0].mxu0
        %v761 = vadd.f32 0.0, %v760
        %v762 = vpop.f32.mrb[0].mxu0
        %763 = vmatprep.mubr.f32.mxu0 0.0
        %764 = vmatmul.mubr.f32.gmra.mrb[0].mxu0 %v564
        %v765 = vpop.f32.mrb[0].mxu0
        %v766 = vadd.f32 0.0, %v765
        %v767 = vpop.f32.mrb[0].mxu0
        %768 = vmatprep.mubr.f32.mxu0 0.0
        %769 = vmatmul.mubr.f32.gmra.mrb[0].mxu0 %v567
        %v770 = vpop.f32.mrb[0].mxu0
        %v771 = vadd.f32 0.0, %v770
        %v772 = vpop.f32.mrb[0].mxu0
        %773 = vmatprep.mubr.f32.mxu0 0.0
        %774 = vmatmul.mubr.f32.gmra.mrb[0].mxu0 %v570
        %v775 = vpop.f32.mrb[0].mxu0
        %v776 = vadd.f32 0.0, %v775
        %v777 = vpop.f32.mrb[0].mxu0
        %778 = vmatprep.mubr.f32.mxu0 0.0
        %779 = vmatmul.mubr.f32.gmra.mrb[0].mxu0 %v573
        %v780 = vpop.f32.mrb[0].mxu0
        %v781 = vadd.f32 0.0, %v780
        %v782 = vpop.f32.mrb[0].mxu0
        %783 = vmatprep.mubr.f32.mxu0 0.0
        %784 = vmatmul.mubr.f32.gmra.mrb[0].mxu0 %v576
        %v785 = vpop.f32.mrb[0].mxu0
        %v786 = vadd.f32 0.0, %v785
        %v787 = vpop.f32.mrb[0].mxu0
        %788 = vmatprep.mubr.f32.mxu0 0.0
        %789 = vmatmul.mubr.f32.gmra.mrb[0].mxu0 %v579
        %v790 = vpop.f32.mrb[0].mxu0
        %v791 = vadd.f32 0.0, %v790
        %v792 = vpop.f32.mrb[0].mxu0
        %793 = vmatprep.mubr.f32.mxu0 0.0
        %794 = vmatmul.mubr.f32.gmra.mrb[0].mxu0 %v582
        %v795 = vpop.f32.mrb[0].mxu0
        %v796 = vadd.f32 0.0, %v795
        %v797 = vpop.f32.mrb[0].mxu0
        %798 = vmatprep.mubr.f32.mxu0 0.0
        %799 = vmatmul.mubr.f32.gmra.mrb[0].mxu0 %v585
        %v800 = vpop.f32.mrb[0].mxu0
        %v801 = vadd.f32 0.0, %v800
        %v802 = vpop.f32.mrb[0].mxu0
        %803 = vmatprep.mubr.f32.mxu0 0.0
        %804 = vmatmul.mubr.f32.gmra.mrb[0].mxu0 %v588
        %v805 = vpop.f32.mrb[0].mxu0
        %v806 = vadd.f32 0.0, %v805
        %v807 = vpop.f32.mrb[0].mxu0
        %808 = vmatprep.mubr.f32.mxu0 0.0
        %809 = vmatmul.mubr.f32.gmra.mrb[0].mxu0 %v591
        %v810 = vpop.f32.mrb[0].mxu0
        %v811 = vadd.f32 0.0, %v810
        %v812 = vpop.f32.mrb[0].mxu0
        %813 = vmatprep.mubr.f32.mxu0 0.0
        %814 = vmatmul.mubr.f32.gmra.mrb[0].mxu0 %v594
        %v815 = vpop.f32.mrb[0].mxu0
        %v816 = vadd.f32 0.0, %v815
        %v817 = vpop.f32.mrb[0].mxu0
        %818 = vmatprep.mubr.f32.mxu0 0.0
        %819 = vmatmul.mubr.f32.gmra.mrb[0].mxu0 %v597
        %v820 = vpop.f32.mrb[0].mxu0
        %v821 = vadd.f32 0.0, %v820
        %v822 = vpop.f32.mrb[0].mxu0
        %823 = vmatprep.mubr.f32.mxu0 0.0
        %824 = vmatmul.mubr.f32.gmra.mrb[0].mxu0 %v600
        %v825 = vpop.f32.mrb[0].mxu0
        %v826 = vadd.f32 0.0, %v825
        %v827 = vpop.f32.mrb[0].mxu0
        %828 = vmatprep.mubr.f32.mxu0 0.0
        %829 = vmatmul.mubr.f32.gmra.mrb[0].mxu0 %v603
        %v830 = vpop.f32.mrb[0].mxu0
        %v831 = vadd.f32 0.0, %v830
        %v832 = vpop.f32.mrb[0].mxu0
        %833 = vdwg.mxu0
        %v835 = vsel %vm508, %v192, 0
        %v838 = vsel %vm508, %v193, 0
        %v841 = vsel %vm508, %v194, 0
        %v844 = vsel %vm508, %v195, 0
        %v847 = vsel %vm508, %v196, 0
        %v850 = vsel %vm508, %v197, 0
        %v853 = vsel %vm508, %v198, 0
        %v856 = vsel %vm508, %v199, 0
        %v859 = vsel %vm508, %v200, 0
        %v862 = vsel %vm508, %v201, 0
        %v865 = vsel %vm508, %v202, 0
        %v868 = vsel %vm508, %v203, 0
        %v871 = vsel %vm508, %v204, 0
        %v874 = vsel %vm508, %v205, 0
        %v877 = vsel %vm508, %v206, 0
        %v880 = vsel %vm508, %v207, 0
        %v883 = vsel %vm508, %v208, 0
        %v886 = vsel %vm508, %v209, 0
        %v889 = vsel %vm508, %v210, 0
        %v892 = vsel %vm508, %v211, 0
        %v895 = vsel %vm508, %v212, 0
        %v898 = vsel %vm508, %v213, 0
        %v901 = vsel %vm508, %v214, 0
        %v904 = vsel %vm508, %v215, 0
        %v907 = vsel %vm508, %v216, 0
        %v910 = vsel %vm508, %v217, 0
        %v913 = vsel %vm508, %v218, 0
        %v916 = vsel %vm508, %v219, 0
        %v919 = vsel %vm508, %v220, 0
        %v922 = vsel %vm508, %v221, 0
        %v925 = vsel %vm508, %v222, 0
        %v928 = vsel %vm508, %v223, 0
        %v931 = vsel %vm605, %v505, 0
        %933 = vmatprep.subr.mxu0 0.0
        %934 = vmatpush1.msra.mxu0 %v931
        %935 = vmatprep.subr.mxu0 0.0
        %936 = vmatpush1.msra.mxu0 0.0
        %937 = vmatprep.subr.mxu0 0.0
        %938 = vmatpush1.msra.mxu0 0.0
        %939 = vmatprep.subr.mxu0 0.0
        %940 = vmatpush1.msra.mxu0 0.0
        %941 = vmatprep.subr.mxu0 0.0
        %942 = vmatpush1.msra.mxu0 0.0
        %943 = vmatprep.subr.mxu0 0.0
        %944 = vmatpush1.msra.mxu0 0.0
        %945 = vmatprep.subr.mxu0 0.0
        %946 = vmatpush1.msra.mxu0 0.0
        %947 = vmatprep.subr.mxu0 0.0
        %948 = vmatpush1.msra.mxu0 0.0
        %949 = vmatprep.subr.mxu0 0.0
        %950 = vmatpush1.msra.mxu0 0.0
        %951 = vmatprep.subr.mxu0 0.0
        %952 = vmatpush1.msra.mxu0 0.0
        %953 = vmatprep.subr.mxu0 0.0
        %954 = vmatpush1.msra.mxu0 0.0
        %955 = vmatprep.subr.mxu0 0.0
        %956 = vmatpush1.msra.mxu0 0.0
        %957 = vmatprep.subr.mxu0 0.0
        %958 = vmatpush1.msra.mxu0 0.0
        %959 = vmatprep.subr.mxu0 0.0
        %960 = vmatpush1.msra.mxu0 0.0
        %961 = vmatprep.subr.mxu0 0.0
        %962 = vmatpush1.msra.mxu0 0.0
        %963 = vmatprep.subr.mxu0 0.0
        %964 = vmatpush1.msra.mxu0 0.0
        %965 = vmatprep.subr.mxu0 0.0
        %966 = vmatpush1.msra.mxu0 0.0
        %967 = vmatprep.subr.mxu0 0.0
        %968 = vmatpush1.msra.mxu0 0.0
        %969 = vmatprep.subr.mxu0 0.0
        %970 = vmatpush1.msra.mxu0 0.0
        %971 = vmatprep.subr.mxu0 0.0
        %972 = vmatpush1.msra.mxu0 0.0
        %973 = vmatprep.subr.mxu0 0.0
        %974 = vmatpush1.msra.mxu0 0.0
        %975 = vmatprep.subr.mxu0 0.0
        %976 = vmatpush1.msra.mxu0 0.0
        %977 = vmatprep.subr.mxu0 0.0
        %978 = vmatpush1.msra.mxu0 0.0
        %979 = vmatprep.subr.mxu0 0.0
        %980 = vmatpush1.msra.mxu0 0.0
        %981 = vmatprep.subr.mxu0 0.0
        %982 = vmatpush1.msra.mxu0 0.0
        %983 = vmatprep.subr.mxu0 0.0
        %984 = vmatpush1.msra.mxu0 0.0
        %985 = vmatprep.subr.mxu0 0.0
        %986 = vmatpush1.msra.mxu0 0.0
        %987 = vmatprep.subr.mxu0 0.0
        %988 = vmatpush1.msra.mxu0 0.0
        %989 = vmatprep.subr.mxu0 0.0
        %990 = vmatpush1.msra.mxu0 0.0
        %991 = vmatprep.subr.mxu0 0.0
        %992 = vmatpush1.msra.mxu0 0.0
        %993 = vmatprep.subr.mxu0 0.0
        %994 = vmatpush1.msra.mxu0 0.0
        %995 = vmatprep.subr.mxu0 0.0
        %996 = vmatpush1.msra.mxu0 0.0
        %997 = vmatprep.mubr.f32.mxu0 0.0
        %998 = vmatmul.mubr.f32.gmra.mrb[0].mxu0 %v835
        %v999 = vpop.f32.mrb[0].mxu0
        %v1000 = vadd.f32 %v676, %v999
        %v1001 = vpop.f32.mrb[0].mxu0
        %1002 = vmatprep.mubr.f32.mxu0 0.0
        %1003 = vmatmul.mubr.f32.gmra.mrb[0].mxu0 %v838
        %v1004 = vpop.f32.mrb[0].mxu0
        %v1005 = vadd.f32 %v681, %v1004
        %v1006 = vpop.f32.mrb[0].mxu0
        %1007 = vmatprep.mubr.f32.mxu0 0.0
        %1008 = vmatmul.mubr.f32.gmra.mrb[0].mxu0 %v841
        %v1009 = vpop.f32.mrb[0].mxu0
        %v1010 = vadd.f32 %v686, %v1009
        %v1011 = vpop.f32.mrb[0].mxu0
        %1012 = vmatprep.mubr.f32.mxu0 0.0
        %1013 = vmatmul.mubr.f32.gmra.mrb[0].mxu0 %v844
        %v1014 = vpop.f32.mrb[0].mxu0
        %v1015 = vadd.f32 %v691, %v1014
        %v1016 = vpop.f32.mrb[0].mxu0
        %1017 = vmatprep.mubr.f32.mxu0 0.0
        %1018 = vmatmul.mubr.f32.gmra.mrb[0].mxu0 %v847
        %v1019 = vpop.f32.mrb[0].mxu0
        %v1020 = vadd.f32 %v696, %v1019
        %v1021 = vpop.f32.mrb[0].mxu0
        %1022 = vmatprep.mubr.f32.mxu0 0.0
        %1023 = vmatmul.mubr.f32.gmra.mrb[0].mxu0 %v850
        %v1024 = vpop.f32.mrb[0].mxu0
        %v1025 = vadd.f32 %v701, %v1024
        %v1026 = vpop.f32.mrb[0].mxu0
        %1027 = vmatprep.mubr.f32.mxu0 0.0
        %1028 = vmatmul.mubr.f32.gmra.mrb[0].mxu0 %v853
        %v1029 = vpop.f32.mrb[0].mxu0
        %v1030 = vadd.f32 %v706, %v1029
        %v1031 = vpop.f32.mrb[0].mxu0
        %1032 = vmatprep.mubr.f32.mxu0 0.0
        %1033 = vmatmul.mubr.f32.gmra.mrb[0].mxu0 %v856
        %v1034 = vpop.f32.mrb[0].mxu0
        %v1035 = vadd.f32 %v711, %v1034
        %v1036 = vpop.f32.mrb[0].mxu0
        %1037 = vmatprep.mubr.f32.mxu0 0.0
        %1038 = vmatmul.mubr.f32.gmra.mrb[0].mxu0 %v859
        %v1039 = vpop.f32.mrb[0].mxu0
        %v1040 = vadd.f32 %v716, %v1039
        %v1041 = vpop.f32.mrb[0].mxu0
        %1042 = vmatprep.mubr.f32.mxu0 0.0
        %1043 = vmatmul.mubr.f32.gmra.mrb[0].mxu0 %v862
        %v1044 = vpop.f32.mrb[0].mxu0
        %v1045 = vadd.f32 %v721, %v1044
        %v1046 = vpop.f32.mrb[0].mxu0
        %1047 = vmatprep.mubr.f32.mxu0 0.0
        %1048 = vmatmul.mubr.f32.gmra.mrb[0].mxu0 %v865
        %v1049 = vpop.f32.mrb[0].mxu0
        %v1050 = vadd.f32 %v726, %v1049
        %v1051 = vpop.f32.mrb[0].mxu0
        %1052 = vmatprep.mubr.f32.mxu0 0.0
        %1053 = vmatmul.mubr.f32.gmra.mrb[0].mxu0 %v868
        %v1054 = vpop.f32.mrb[0].mxu0
        %v1055 = vadd.f32 %v731, %v1054
        %v1056 = vpop.f32.mrb[0].mxu0
        %1057 = vmatprep.mubr.f32.mxu0 0.0
        %1058 = vmatmul.mubr.f32.gmra.mrb[0].mxu0 %v871
        %v1059 = vpop.f32.mrb[0].mxu0
        %v1060 = vadd.f32 %v736, %v1059
        %v1061 = vpop.f32.mrb[0].mxu0
        %1062 = vmatprep.mubr.f32.mxu0 0.0
        %1063 = vmatmul.mubr.f32.gmra.mrb[0].mxu0 %v874
        %v1064 = vpop.f32.mrb[0].mxu0
        %v1065 = vadd.f32 %v741, %v1064
        %v1066 = vpop.f32.mrb[0].mxu0
        %1067 = vmatprep.mubr.f32.mxu0 0.0
        %1068 = vmatmul.mubr.f32.gmra.mrb[0].mxu0 %v877
        %v1069 = vpop.f32.mrb[0].mxu0
        %v1070 = vadd.f32 %v746, %v1069
        %v1071 = vpop.f32.mrb[0].mxu0
        %1072 = vmatprep.mubr.f32.mxu0 0.0
        %1073 = vmatmul.mubr.f32.gmra.mrb[0].mxu0 %v880
        %v1074 = vpop.f32.mrb[0].mxu0
        %v1075 = vadd.f32 %v751, %v1074
        %v1076 = vpop.f32.mrb[0].mxu0
        %1077 = vmatprep.mubr.f32.mxu0 0.0
        %1078 = vmatmul.mubr.f32.gmra.mrb[0].mxu0 %v883
        %v1079 = vpop.f32.mrb[0].mxu0
        %v1080 = vadd.f32 %v756, %v1079
        %v1081 = vpop.f32.mrb[0].mxu0
        %1082 = vmatprep.mubr.f32.mxu0 0.0
        %1083 = vmatmul.mubr.f32.gmra.mrb[0].mxu0 %v886
        %v1084 = vpop.f32.mrb[0].mxu0
        %v1085 = vadd.f32 %v761, %v1084
        %v1086 = vpop.f32.mrb[0].mxu0
        %1087 = vmatprep.mubr.f32.mxu0 0.0
        %1088 = vmatmul.mubr.f32.gmra.mrb[0].mxu0 %v889
        %v1089 = vpop.f32.mrb[0].mxu0
        %v1090 = vadd.f32 %v766, %v1089
        %v1091 = vpop.f32.mrb[0].mxu0
        %1092 = vmatprep.mubr.f32.mxu0 0.0
        %1093 = vmatmul.mubr.f32.gmra.mrb[0].mxu0 %v892
        %v1094 = vpop.f32.mrb[0].mxu0
        %v1095 = vadd.f32 %v771, %v1094
        %v1096 = vpop.f32.mrb[0].mxu0
        %1097 = vmatprep.mubr.f32.mxu0 0.0
        %1098 = vmatmul.mubr.f32.gmra.mrb[0].mxu0 %v895
        %v1099 = vpop.f32.mrb[0].mxu0
        %v1100 = vadd.f32 %v776, %v1099
        %v1101 = vpop.f32.mrb[0].mxu0
        %1102 = vmatprep.mubr.f32.mxu0 0.0
        %1103 = vmatmul.mubr.f32.gmra.mrb[0].mxu0 %v898
        %v1104 = vpop.f32.mrb[0].mxu0
        %v1105 = vadd.f32 %v781, %v1104
        %v1106 = vpop.f32.mrb[0].mxu0
        %1107 = vmatprep.mubr.f32.mxu0 0.0
        %1108 = vmatmul.mubr.f32.gmra.mrb[0].mxu0 %v901
        %v1109 = vpop.f32.mrb[0].mxu0
        %v1110 = vadd.f32 %v786, %v1109
        %v1111 = vpop.f32.mrb[0].mxu0
        %1112 = vmatprep.mubr.f32.mxu0 0.0
        %1113 = vmatmul.mubr.f32.gmra.mrb[0].mxu0 %v904
        %v1114 = vpop.f32.mrb[0].mxu0
        %v1115 = vadd.f32 %v791, %v1114
        %v1116 = vpop.f32.mrb[0].mxu0
        %1117 = vmatprep.mubr.f32.mxu0 0.0
        %1118 = vmatmul.mubr.f32.gmra.mrb[0].mxu0 %v907
        %v1119 = vpop.f32.mrb[0].mxu0
        %v1120 = vadd.f32 %v796, %v1119
        %v1121 = vpop.f32.mrb[0].mxu0
        %1122 = vmatprep.mubr.f32.mxu0 0.0
        %1123 = vmatmul.mubr.f32.gmra.mrb[0].mxu0 %v910
        %v1124 = vpop.f32.mrb[0].mxu0
        %v1125 = vadd.f32 %v801, %v1124
        %v1126 = vpop.f32.mrb[0].mxu0
        %1127 = vmatprep.mubr.f32.mxu0 0.0
        %1128 = vmatmul.mubr.f32.gmra.mrb[0].mxu0 %v913
        %v1129 = vpop.f32.mrb[0].mxu0
        %v1130 = vadd.f32 %v806, %v1129
        %v1131 = vpop.f32.mrb[0].mxu0
        %1132 = vmatprep.mubr.f32.mxu0 0.0
        %1133 = vmatmul.mubr.f32.gmra.mrb[0].mxu0 %v916
        %v1134 = vpop.f32.mrb[0].mxu0
        %v1135 = vadd.f32 %v811, %v1134
        %v1136 = vpop.f32.mrb[0].mxu0
        %1137 = vmatprep.mubr.f32.mxu0 0.0
        %1138 = vmatmul.mubr.f32.gmra.mrb[0].mxu0 %v919
        %v1139 = vpop.f32.mrb[0].mxu0
        %v1140 = vadd.f32 %v816, %v1139
        %v1141 = vpop.f32.mrb[0].mxu0
        %1142 = vmatprep.mubr.f32.mxu0 0.0
        %1143 = vmatmul.mubr.f32.gmra.mrb[0].mxu0 %v922
        %v1144 = vpop.f32.mrb[0].mxu0
        %v1145 = vadd.f32 %v821, %v1144
        %v1146 = vpop.f32.mrb[0].mxu0
        %1147 = vmatprep.mubr.f32.mxu0 0.0
        %1148 = vmatmul.mubr.f32.gmra.mrb[0].mxu0 %v925
        %v1149 = vpop.f32.mrb[0].mxu0
        %v1150 = vadd.f32 %v826, %v1149
        %v1151 = vpop.f32.mrb[0].mxu0
        %1152 = vmatprep.mubr.f32.mxu0 0.0
        %1153 = vmatmul.mubr.f32.gmra.mrb[0].mxu0 %v928
        %v1154 = vpop.f32.mrb[0].mxu0
        %v1155 = vadd.f32 %v831, %v1154
        %v1156 = vpop.f32.mrb[0].mxu0
        %1157 = vdwg.mxu0
        %s1158 = scalar_lea.vmem %s1, 8
        %v1159 = vld [vmem:[%s1158] sm:$0xf]
        %v1161 = vsel %vm508, %v263, 0
        %v1164 = vsel %vm508, %v264, 0
        %v1167 = vsel %vm508, %v265, 0
        %v1170 = vsel %vm508, %v266, 0
        %v1173 = vsel %vm508, %v267, 0
        %v1176 = vsel %vm508, %v268, 0
        %v1179 = vsel %vm508, %v269, 0
        %v1182 = vsel %vm508, %v270, 0
        %v1185 = vsel %vm508, %v271, 0
        %v1188 = vsel %vm508, %v272, 0
        %v1191 = vsel %vm508, %v273, 0
        %v1194 = vsel %vm508, %v274, 0
        %v1197 = vsel %vm508, %v275, 0
        %v1200 = vsel %vm508, %v276, 0
        %v1203 = vsel %vm508, %v277, 0
        %v1206 = vsel %vm508, %v278, 0
        %v1209 = vsel %vm508, %v279, 0
        %v1212 = vsel %vm508, %v280, 0
        %v1215 = vsel %vm508, %v281, 0
        %v1218 = vsel %vm508, %v282, 0
        %v1221 = vsel %vm508, %v283, 0
        %v1224 = vsel %vm508, %v284, 0
        %v1227 = vsel %vm508, %v285, 0
        %v1230 = vsel %vm508, %v286, 0
        %v1233 = vsel %vm508, %v287, 0
        %v1236 = vsel %vm508, %v288, 0
        %v1239 = vsel %vm508, %v289, 0
        %v1242 = vsel %vm508, %v290, 0
        %v1245 = vsel %vm508, %v291, 0
        %v1248 = vsel %vm508, %v292, 0
        %v1251 = vsel %vm508, %v293, 0
        %v1254 = vsel %vm508, %v294, 0
        %v1257 = vsel %vm605, %v1159, 0
        %1259 = vmatprep.subr.mxu0 0.0
        %1260 = vmatpush1.msra.mxu0 %v1257
        %1261 = vmatprep.subr.mxu0 0.0
        %1262 = vmatpush1.msra.mxu0 0.0
        %1263 = vmatprep.subr.mxu0 0.0
        %1264 = vmatpush1.msra.mxu0 0.0
        %1265 = vmatprep.subr.mxu0 0.0
        %1266 = vmatpush1.msra.mxu0 0.0
        %1267 = vmatprep.subr.mxu0 0.0
        %1268 = vmatpush1.msra.mxu0 0.0
        %1269 = vmatprep.subr.mxu0 0.0
        %1270 = vmatpush1.msra.mxu0 0.0
        %1271 = vmatprep.subr.mxu0 0.0
        %1272 = vmatpush1.msra.mxu0 0.0
        %1273 = vmatprep.subr.mxu0 0.0
        %1274 = vmatpush1.msra.mxu0 0.0
        %1275 = vmatprep.subr.mxu0 0.0
        %1276 = vmatpush1.msra.mxu0 0.0
        %1277 = vmatprep.subr.mxu0 0.0
        %1278 = vmatpush1.msra.mxu0 0.0
        %1279 = vmatprep.subr.mxu0 0.0
        %1280 = vmatpush1.msra.mxu0 0.0
        %1281 = vmatprep.subr.mxu0 0.0
        %1282 = vmatpush1.msra.mxu0 0.0
        %1283 = vmatprep.subr.mxu0 0.0
        %1284 = vmatpush1.msra.mxu0 0.0
        %1285 = vmatprep.subr.mxu0 0.0
        %1286 = vmatpush1.msra.mxu0 0.0
        %1287 = vmatprep.subr.mxu0 0.0
        %1288 = vmatpush1.msra.mxu0 0.0
        %1289 = vmatprep.subr.mxu0 0.0
        %1290 = vmatpush1.msra.mxu0 0.0
        %1291 = vmatprep.subr.mxu0 0.0
        %1292 = vmatpush1.msra.mxu0 0.0
        %1293 = vmatprep.subr.mxu0 0.0
        %1294 = vmatpush1.msra.mxu0 0.0
        %1295 = vmatprep.subr.mxu0 0.0
        %1296 = vmatpush1.msra.mxu0 0.0
        %1297 = vmatprep.subr.mxu0 0.0
        %1298 = vmatpush1.msra.mxu0 0.0
        %1299 = vmatprep.subr.mxu0 0.0
        %1300 = vmatpush1.msra.mxu0 0.0
        %1301 = vmatprep.subr.mxu0 0.0
        %1302 = vmatpush1.msra.mxu0 0.0
        %1303 = vmatprep.subr.mxu0 0.0
        %1304 = vmatpush1.msra.mxu0 0.0
        %1305 = vmatprep.subr.mxu0 0.0
        %1306 = vmatpush1.msra.mxu0 0.0
        %1307 = vmatprep.subr.mxu0 0.0
        %1308 = vmatpush1.msra.mxu0 0.0
        %1309 = vmatprep.subr.mxu0 0.0
        %1310 = vmatpush1.msra.mxu0 0.0
        %1311 = vmatprep.subr.mxu0 0.0
        %1312 = vmatpush1.msra.mxu0 0.0
        %1313 = vmatprep.subr.mxu0 0.0
        %1314 = vmatpush1.msra.mxu0 0.0
        %1315 = vmatprep.subr.mxu0 0.0
        %1316 = vmatpush1.msra.mxu0 0.0
        %1317 = vmatprep.subr.mxu0 0.0
        %1318 = vmatpush1.msra.mxu0 0.0
        %1319 = vmatprep.subr.mxu0 0.0
        %1320 = vmatpush1.msra.mxu0 0.0
        %1321 = vmatprep.subr.mxu0 0.0
        %1322 = vmatpush1.msra.mxu0 0.0
        %1323 = vmatprep.mubr.f32.mxu0 0.0
        %1324 = vmatmul.mubr.f32.gmra.mrb[0].mxu0 %v1161
        %v1325 = vpop.f32.mrb[0].mxu0
        %v1326 = vadd.f32 0.0, %v1325
        %v1327 = vpop.f32.mrb[0].mxu0
        %1328 = vmatprep.mubr.f32.mxu0 0.0
        %1329 = vmatmul.mubr.f32.gmra.mrb[0].mxu0 %v1164
        %v1330 = vpop.f32.mrb[0].mxu0
        %v1331 = vadd.f32 0.0, %v1330
        %v1332 = vpop.f32.mrb[0].mxu0
        %1333 = vmatprep.mubr.f32.mxu0 0.0
        %1334 = vmatmul.mubr.f32.gmra.mrb[0].mxu0 %v1167
        %v1335 = vpop.f32.mrb[0].mxu0
        %v1336 = vadd.f32 0.0, %v1335
        %v1337 = vpop.f32.mrb[0].mxu0
        %1338 = vmatprep.mubr.f32.mxu0 0.0
        %1339 = vmatmul.mubr.f32.gmra.mrb[0].mxu0 %v1170
        %v1340 = vpop.f32.mrb[0].mxu0
        %v1341 = vadd.f32 0.0, %v1340
        %v1342 = vpop.f32.mrb[0].mxu0
        %1343 = vmatprep.mubr.f32.mxu0 0.0
        %1344 = vmatmul.mubr.f32.gmra.mrb[0].mxu0 %v1173
        %v1345 = vpop.f32.mrb[0].mxu0
        %v1346 = vadd.f32 0.0, %v1345
        %v1347 = vpop.f32.mrb[0].mxu0
        %1348 = vmatprep.mubr.f32.mxu0 0.0
        %1349 = vmatmul.mubr.f32.gmra.mrb[0].mxu0 %v1176
        %v1350 = vpop.f32.mrb[0].mxu0
        %v1351 = vadd.f32 0.0, %v1350
        %v1352 = vpop.f32.mrb[0].mxu0
        %1353 = vmatprep.mubr.f32.mxu0 0.0
        %1354 = vmatmul.mubr.f32.gmra.mrb[0].mxu0 %v1179
        %v1355 = vpop.f32.mrb[0].mxu0
        %v1356 = vadd.f32 0.0, %v1355
        %v1357 = vpop.f32.mrb[0].mxu0
        %1358 = vmatprep.mubr.f32.mxu0 0.0
        %1359 = vmatmul.mubr.f32.gmra.mrb[0].mxu0 %v1182
        %v1360 = vpop.f32.mrb[0].mxu0
        %v1361 = vadd.f32 0.0, %v1360
        %v1362 = vpop.f32.mrb[0].mxu0
        %1363 = vmatprep.mubr.f32.mxu0 0.0
        %1364 = vmatmul.mubr.f32.gmra.mrb[0].mxu0 %v1185
        %v1365 = vpop.f32.mrb[0].mxu0
        %v1366 = vadd.f32 0.0, %v1365
        %v1367 = vpop.f32.mrb[0].mxu0
        %1368 = vmatprep.mubr.f32.mxu0 0.0
        %1369 = vmatmul.mubr.f32.gmra.mrb[0].mxu0 %v1188
        %v1370 = vpop.f32.mrb[0].mxu0
        %v1371 = vadd.f32 0.0, %v1370
        %v1372 = vpop.f32.mrb[0].mxu0
        %1373 = vmatprep.mubr.f32.mxu0 0.0
        %1374 = vmatmul.mubr.f32.gmra.mrb[0].mxu0 %v1191
        %v1375 = vpop.f32.mrb[0].mxu0
        %v1376 = vadd.f32 0.0, %v1375
        %v1377 = vpop.f32.mrb[0].mxu0
        %1378 = vmatprep.mubr.f32.mxu0 0.0
        %1379 = vmatmul.mubr.f32.gmra.mrb[0].mxu0 %v1194
        %v1380 = vpop.f32.mrb[0].mxu0
        %v1381 = vadd.f32 0.0, %v1380
        %v1382 = vpop.f32.mrb[0].mxu0
        %1383 = vmatprep.mubr.f32.mxu0 0.0
        %1384 = vmatmul.mubr.f32.gmra.mrb[0].mxu0 %v1197
        %v1385 = vpop.f32.mrb[0].mxu0
        %v1386 = vadd.f32 0.0, %v1385
        %v1387 = vpop.f32.mrb[0].mxu0
        %1388 = vmatprep.mubr.f32.mxu0 0.0
        %1389 = vmatmul.mubr.f32.gmra.mrb[0].mxu0 %v1200
        %v1390 = vpop.f32.mrb[0].mxu0
        %v1391 = vadd.f32 0.0, %v1390
        %v1392 = vpop.f32.mrb[0].mxu0
        %1393 = vmatprep.mubr.f32.mxu0 0.0
        %1394 = vmatmul.mubr.f32.gmra.mrb[0].mxu0 %v1203
        %v1395 = vpop.f32.mrb[0].mxu0
        %v1396 = vadd.f32 0.0, %v1395
        %v1397 = vpop.f32.mrb[0].mxu0
        %1398 = vmatprep.mubr.f32.mxu0 0.0
        %1399 = vmatmul.mubr.f32.gmra.mrb[0].mxu0 %v1206
        %v1400 = vpop.f32.mrb[0].mxu0
        %v1401 = vadd.f32 0.0, %v1400
        %v1402 = vpop.f32.mrb[0].mxu0
        %1403 = vmatprep.mubr.f32.mxu0 0.0
        %1404 = vmatmul.mubr.f32.gmra.mrb[0].mxu0 %v1209
        %v1405 = vpop.f32.mrb[0].mxu0
        %v1406 = vadd.f32 0.0, %v1405
        %v1407 = vpop.f32.mrb[0].mxu0
        %1408 = vmatprep.mubr.f32.mxu0 0.0
        %1409 = vmatmul.mubr.f32.gmra.mrb[0].mxu0 %v1212
        %v1410 = vpop.f32.mrb[0].mxu0
        %v1411 = vadd.f32 0.0, %v1410
        %v1412 = vpop.f32.mrb[0].mxu0
        %1413 = vmatprep.mubr.f32.mxu0 0.0
        %1414 = vmatmul.mubr.f32.gmra.mrb[0].mxu0 %v1215
        %v1415 = vpop.f32.mrb[0].mxu0
        %v1416 = vadd.f32 0.0, %v1415
        %v1417 = vpop.f32.mrb[0].mxu0
        %1418 = vmatprep.mubr.f32.mxu0 0.0
        %1419 = vmatmul.mubr.f32.gmra.mrb[0].mxu0 %v1218
        %v1420 = vpop.f32.mrb[0].mxu0
        %v1421 = vadd.f32 0.0, %v1420
        %v1422 = vpop.f32.mrb[0].mxu0
        %1423 = vmatprep.mubr.f32.mxu0 0.0
        %1424 = vmatmul.mubr.f32.gmra.mrb[0].mxu0 %v1221
        %v1425 = vpop.f32.mrb[0].mxu0
        %v1426 = vadd.f32 0.0, %v1425
        %v1427 = vpop.f32.mrb[0].mxu0
        %1428 = vmatprep.mubr.f32.mxu0 0.0
        %1429 = vmatmul.mubr.f32.gmra.mrb[0].mxu0 %v1224
        %v1430 = vpop.f32.mrb[0].mxu0
        %v1431 = vadd.f32 0.0, %v1430
        %v1432 = vpop.f32.mrb[0].mxu0
        %1433 = vmatprep.mubr.f32.mxu0 0.0
        %1434 = vmatmul.mubr.f32.gmra.mrb[0].mxu0 %v1227
        %v1435 = vpop.f32.mrb[0].mxu0
        %v1436 = vadd.f32 0.0, %v1435
        %v1437 = vpop.f32.mrb[0].mxu0
        %1438 = vmatprep.mubr.f32.mxu0 0.0
        %1439 = vmatmul.mubr.f32.gmra.mrb[0].mxu0 %v1230
        %v1440 = vpop.f32.mrb[0].mxu0
        %v1441 = vadd.f32 0.0, %v1440
        %v1442 = vpop.f32.mrb[0].mxu0
        %1443 = vmatprep.mubr.f32.mxu0 0.0
        %1444 = vmatmul.mubr.f32.gmra.mrb[0].mxu0 %v1233
        %v1445 = vpop.f32.mrb[0].mxu0
        %v1446 = vadd.f32 0.0, %v1445
        %v1447 = vpop.f32.mrb[0].mxu0
        %1448 = vmatprep.mubr.f32.mxu0 0.0
        %1449 = vmatmul.mubr.f32.gmra.mrb[0].mxu0 %v1236
        %v1450 = vpop.f32.mrb[0].mxu0
        %v1451 = vadd.f32 0.0, %v1450
        %v1452 = vpop.f32.mrb[0].mxu0
        %1453 = vmatprep.mubr.f32.mxu0 0.0
        %1454 = vmatmul.mubr.f32.gmra.mrb[0].mxu0 %v1239
        %v1455 = vpop.f32.mrb[0].mxu0
        %v1456 = vadd.f32 0.0, %v1455
        %v1457 = vpop.f32.mrb[0].mxu0
        %1458 = vmatprep.mubr.f32.mxu0 0.0
        %1459 = vmatmul.mubr.f32.gmra.mrb[0].mxu0 %v1242
        %v1460 = vpop.f32.mrb[0].mxu0
        %v1461 = vadd.f32 0.0, %v1460
        %v1462 = vpop.f32.mrb[0].mxu0
        %1463 = vmatprep.mubr.f32.mxu0 0.0
        %1464 = vmatmul.mubr.f32.gmra.mrb[0].mxu0 %v1245
        %v1465 = vpop.f32.mrb[0].mxu0
        %v1466 = vadd.f32 0.0, %v1465
        %v1467 = vpop.f32.mrb[0].mxu0
        %1468 = vmatprep.mubr.f32.mxu0 0.0
        %1469 = vmatmul.mubr.f32.gmra.mrb[0].mxu0 %v1248
        %v1470 = vpop.f32.mrb[0].mxu0
        %v1471 = vadd.f32 0.0, %v1470
        %v1472 = vpop.f32.mrb[0].mxu0
        %1473 = vmatprep.mubr.f32.mxu0 0.0
        %1474 = vmatmul.mubr.f32.gmra.mrb[0].mxu0 %v1251
        %v1475 = vpop.f32.mrb[0].mxu0
        %v1476 = vadd.f32 0.0, %v1475
        %v1477 = vpop.f32.mrb[0].mxu0
        %1478 = vmatprep.mubr.f32.mxu0 0.0
        %1479 = vmatmul.mubr.f32.gmra.mrb[0].mxu0 %v1254
        %v1480 = vpop.f32.mrb[0].mxu0
        %v1481 = vadd.f32 0.0, %v1480
        %v1482 = vpop.f32.mrb[0].mxu0
        %1483 = vdwg.mxu0
        %v1484 = vadd.f32 %v1000, %v1326
        %v1485 = vadd.f32 %v1005, %v1331
        %v1486 = vadd.f32 %v1010, %v1336
        %v1487 = vadd.f32 %v1015, %v1341
        %v1488 = vadd.f32 %v1020, %v1346
        %v1489 = vadd.f32 %v1025, %v1351
        %v1490 = vadd.f32 %v1030, %v1356
        %v1491 = vadd.f32 %v1035, %v1361
        %v1492 = vadd.f32 %v1040, %v1366
        %v1493 = vadd.f32 %v1045, %v1371
        %v1494 = vadd.f32 %v1050, %v1376
        %v1495 = vadd.f32 %v1055, %v1381
        %v1496 = vadd.f32 %v1060, %v1386
        %v1497 = vadd.f32 %v1065, %v1391
        %v1498 = vadd.f32 %v1070, %v1396
        %v1499 = vadd.f32 %v1075, %v1401
        %v1500 = vadd.f32 %v1080, %v1406
        %v1501 = vadd.f32 %v1085, %v1411
        %v1502 = vadd.f32 %v1090, %v1416
        %v1503 = vadd.f32 %v1095, %v1421
        %v1504 = vadd.f32 %v1100, %v1426
        %v1505 = vadd.f32 %v1105, %v1431
        %v1506 = vadd.f32 %v1110, %v1436
        %v1507 = vadd.f32 %v1115, %v1441
        %v1508 = vadd.f32 %v1120, %v1446
        %v1509 = vadd.f32 %v1125, %v1451
        %v1510 = vadd.f32 %v1130, %v1456
        %v1511 = vadd.f32 %v1135, %v1461
        %v1512 = vadd.f32 %v1140, %v1466
        %v1513 = vadd.f32 %v1145, %v1471
        %v1514 = vadd.f32 %v1150, %v1476
        %v1515 = vadd.f32 %v1155, %v1481
        %s1516 = scalar_lea.vmem %s1, 12
        %v1517 = vld [vmem:[%s1516] sm:$0xf]
        %v1519 = vsel %vm508, %v298, 0
        %v1522 = vsel %vm508, %v299, 0
        %v1525 = vsel %vm508, %v300, 0
        %v1528 = vsel %vm508, %v301, 0
        %v1531 = vsel %vm508, %v302, 0
        %v1534 = vsel %vm508, %v303, 0
        %v1537 = vsel %vm508, %v304, 0
        %v1540 = vsel %vm508, %v305, 0
        %v1543 = vsel %vm508, %v306, 0
        %v1546 = vsel %vm508, %v307, 0
        %v1549 = vsel %vm508, %v308, 0
        %v1552 = vsel %vm508, %v309, 0
        %v1555 = vsel %vm508, %v310, 0
        %v1558 = vsel %vm508, %v311, 0
        %v1561 = vsel %vm508, %v312, 0
        %v1564 = vsel %vm508, %v313, 0
        %v1567 = vsel %vm508, %v314, 0
        %v1570 = vsel %vm508, %v315, 0
        %v1573 = vsel %vm508, %v316, 0
        %v1576 = vsel %vm508, %v317, 0
        %v1579 = vsel %vm508, %v318, 0
        %v1582 = vsel %vm508, %v319, 0
        %v1585 = vsel %vm508, %v320, 0
        %v1588 = vsel %vm508, %v321, 0
        %v1591 = vsel %vm508, %v322, 0
        %v1594 = vsel %vm508, %v323, 0
        %v1597 = vsel %vm508, %v324, 0
        %v1600 = vsel %vm508, %v325, 0
        %v1603 = vsel %vm508, %v326, 0
        %v1606 = vsel %vm508, %v327, 0
        %v1609 = vsel %vm508, %v328, 0
        %v1612 = vsel %vm508, %v329, 0
        %v1615 = vsel %vm605, %v1517, 0
        %1617 = vmatprep.subr.mxu0 0.0
        %1618 = vmatpush1.msra.mxu0 %v1615
        %1619 = vmatprep.subr.mxu0 0.0
        %1620 = vmatpush1.msra.mxu0 0.0
        %1621 = vmatprep.subr.mxu0 0.0
        %1622 = vmatpush1.msra.mxu0 0.0
        %1623 = vmatprep.subr.mxu0 0.0
        %1624 = vmatpush1.msra.mxu0 0.0
        %1625 = vmatprep.subr.mxu0 0.0
        %1626 = vmatpush1.msra.mxu0 0.0
        %1627 = vmatprep.subr.mxu0 0.0
        %1628 = vmatpush1.msra.mxu0 0.0
        %1629 = vmatprep.subr.mxu0 0.0
        %1630 = vmatpush1.msra.mxu0 0.0
        %1631 = vmatprep.subr.mxu0 0.0
        %1632 = vmatpush1.msra.mxu0 0.0
        %1633 = vmatprep.subr.mxu0 0.0
        %1634 = vmatpush1.msra.mxu0 0.0
        %1635 = vmatprep.subr.mxu0 0.0
        %1636 = vmatpush1.msra.mxu0 0.0
        %1637 = vmatprep.subr.mxu0 0.0
        %1638 = vmatpush1.msra.mxu0 0.0
        %1639 = vmatprep.subr.mxu0 0.0
        %1640 = vmatpush1.msra.mxu0 0.0
        %1641 = vmatprep.subr.mxu0 0.0
        %1642 = vmatpush1.msra.mxu0 0.0
        %1643 = vmatprep.subr.mxu0 0.0
        %1644 = vmatpush1.msra.mxu0 0.0
        %1645 = vmatprep.subr.mxu0 0.0
        %1646 = vmatpush1.msra.mxu0 0.0
        %1647 = vmatprep.subr.mxu0 0.0
        %1648 = vmatpush1.msra.mxu0 0.0
        %1649 = vmatprep.subr.mxu0 0.0
        %1650 = vmatpush1.msra.mxu0 0.0
        %1651 = vmatprep.subr.mxu0 0.0
        %1652 = vmatpush1.msra.mxu0 0.0
        %1653 = vmatprep.subr.mxu0 0.0
        %1654 = vmatpush1.msra.mxu0 0.0
        %1655 = vmatprep.subr.mxu0 0.0
        %1656 = vmatpush1.msra.mxu0 0.0
        %1657 = vmatprep.subr.mxu0 0.0
        %1658 = vmatpush1.msra.mxu0 0.0
        %1659 = vmatprep.subr.mxu0 0.0
        %1660 = vmatpush1.msra.mxu0 0.0
        %1661 = vmatprep.subr.mxu0 0.0
        %1662 = vmatpush1.msra.mxu0 0.0
        %1663 = vmatprep.subr.mxu0 0.0
        %1664 = vmatpush1.msra.mxu0 0.0
        %1665 = vmatprep.subr.mxu0 0.0
        %1666 = vmatpush1.msra.mxu0 0.0
        %1667 = vmatprep.subr.mxu0 0.0
        %1668 = vmatpush1.msra.mxu0 0.0
        %1669 = vmatprep.subr.mxu0 0.0
        %1670 = vmatpush1.msra.mxu0 0.0
        %1671 = vmatprep.subr.mxu0 0.0
        %1672 = vmatpush1.msra.mxu0 0.0
        %1673 = vmatprep.subr.mxu0 0.0
        %1674 = vmatpush1.msra.mxu0 0.0
        %1675 = vmatprep.subr.mxu0 0.0
        %1676 = vmatpush1.msra.mxu0 0.0
        %1677 = vmatprep.subr.mxu0 0.0
        %1678 = vmatpush1.msra.mxu0 0.0
        %1679 = vmatprep.subr.mxu0 0.0
        %1680 = vmatpush1.msra.mxu0 0.0
        %1681 = vmatprep.mubr.f32.mxu0 0.0
        %1682 = vmatmul.mubr.f32.gmra.mrb[0].mxu0 %v1519
        %v1683 = vpop.f32.mrb[0].mxu0
        %v1684 = vadd.f32 0.0, %v1683
        %v1685 = vpop.f32.mrb[0].mxu0
        %1686 = vmatprep.mubr.f32.mxu0 0.0
        %1687 = vmatmul.mubr.f32.gmra.mrb[0].mxu0 %v1522
        %v1688 = vpop.f32.mrb[0].mxu0
        %v1689 = vadd.f32 0.0, %v1688
        %v1690 = vpop.f32.mrb[0].mxu0
        %1691 = vmatprep.mubr.f32.mxu0 0.0
        %1692 = vmatmul.mubr.f32.gmra.mrb[0].mxu0 %v1525
        %v1693 = vpop.f32.mrb[0].mxu0
        %v1694 = vadd.f32 0.0, %v1693
        %v1695 = vpop.f32.mrb[0].mxu0
        %1696 = vmatprep.mubr.f32.mxu0 0.0
        %1697 = vmatmul.mubr.f32.gmra.mrb[0].mxu0 %v1528
        %v1698 = vpop.f32.mrb[0].mxu0
        %v1699 = vadd.f32 0.0, %v1698
        %v1700 = vpop.f32.mrb[0].mxu0
        %1701 = vmatprep.mubr.f32.mxu0 0.0
        %1702 = vmatmul.mubr.f32.gmra.mrb[0].mxu0 %v1531
        %v1703 = vpop.f32.mrb[0].mxu0
        %v1704 = vadd.f32 0.0, %v1703
        %v1705 = vpop.f32.mrb[0].mxu0
        %1706 = vmatprep.mubr.f32.mxu0 0.0
        %1707 = vmatmul.mubr.f32.gmra.mrb[0].mxu0 %v1534
        %v1708 = vpop.f32.mrb[0].mxu0
        %v1709 = vadd.f32 0.0, %v1708
        %v1710 = vpop.f32.mrb[0].mxu0
        %1711 = vmatprep.mubr.f32.mxu0 0.0
        %1712 = vmatmul.mubr.f32.gmra.mrb[0].mxu0 %v1537
        %v1713 = vpop.f32.mrb[0].mxu0
        %v1714 = vadd.f32 0.0, %v1713
        %v1715 = vpop.f32.mrb[0].mxu0
        %1716 = vmatprep.mubr.f32.mxu0 0.0
        %1717 = vmatmul.mubr.f32.gmra.mrb[0].mxu0 %v1540
        %v1718 = vpop.f32.mrb[0].mxu0
        %v1719 = vadd.f32 0.0, %v1718
        %v1720 = vpop.f32.mrb[0].mxu0
        %1721 = vmatprep.mubr.f32.mxu0 0.0
        %1722 = vmatmul.mubr.f32.gmra.mrb[0].mxu0 %v1543
        %v1723 = vpop.f32.mrb[0].mxu0
        %v1724 = vadd.f32 0.0, %v1723
        %v1725 = vpop.f32.mrb[0].mxu0
        %1726 = vmatprep.mubr.f32.mxu0 0.0
        %1727 = vmatmul.mubr.f32.gmra.mrb[0].mxu0 %v1546
        %v1728 = vpop.f32.mrb[0].mxu0
        %v1729 = vadd.f32 0.0, %v1728
        %v1730 = vpop.f32.mrb[0].mxu0
        %1731 = vmatprep.mubr.f32.mxu0 0.0
        %1732 = vmatmul.mubr.f32.gmra.mrb[0].mxu0 %v1549
        %v1733 = vpop.f32.mrb[0].mxu0
        %v1734 = vadd.f32 0.0, %v1733
        %v1735 = vpop.f32.mrb[0].mxu0
        %1736 = vmatprep.mubr.f32.mxu0 0.0
        %1737 = vmatmul.mubr.f32.gmra.mrb[0].mxu0 %v1552
        %v1738 = vpop.f32.mrb[0].mxu0
        %v1739 = vadd.f32 0.0, %v1738
        %v1740 = vpop.f32.mrb[0].mxu0
        %1741 = vmatprep.mubr.f32.mxu0 0.0
        %1742 = vmatmul.mubr.f32.gmra.mrb[0].mxu0 %v1555
        %v1743 = vpop.f32.mrb[0].mxu0
        %v1744 = vadd.f32 0.0, %v1743
        %v1745 = vpop.f32.mrb[0].mxu0
        %1746 = vmatprep.mubr.f32.mxu0 0.0
        %1747 = vmatmul.mubr.f32.gmra.mrb[0].mxu0 %v1558
        %v1748 = vpop.f32.mrb[0].mxu0
        %v1749 = vadd.f32 0.0, %v1748
        %v1750 = vpop.f32.mrb[0].mxu0
        %1751 = vmatprep.mubr.f32.mxu0 0.0
        %1752 = vmatmul.mubr.f32.gmra.mrb[0].mxu0 %v1561
        %v1753 = vpop.f32.mrb[0].mxu0
        %v1754 = vadd.f32 0.0, %v1753
        %v1755 = vpop.f32.mrb[0].mxu0
        %1756 = vmatprep.mubr.f32.mxu0 0.0
        %1757 = vmatmul.mubr.f32.gmra.mrb[0].mxu0 %v1564
        %v1758 = vpop.f32.mrb[0].mxu0
        %v1759 = vadd.f32 0.0, %v1758
        %v1760 = vpop.f32.mrb[0].mxu0
        %1761 = vmatprep.mubr.f32.mxu0 0.0
        %1762 = vmatmul.mubr.f32.gmra.mrb[0].mxu0 %v1567
        %v1763 = vpop.f32.mrb[0].mxu0
        %v1764 = vadd.f32 0.0, %v1763
        %v1765 = vpop.f32.mrb[0].mxu0
        %1766 = vmatprep.mubr.f32.mxu0 0.0
        %1767 = vmatmul.mubr.f32.gmra.mrb[0].mxu0 %v1570
        %v1768 = vpop.f32.mrb[0].mxu0
        %v1769 = vadd.f32 0.0, %v1768
        %v1770 = vpop.f32.mrb[0].mxu0
        %1771 = vmatprep.mubr.f32.mxu0 0.0
        %1772 = vmatmul.mubr.f32.gmra.mrb[0].mxu0 %v1573
        %v1773 = vpop.f32.mrb[0].mxu0
        %v1774 = vadd.f32 0.0, %v1773
        %v1775 = vpop.f32.mrb[0].mxu0
        %1776 = vmatprep.mubr.f32.mxu0 0.0
        %1777 = vmatmul.mubr.f32.gmra.mrb[0].mxu0 %v1576
        %v1778 = vpop.f32.mrb[0].mxu0
        %v1779 = vadd.f32 0.0, %v1778
        %v1780 = vpop.f32.mrb[0].mxu0
        %1781 = vmatprep.mubr.f32.mxu0 0.0
        %1782 = vmatmul.mubr.f32.gmra.mrb[0].mxu0 %v1579
        %v1783 = vpop.f32.mrb[0].mxu0
        %v1784 = vadd.f32 0.0, %v1783
        %v1785 = vpop.f32.mrb[0].mxu0
        %1786 = vmatprep.mubr.f32.mxu0 0.0
        %1787 = vmatmul.mubr.f32.gmra.mrb[0].mxu0 %v1582
        %v1788 = vpop.f32.mrb[0].mxu0
        %v1789 = vadd.f32 0.0, %v1788
        %v1790 = vpop.f32.mrb[0].mxu0
        %1791 = vmatprep.mubr.f32.mxu0 0.0
        %1792 = vmatmul.mubr.f32.gmra.mrb[0].mxu0 %v1585
        %v1793 = vpop.f32.mrb[0].mxu0
        %v1794 = vadd.f32 0.0, %v1793
        %v1795 = vpop.f32.mrb[0].mxu0
        %1796 = vmatprep.mubr.f32.mxu0 0.0
        %1797 = vmatmul.mubr.f32.gmra.mrb[0].mxu0 %v1588
        %v1798 = vpop.f32.mrb[0].mxu0
        %v1799 = vadd.f32 0.0, %v1798
        %v1800 = vpop.f32.mrb[0].mxu0
        %1801 = vmatprep.mubr.f32.mxu0 0.0
        %1802 = vmatmul.mubr.f32.gmra.mrb[0].mxu0 %v1591
        %v1803 = vpop.f32.mrb[0].mxu0
        %v1804 = vadd.f32 0.0, %v1803
        %v1805 = vpop.f32.mrb[0].mxu0
        %1806 = vmatprep.mubr.f32.mxu0 0.0
        %1807 = vmatmul.mubr.f32.gmra.mrb[0].mxu0 %v1594
        %v1808 = vpop.f32.mrb[0].mxu0
        %v1809 = vadd.f32 0.0, %v1808
        %v1810 = vpop.f32.mrb[0].mxu0
        %1811 = vmatprep.mubr.f32.mxu0 0.0
        %1812 = vmatmul.mubr.f32.gmra.mrb[0].mxu0 %v1597
        %v1813 = vpop.f32.mrb[0].mxu0
        %v1814 = vadd.f32 0.0, %v1813
        %v1815 = vpop.f32.mrb[0].mxu0
        %1816 = vmatprep.mubr.f32.mxu0 0.0
        %1817 = vmatmul.mubr.f32.gmra.mrb[0].mxu0 %v1600
        %v1818 = vpop.f32.mrb[0].mxu0
        %v1819 = vadd.f32 0.0, %v1818
        %v1820 = vpop.f32.mrb[0].mxu0
        %1821 = vmatprep.mubr.f32.mxu0 0.0
        %1822 = vmatmul.mubr.f32.gmra.mrb[0].mxu0 %v1603
        %v1823 = vpop.f32.mrb[0].mxu0
        %v1824 = vadd.f32 0.0, %v1823
        %v1825 = vpop.f32.mrb[0].mxu0
        %1826 = vmatprep.mubr.f32.mxu0 0.0
        %1827 = vmatmul.mubr.f32.gmra.mrb[0].mxu0 %v1606
        %v1828 = vpop.f32.mrb[0].mxu0
        %v1829 = vadd.f32 0.0, %v1828
        %v1830 = vpop.f32.mrb[0].mxu0
        %1831 = vmatprep.mubr.f32.mxu0 0.0
        %1832 = vmatmul.mubr.f32.gmra.mrb[0].mxu0 %v1609
        %v1833 = vpop.f32.mrb[0].mxu0
        %v1834 = vadd.f32 0.0, %v1833
        %v1835 = vpop.f32.mrb[0].mxu0
        %1836 = vmatprep.mubr.f32.mxu0 0.0
        %1837 = vmatmul.mubr.f32.gmra.mrb[0].mxu0 %v1612
        %v1838 = vpop.f32.mrb[0].mxu0
        %v1839 = vadd.f32 0.0, %v1838
        %v1840 = vpop.f32.mrb[0].mxu0
        %1841 = vdwg.mxu0
        %v1842 = vadd.f32 %v1484, %v1684
        %v1843 = vadd.f32 %v1485, %v1689
        %v1844 = vadd.f32 %v1486, %v1694
        %v1845 = vadd.f32 %v1487, %v1699
        %v1846 = vadd.f32 %v1488, %v1704
        %v1847 = vadd.f32 %v1489, %v1709
        %v1848 = vadd.f32 %v1490, %v1714
        %v1849 = vadd.f32 %v1491, %v1719
        %v1850 = vadd.f32 %v1492, %v1724
        %v1851 = vadd.f32 %v1493, %v1729
        %v1852 = vadd.f32 %v1494, %v1734
        %v1853 = vadd.f32 %v1495, %v1739
        %v1854 = vadd.f32 %v1496, %v1744
        %v1855 = vadd.f32 %v1497, %v1749
        %v1856 = vadd.f32 %v1498, %v1754
        %v1857 = vadd.f32 %v1499, %v1759
        %v1858 = vadd.f32 %v1500, %v1764
        %v1859 = vadd.f32 %v1501, %v1769
        %v1860 = vadd.f32 %v1502, %v1774
        %v1861 = vadd.f32 %v1503, %v1779
        %v1862 = vadd.f32 %v1504, %v1784
        %v1863 = vadd.f32 %v1505, %v1789
        %v1864 = vadd.f32 %v1506, %v1794
        %v1865 = vadd.f32 %v1507, %v1799
        %v1866 = vadd.f32 %v1508, %v1804
        %v1867 = vadd.f32 %v1509, %v1809
        %v1868 = vadd.f32 %v1510, %v1814
        %v1869 = vadd.f32 %v1511, %v1819
        %v1870 = vadd.f32 %v1512, %v1824
        %v1871 = vadd.f32 %v1513, %v1829
        %v1872 = vadd.f32 %v1514, %v1834
        %v1873 = vadd.f32 %v1515, %v1839
        %s1874 = scalar_lea.vmem %s1, 16
        %v1875 = vld [vmem:[%s1874] sm:$0xf]
        %v1877 = vsel %vm508, %v333, 0
        %v1880 = vsel %vm508, %v334, 0
        %v1883 = vsel %vm508, %v335, 0
        %v1886 = vsel %vm508, %v336, 0
        %v1889 = vsel %vm508, %v337, 0
        %v1892 = vsel %vm508, %v338, 0
        %v1895 = vsel %vm508, %v339, 0
        %v1898 = vsel %vm508, %v340, 0
        %v1901 = vsel %vm508, %v341, 0
        %v1904 = vsel %vm508, %v342, 0
        %v1907 = vsel %vm508, %v343, 0
        %v1910 = vsel %vm508, %v344, 0
        %v1913 = vsel %vm508, %v345, 0
        %v1916 = vsel %vm508, %v346, 0
        %v1919 = vsel %vm508, %v347, 0
        %v1922 = vsel %vm508, %v348, 0
        %v1925 = vsel %vm508, %v349, 0
        %v1928 = vsel %vm508, %v350, 0
        %v1931 = vsel %vm508, %v351, 0
        %v1934 = vsel %vm508, %v352, 0
        %v1937 = vsel %vm508, %v353, 0
        %v1940 = vsel %vm508, %v354, 0
        %v1943 = vsel %vm508, %v355, 0
        %v1946 = vsel %vm508, %v356, 0
        %v1949 = vsel %vm508, %v357, 0
        %v1952 = vsel %vm508, %v358, 0
        %v1955 = vsel %vm508, %v359, 0
        %v1958 = vsel %vm508, %v360, 0
        %v1961 = vsel %vm508, %v361, 0
        %v1964 = vsel %vm508, %v362, 0
        %v1967 = vsel %vm508, %v363, 0
        %v1970 = vsel %vm508, %v364, 0
        %v1973 = vsel %vm605, %v1875, 0
        %1975 = vmatprep.subr.mxu0 0.0
        %1976 = vmatpush1.msra.mxu0 %v1973
        %1977 = vmatprep.subr.mxu0 0.0
        %1978 = vmatpush1.msra.mxu0 0.0
        %1979 = vmatprep.subr.mxu0 0.0
        %1980 = vmatpush1.msra.mxu0 0.0
        %1981 = vmatprep.subr.mxu0 0.0
        %1982 = vmatpush1.msra.mxu0 0.0
        %1983 = vmatprep.subr.mxu0 0.0
        %1984 = vmatpush1.msra.mxu0 0.0
        %1985 = vmatprep.subr.mxu0 0.0
        %1986 = vmatpush1.msra.mxu0 0.0
        %1987 = vmatprep.subr.mxu0 0.0
        %1988 = vmatpush1.msra.mxu0 0.0
        %1989 = vmatprep.subr.mxu0 0.0
        %1990 = vmatpush1.msra.mxu0 0.0
        %1991 = vmatprep.subr.mxu0 0.0
        %1992 = vmatpush1.msra.mxu0 0.0
        %1993 = vmatprep.subr.mxu0 0.0
        %1994 = vmatpush1.msra.mxu0 0.0
        %1995 = vmatprep.subr.mxu0 0.0
        %1996 = vmatpush1.msra.mxu0 0.0
        %1997 = vmatprep.subr.mxu0 0.0
        %1998 = vmatpush1.msra.mxu0 0.0
        %1999 = vmatprep.subr.mxu0 0.0
        %2000 = vmatpush1.msra.mxu0 0.0
        %2001 = vmatprep.subr.mxu0 0.0
        %2002 = vmatpush1.msra.mxu0 0.0
        %2003 = vmatprep.subr.mxu0 0.0
        %2004 = vmatpush1.msra.mxu0 0.0
        %2005 = vmatprep.subr.mxu0 0.0
        %2006 = vmatpush1.msra.mxu0 0.0
        %2007 = vmatprep.subr.mxu0 0.0
        %2008 = vmatpush1.msra.mxu0 0.0
        %2009 = vmatprep.subr.mxu0 0.0
        %2010 = vmatpush1.msra.mxu0 0.0
        %2011 = vmatprep.subr.mxu0 0.0
        %2012 = vmatpush1.msra.mxu0 0.0
        %2013 = vmatprep.subr.mxu0 0.0
        %2014 = vmatpush1.msra.mxu0 0.0
        %2015 = vmatprep.subr.mxu0 0.0
        %2016 = vmatpush1.msra.mxu0 0.0
        %2017 = vmatprep.subr.mxu0 0.0
        %2018 = vmatpush1.msra.mxu0 0.0
        %2019 = vmatprep.subr.mxu0 0.0
        %2020 = vmatpush1.msra.mxu0 0.0
        %2021 = vmatprep.subr.mxu0 0.0
        %2022 = vmatpush1.msra.mxu0 0.0
        %2023 = vmatprep.subr.mxu0 0.0
        %2024 = vmatpush1.msra.mxu0 0.0
        %2025 = vmatprep.subr.mxu0 0.0
        %2026 = vmatpush1.msra.mxu0 0.0
        %2027 = vmatprep.subr.mxu0 0.0
        %2028 = vmatpush1.msra.mxu0 0.0
        %2029 = vmatprep.subr.mxu0 0.0
        %2030 = vmatpush1.msra.mxu0 0.0
        %2031 = vmatprep.subr.mxu0 0.0
        %2032 = vmatpush1.msra.mxu0 0.0
        %2033 = vmatprep.subr.mxu0 0.0
        %2034 = vmatpush1.msra.mxu0 0.0
        %2035 = vmatprep.subr.mxu0 0.0
        %2036 = vmatpush1.msra.mxu0 0.0
        %2037 = vmatprep.subr.mxu0 0.0
        %2038 = vmatpush1.msra.mxu0 0.0
        %2039 = vmatprep.mubr.f32.mxu0 0.0
        %2040 = vmatmul.mubr.f32.gmra.mrb[0].mxu0 %v1877
        %v2041 = vpop.f32.mrb[0].mxu0
        %v2042 = vadd.f32 0.0, %v2041
        %v2043 = vpop.f32.mrb[0].mxu0
        %2044 = vmatprep.mubr.f32.mxu0 0.0
        %2045 = vmatmul.mubr.f32.gmra.mrb[0].mxu0 %v1880
        %v2046 = vpop.f32.mrb[0].mxu0
        %v2047 = vadd.f32 0.0, %v2046
        %v2048 = vpop.f32.mrb[0].mxu0
        %2049 = vmatprep.mubr.f32.mxu0 0.0
        %2050 = vmatmul.mubr.f32.gmra.mrb[0].mxu0 %v1883
        %v2051 = vpop.f32.mrb[0].mxu0
        %v2052 = vadd.f32 0.0, %v2051
        %v2053 = vpop.f32.mrb[0].mxu0
        %2054 = vmatprep.mubr.f32.mxu0 0.0
        %2055 = vmatmul.mubr.f32.gmra.mrb[0].mxu0 %v1886
        %v2056 = vpop.f32.mrb[0].mxu0
        %v2057 = vadd.f32 0.0, %v2056
        %v2058 = vpop.f32.mrb[0].mxu0
        %2059 = vmatprep.mubr.f32.mxu0 0.0
        %2060 = vmatmul.mubr.f32.gmra.mrb[0].mxu0 %v1889
        %v2061 = vpop.f32.mrb[0].mxu0
        %v2062 = vadd.f32 0.0, %v2061
        %v2063 = vpop.f32.mrb[0].mxu0
        %2064 = vmatprep.mubr.f32.mxu0 0.0
        %2065 = vmatmul.mubr.f32.gmra.mrb[0].mxu0 %v1892
        %v2066 = vpop.f32.mrb[0].mxu0
        %v2067 = vadd.f32 0.0, %v2066
        %v2068 = vpop.f32.mrb[0].mxu0
        %2069 = vmatprep.mubr.f32.mxu0 0.0
        %2070 = vmatmul.mubr.f32.gmra.mrb[0].mxu0 %v1895
        %v2071 = vpop.f32.mrb[0].mxu0
        %v2072 = vadd.f32 0.0, %v2071
        %v2073 = vpop.f32.mrb[0].mxu0
        %2074 = vmatprep.mubr.f32.mxu0 0.0
        %2075 = vmatmul.mubr.f32.gmra.mrb[0].mxu0 %v1898
        %v2076 = vpop.f32.mrb[0].mxu0
        %v2077 = vadd.f32 0.0, %v2076
        %v2078 = vpop.f32.mrb[0].mxu0
        %2079 = vmatprep.mubr.f32.mxu0 0.0
        %2080 = vmatmul.mubr.f32.gmra.mrb[0].mxu0 %v1901
        %v2081 = vpop.f32.mrb[0].mxu0
        %v2082 = vadd.f32 0.0, %v2081
        %v2083 = vpop.f32.mrb[0].mxu0
        %2084 = vmatprep.mubr.f32.mxu0 0.0
        %2085 = vmatmul.mubr.f32.gmra.mrb[0].mxu0 %v1904
        %v2086 = vpop.f32.mrb[0].mxu0
        %v2087 = vadd.f32 0.0, %v2086
        %v2088 = vpop.f32.mrb[0].mxu0
        %2089 = vmatprep.mubr.f32.mxu0 0.0
        %2090 = vmatmul.mubr.f32.gmra.mrb[0].mxu0 %v1907
        %v2091 = vpop.f32.mrb[0].mxu0
        %v2092 = vadd.f32 0.0, %v2091
        %v2093 = vpop.f32.mrb[0].mxu0
        %2094 = vmatprep.mubr.f32.mxu0 0.0
        %2095 = vmatmul.mubr.f32.gmra.mrb[0].mxu0 %v1910
        %v2096 = vpop.f32.mrb[0].mxu0
        %v2097 = vadd.f32 0.0, %v2096
        %v2098 = vpop.f32.mrb[0].mxu0
        %2099 = vmatprep.mubr.f32.mxu0 0.0
        %2100 = vmatmul.mubr.f32.gmra.mrb[0].mxu0 %v1913
        %v2101 = vpop.f32.mrb[0].mxu0
        %v2102 = vadd.f32 0.0, %v2101
        %v2103 = vpop.f32.mrb[0].mxu0
        %2104 = vmatprep.mubr.f32.mxu0 0.0
        %2105 = vmatmul.mubr.f32.gmra.mrb[0].mxu0 %v1916
        %v2106 = vpop.f32.mrb[0].mxu0
        %v2107 = vadd.f32 0.0, %v2106
        %v2108 = vpop.f32.mrb[0].mxu0
        %2109 = vmatprep.mubr.f32.mxu0 0.0
        %2110 = vmatmul.mubr.f32.gmra.mrb[0].mxu0 %v1919
        %v2111 = vpop.f32.mrb[0].mxu0
        %v2112 = vadd.f32 0.0, %v2111
        %v2113 = vpop.f32.mrb[0].mxu0
        %2114 = vmatprep.mubr.f32.mxu0 0.0
        %2115 = vmatmul.mubr.f32.gmra.mrb[0].mxu0 %v1922
        %v2116 = vpop.f32.mrb[0].mxu0
        %v2117 = vadd.f32 0.0, %v2116
        %v2118 = vpop.f32.mrb[0].mxu0
        %2119 = vmatprep.mubr.f32.mxu0 0.0
        %2120 = vmatmul.mubr.f32.gmra.mrb[0].mxu0 %v1925
        %v2121 = vpop.f32.mrb[0].mxu0
        %v2122 = vadd.f32 0.0, %v2121
        %v2123 = vpop.f32.mrb[0].mxu0
        %2124 = vmatprep.mubr.f32.mxu0 0.0
        %2125 = vmatmul.mubr.f32.gmra.mrb[0].mxu0 %v1928
        %v2126 = vpop.f32.mrb[0].mxu0
        %v2127 = vadd.f32 0.0, %v2126
        %v2128 = vpop.f32.mrb[0].mxu0
        %2129 = vmatprep.mubr.f32.mxu0 0.0
        %2130 = vmatmul.mubr.f32.gmra.mrb[0].mxu0 %v1931
        %v2131 = vpop.f32.mrb[0].mxu0
        %v2132 = vadd.f32 0.0, %v2131
        %v2133 = vpop.f32.mrb[0].mxu0
        %2134 = vmatprep.mubr.f32.mxu0 0.0
        %2135 = vmatmul.mubr.f32.gmra.mrb[0].mxu0 %v1934
        %v2136 = vpop.f32.mrb[0].mxu0
        %v2137 = vadd.f32 0.0, %v2136
        %v2138 = vpop.f32.mrb[0].mxu0
        %2139 = vmatprep.mubr.f32.mxu0 0.0
        %2140 = vmatmul.mubr.f32.gmra.mrb[0].mxu0 %v1937
        %v2141 = vpop.f32.mrb[0].mxu0
        %v2142 = vadd.f32 0.0, %v2141
        %v2143 = vpop.f32.mrb[0].mxu0
        %2144 = vmatprep.mubr.f32.mxu0 0.0
        %2145 = vmatmul.mubr.f32.gmra.mrb[0].mxu0 %v1940
        %v2146 = vpop.f32.mrb[0].mxu0
        %v2147 = vadd.f32 0.0, %v2146
        %v2148 = vpop.f32.mrb[0].mxu0
        %2149 = vmatprep.mubr.f32.mxu0 0.0
        %2150 = vmatmul.mubr.f32.gmra.mrb[0].mxu0 %v1943
        %v2151 = vpop.f32.mrb[0].mxu0
        %v2152 = vadd.f32 0.0, %v2151
        %v2153 = vpop.f32.mrb[0].mxu0
        %2154 = vmatprep.mubr.f32.mxu0 0.0
        %2155 = vmatmul.mubr.f32.gmra.mrb[0].mxu0 %v1946
        %v2156 = vpop.f32.mrb[0].mxu0
        %v2157 = vadd.f32 0.0, %v2156
        %v2158 = vpop.f32.mrb[0].mxu0
        %2159 = vmatprep.mubr.f32.mxu0 0.0
        %2160 = vmatmul.mubr.f32.gmra.mrb[0].mxu0 %v1949
        %v2161 = vpop.f32.mrb[0].mxu0
        %v2162 = vadd.f32 0.0, %v2161
        %v2163 = vpop.f32.mrb[0].mxu0
        %2164 = vmatprep.mubr.f32.mxu0 0.0
        %2165 = vmatmul.mubr.f32.gmra.mrb[0].mxu0 %v1952
        %v2166 = vpop.f32.mrb[0].mxu0
        %v2167 = vadd.f32 0.0, %v2166
        %v2168 = vpop.f32.mrb[0].mxu0
        %2169 = vmatprep.mubr.f32.mxu0 0.0
        %2170 = vmatmul.mubr.f32.gmra.mrb[0].mxu0 %v1955
        %v2171 = vpop.f32.mrb[0].mxu0
        %v2172 = vadd.f32 0.0, %v2171
        %v2173 = vpop.f32.mrb[0].mxu0
        %2174 = vmatprep.mubr.f32.mxu0 0.0
        %2175 = vmatmul.mubr.f32.gmra.mrb[0].mxu0 %v1958
        %v2176 = vpop.f32.mrb[0].mxu0
        %v2177 = vadd.f32 0.0, %v2176
        %v2178 = vpop.f32.mrb[0].mxu0
        %2179 = vmatprep.mubr.f32.mxu0 0.0
        %2180 = vmatmul.mubr.f32.gmra.mrb[0].mxu0 %v1961
        %v2181 = vpop.f32.mrb[0].mxu0
        %v2182 = vadd.f32 0.0, %v2181
        %v2183 = vpop.f32.mrb[0].mxu0
        %2184 = vmatprep.mubr.f32.mxu0 0.0
        %2185 = vmatmul.mubr.f32.gmra.mrb[0].mxu0 %v1964
        %v2186 = vpop.f32.mrb[0].mxu0
        %v2187 = vadd.f32 0.0, %v2186
        %v2188 = vpop.f32.mrb[0].mxu0
        %2189 = vmatprep.mubr.f32.mxu0 0.0
        %2190 = vmatmul.mubr.f32.gmra.mrb[0].mxu0 %v1967
        %v2191 = vpop.f32.mrb[0].mxu0
        %v2192 = vadd.f32 0.0, %v2191
        %v2193 = vpop.f32.mrb[0].mxu0
        %2194 = vmatprep.mubr.f32.mxu0 0.0
        %2195 = vmatmul.mubr.f32.gmra.mrb[0].mxu0 %v1970
        %v2196 = vpop.f32.mrb[0].mxu0
        %v2197 = vadd.f32 0.0, %v2196
        %v2198 = vpop.f32.mrb[0].mxu0
        %2199 = vdwg.mxu0
        %v2200 = vadd.f32 %v1842, %v2042
        %v2201 = vadd.f32 %v1843, %v2047
        %v2202 = vadd.f32 %v1844, %v2052
        %v2203 = vadd.f32 %v1845, %v2057
        %v2204 = vadd.f32 %v1846, %v2062
        %v2205 = vadd.f32 %v1847, %v2067
        %v2206 = vadd.f32 %v1848, %v2072
        %v2207 = vadd.f32 %v1849, %v2077
        %v2208 = vadd.f32 %v1850, %v2082
        %v2209 = vadd.f32 %v1851, %v2087
        %v2210 = vadd.f32 %v1852, %v2092
        %v2211 = vadd.f32 %v1853, %v2097
        %v2212 = vadd.f32 %v1854, %v2102
        %v2213 = vadd.f32 %v1855, %v2107
        %v2214 = vadd.f32 %v1856, %v2112
        %v2215 = vadd.f32 %v1857, %v2117
        %v2216 = vadd.f32 %v1858, %v2122
        %v2217 = vadd.f32 %v1859, %v2127
        %v2218 = vadd.f32 %v1860, %v2132
        %v2219 = vadd.f32 %v1861, %v2137
        %v2220 = vadd.f32 %v1862, %v2142
        %v2221 = vadd.f32 %v1863, %v2147
        %v2222 = vadd.f32 %v1864, %v2152
        %v2223 = vadd.f32 %v1865, %v2157
        %v2224 = vadd.f32 %v1866, %v2162
        %v2225 = vadd.f32 %v1867, %v2167
        %v2226 = vadd.f32 %v1868, %v2172
        %v2227 = vadd.f32 %v1869, %v2177
        %v2228 = vadd.f32 %v1870, %v2182
        %v2229 = vadd.f32 %v1871, %v2187
        %v2230 = vadd.f32 %v1872, %v2192
        %v2231 = vadd.f32 %v1873, %v2197
        %s2232 = scalar_lea.vmem %s1, 20
        %v2233 = vld [vmem:[%s2232] sm:$0xf]
        %v2235 = vsel %vm508, %v368, 0
        %v2238 = vsel %vm508, %v369, 0
        %v2241 = vsel %vm508, %v370, 0
        %v2244 = vsel %vm508, %v371, 0
        %v2247 = vsel %vm508, %v372, 0
        %v2250 = vsel %vm508, %v373, 0
        %v2253 = vsel %vm508, %v374, 0
        %v2256 = vsel %vm508, %v375, 0
        %v2259 = vsel %vm508, %v376, 0
        %v2262 = vsel %vm508, %v377, 0
        %v2265 = vsel %vm508, %v378, 0
        %v2268 = vsel %vm508, %v379, 0
        %v2271 = vsel %vm508, %v380, 0
        %v2274 = vsel %vm508, %v381, 0
        %v2277 = vsel %vm508, %v382, 0
        %v2280 = vsel %vm508, %v383, 0
        %v2283 = vsel %vm508, %v384, 0
        %v2286 = vsel %vm508, %v385, 0
        %v2289 = vsel %vm508, %v386, 0
        %v2292 = vsel %vm508, %v387, 0
        %v2295 = vsel %vm508, %v388, 0
        %v2298 = vsel %vm508, %v389, 0
        %v2301 = vsel %vm508, %v390, 0
        %v2304 = vsel %vm508, %v391, 0
        %v2307 = vsel %vm508, %v392, 0
        %v2310 = vsel %vm508, %v393, 0
        %v2313 = vsel %vm508, %v394, 0
        %v2316 = vsel %vm508, %v395, 0
        %v2319 = vsel %vm508, %v396, 0
        %v2322 = vsel %vm508, %v397, 0
        %v2325 = vsel %vm508, %v398, 0
        %v2328 = vsel %vm508, %v399, 0
        %v2331 = vsel %vm605, %v2233, 0
        %2333 = vmatprep.subr.mxu0 0.0
        %2334 = vmatpush1.msra.mxu0 %v2331
        %2335 = vmatprep.subr.mxu0 0.0
        %2336 = vmatpush1.msra.mxu0 0.0
        %2337 = vmatprep.subr.mxu0 0.0
        %2338 = vmatpush1.msra.mxu0 0.0
        %2339 = vmatprep.subr.mxu0 0.0
        %2340 = vmatpush1.msra.mxu0 0.0
        %2341 = vmatprep.subr.mxu0 0.0
        %2342 = vmatpush1.msra.mxu0 0.0
        %2343 = vmatprep.subr.mxu0 0.0
        %2344 = vmatpush1.msra.mxu0 0.0
        %2345 = vmatprep.subr.mxu0 0.0
        %2346 = vmatpush1.msra.mxu0 0.0
        %2347 = vmatprep.subr.mxu0 0.0
        %2348 = vmatpush1.msra.mxu0 0.0
        %2349 = vmatprep.subr.mxu0 0.0
        %2350 = vmatpush1.msra.mxu0 0.0
        %2351 = vmatprep.subr.mxu0 0.0
        %2352 = vmatpush1.msra.mxu0 0.0
        %2353 = vmatprep.subr.mxu0 0.0
        %2354 = vmatpush1.msra.mxu0 0.0
        %2355 = vmatprep.subr.mxu0 0.0
        %2356 = vmatpush1.msra.mxu0 0.0
        %2357 = vmatprep.subr.mxu0 0.0
        %2358 = vmatpush1.msra.mxu0 0.0
        %2359 = vmatprep.subr.mxu0 0.0
        %2360 = vmatpush1.msra.mxu0 0.0
        %2361 = vmatprep.subr.mxu0 0.0
        %2362 = vmatpush1.msra.mxu0 0.0
        %2363 = vmatprep.subr.mxu0 0.0
        %2364 = vmatpush1.msra.mxu0 0.0
        %2365 = vmatprep.subr.mxu0 0.0
        %2366 = vmatpush1.msra.mxu0 0.0
        %2367 = vmatprep.subr.mxu0 0.0
        %2368 = vmatpush1.msra.mxu0 0.0
        %2369 = vmatprep.subr.mxu0 0.0
        %2370 = vmatpush1.msra.mxu0 0.0
        %2371 = vmatprep.subr.mxu0 0.0
        %2372 = vmatpush1.msra.mxu0 0.0
        %2373 = vmatprep.subr.mxu0 0.0
        %2374 = vmatpush1.msra.mxu0 0.0
        %2375 = vmatprep.subr.mxu0 0.0
        %2376 = vmatpush1.msra.mxu0 0.0
        %2377 = vmatprep.subr.mxu0 0.0
        %2378 = vmatpush1.msra.mxu0 0.0
        %2379 = vmatprep.subr.mxu0 0.0
        %2380 = vmatpush1.msra.mxu0 0.0
        %2381 = vmatprep.subr.mxu0 0.0
        %2382 = vmatpush1.msra.mxu0 0.0
        %2383 = vmatprep.subr.mxu0 0.0
        %2384 = vmatpush1.msra.mxu0 0.0
        %2385 = vmatprep.subr.mxu0 0.0
        %2386 = vmatpush1.msra.mxu0 0.0
        %2387 = vmatprep.subr.mxu0 0.0
        %2388 = vmatpush1.msra.mxu0 0.0
        %2389 = vmatprep.subr.mxu0 0.0
        %2390 = vmatpush1.msra.mxu0 0.0
        %2391 = vmatprep.subr.mxu0 0.0
        %2392 = vmatpush1.msra.mxu0 0.0
        %2393 = vmatprep.subr.mxu0 0.0
        %2394 = vmatpush1.msra.mxu0 0.0
        %2395 = vmatprep.subr.mxu0 0.0
        %2396 = vmatpush1.msra.mxu0 0.0
        %2397 = vmatprep.mubr.f32.mxu0 0.0
        %2398 = vmatmul.mubr.f32.gmra.mrb[0].mxu0 %v2235
        %v2399 = vpop.f32.mrb[0].mxu0
        %v2400 = vadd.f32 0.0, %v2399
        %v2401 = vpop.f32.mrb[0].mxu0
        %2402 = vmatprep.mubr.f32.mxu0 0.0
        %2403 = vmatmul.mubr.f32.gmra.mrb[0].mxu0 %v2238
        %v2404 = vpop.f32.mrb[0].mxu0
        %v2405 = vadd.f32 0.0, %v2404
        %v2406 = vpop.f32.mrb[0].mxu0
        %2407 = vmatprep.mubr.f32.mxu0 0.0
        %2408 = vmatmul.mubr.f32.gmra.mrb[0].mxu0 %v2241
        %v2409 = vpop.f32.mrb[0].mxu0
        %v2410 = vadd.f32 0.0, %v2409
        %v2411 = vpop.f32.mrb[0].mxu0
        %2412 = vmatprep.mubr.f32.mxu0 0.0
        %2413 = vmatmul.mubr.f32.gmra.mrb[0].mxu0 %v2244
        %v2414 = vpop.f32.mrb[0].mxu0
        %v2415 = vadd.f32 0.0, %v2414
        %v2416 = vpop.f32.mrb[0].mxu0
        %2417 = vmatprep.mubr.f32.mxu0 0.0
        %2418 = vmatmul.mubr.f32.gmra.mrb[0].mxu0 %v2247
        %v2419 = vpop.f32.mrb[0].mxu0
        %v2420 = vadd.f32 0.0, %v2419
        %v2421 = vpop.f32.mrb[0].mxu0
        %2422 = vmatprep.mubr.f32.mxu0 0.0
        %2423 = vmatmul.mubr.f32.gmra.mrb[0].mxu0 %v2250
        %v2424 = vpop.f32.mrb[0].mxu0
        %v2425 = vadd.f32 0.0, %v2424
        %v2426 = vpop.f32.mrb[0].mxu0
        %2427 = vmatprep.mubr.f32.mxu0 0.0
        %2428 = vmatmul.mubr.f32.gmra.mrb[0].mxu0 %v2253
        %v2429 = vpop.f32.mrb[0].mxu0
        %v2430 = vadd.f32 0.0, %v2429
        %v2431 = vpop.f32.mrb[0].mxu0
        %2432 = vmatprep.mubr.f32.mxu0 0.0
        %2433 = vmatmul.mubr.f32.gmra.mrb[0].mxu0 %v2256
        %v2434 = vpop.f32.mrb[0].mxu0
        %v2435 = vadd.f32 0.0, %v2434
        %v2436 = vpop.f32.mrb[0].mxu0
        %2437 = vmatprep.mubr.f32.mxu0 0.0
        %2438 = vmatmul.mubr.f32.gmra.mrb[0].mxu0 %v2259
        %v2439 = vpop.f32.mrb[0].mxu0
        %v2440 = vadd.f32 0.0, %v2439
        %v2441 = vpop.f32.mrb[0].mxu0
        %2442 = vmatprep.mubr.f32.mxu0 0.0
        %2443 = vmatmul.mubr.f32.gmra.mrb[0].mxu0 %v2262
        %v2444 = vpop.f32.mrb[0].mxu0
        %v2445 = vadd.f32 0.0, %v2444
        %v2446 = vpop.f32.mrb[0].mxu0
        %2447 = vmatprep.mubr.f32.mxu0 0.0
        %2448 = vmatmul.mubr.f32.gmra.mrb[0].mxu0 %v2265
        %v2449 = vpop.f32.mrb[0].mxu0
        %v2450 = vadd.f32 0.0, %v2449
        %v2451 = vpop.f32.mrb[0].mxu0
        %2452 = vmatprep.mubr.f32.mxu0 0.0
        %2453 = vmatmul.mubr.f32.gmra.mrb[0].mxu0 %v2268
        %v2454 = vpop.f32.mrb[0].mxu0
        %v2455 = vadd.f32 0.0, %v2454
        %v2456 = vpop.f32.mrb[0].mxu0
        %2457 = vmatprep.mubr.f32.mxu0 0.0
        %2458 = vmatmul.mubr.f32.gmra.mrb[0].mxu0 %v2271
        %v2459 = vpop.f32.mrb[0].mxu0
        %v2460 = vadd.f32 0.0, %v2459
        %v2461 = vpop.f32.mrb[0].mxu0
        %2462 = vmatprep.mubr.f32.mxu0 0.0
        %2463 = vmatmul.mubr.f32.gmra.mrb[0].mxu0 %v2274
        %v2464 = vpop.f32.mrb[0].mxu0
        %v2465 = vadd.f32 0.0, %v2464
        %v2466 = vpop.f32.mrb[0].mxu0
        %2467 = vmatprep.mubr.f32.mxu0 0.0
        %2468 = vmatmul.mubr.f32.gmra.mrb[0].mxu0 %v2277
        %v2469 = vpop.f32.mrb[0].mxu0
        %v2470 = vadd.f32 0.0, %v2469
        %v2471 = vpop.f32.mrb[0].mxu0
        %2472 = vmatprep.mubr.f32.mxu0 0.0
        %2473 = vmatmul.mubr.f32.gmra.mrb[0].mxu0 %v2280
        %v2474 = vpop.f32.mrb[0].mxu0
        %v2475 = vadd.f32 0.0, %v2474
        %v2476 = vpop.f32.mrb[0].mxu0
        %2477 = vmatprep.mubr.f32.mxu0 0.0
        %2478 = vmatmul.mubr.f32.gmra.mrb[0].mxu0 %v2283
        %v2479 = vpop.f32.mrb[0].mxu0
        %v2480 = vadd.f32 0.0, %v2479
        %v2481 = vpop.f32.mrb[0].mxu0
        %2482 = vmatprep.mubr.f32.mxu0 0.0
        %2483 = vmatmul.mubr.f32.gmra.mrb[0].mxu0 %v2286
        %v2484 = vpop.f32.mrb[0].mxu0
        %v2485 = vadd.f32 0.0, %v2484
        %v2486 = vpop.f32.mrb[0].mxu0
        %2487 = vmatprep.mubr.f32.mxu0 0.0
        %2488 = vmatmul.mubr.f32.gmra.mrb[0].mxu0 %v2289
        %v2489 = vpop.f32.mrb[0].mxu0
        %v2490 = vadd.f32 0.0, %v2489
        %v2491 = vpop.f32.mrb[0].mxu0
        %2492 = vmatprep.mubr.f32.mxu0 0.0
        %2493 = vmatmul.mubr.f32.gmra.mrb[0].mxu0 %v2292
        %v2494 = vpop.f32.mrb[0].mxu0
        %v2495 = vadd.f32 0.0, %v2494
        %v2496 = vpop.f32.mrb[0].mxu0
        %2497 = vmatprep.mubr.f32.mxu0 0.0
        %2498 = vmatmul.mubr.f32.gmra.mrb[0].mxu0 %v2295
        %v2499 = vpop.f32.mrb[0].mxu0
        %v2500 = vadd.f32 0.0, %v2499
        %v2501 = vpop.f32.mrb[0].mxu0
        %2502 = vmatprep.mubr.f32.mxu0 0.0
        %2503 = vmatmul.mubr.f32.gmra.mrb[0].mxu0 %v2298
        %v2504 = vpop.f32.mrb[0].mxu0
        %v2505 = vadd.f32 0.0, %v2504
        %v2506 = vpop.f32.mrb[0].mxu0
        %2507 = vmatprep.mubr.f32.mxu0 0.0
        %2508 = vmatmul.mubr.f32.gmra.mrb[0].mxu0 %v2301
        %v2509 = vpop.f32.mrb[0].mxu0
        %v2510 = vadd.f32 0.0, %v2509
        %v2511 = vpop.f32.mrb[0].mxu0
        %2512 = vmatprep.mubr.f32.mxu0 0.0
        %2513 = vmatmul.mubr.f32.gmra.mrb[0].mxu0 %v2304
        %v2514 = vpop.f32.mrb[0].mxu0
        %v2515 = vadd.f32 0.0, %v2514
        %v2516 = vpop.f32.mrb[0].mxu0
        %2517 = vmatprep.mubr.f32.mxu0 0.0
        %2518 = vmatmul.mubr.f32.gmra.mrb[0].mxu0 %v2307
        %v2519 = vpop.f32.mrb[0].mxu0
        %v2520 = vadd.f32 0.0, %v2519
        %v2521 = vpop.f32.mrb[0].mxu0
        %2522 = vmatprep.mubr.f32.mxu0 0.0
        %2523 = vmatmul.mubr.f32.gmra.mrb[0].mxu0 %v2310
        %v2524 = vpop.f32.mrb[0].mxu0
        %v2525 = vadd.f32 0.0, %v2524
        %v2526 = vpop.f32.mrb[0].mxu0
        %2527 = vmatprep.mubr.f32.mxu0 0.0
        %2528 = vmatmul.mubr.f32.gmra.mrb[0].mxu0 %v2313
        %v2529 = vpop.f32.mrb[0].mxu0
        %v2530 = vadd.f32 0.0, %v2529
        %v2531 = vpop.f32.mrb[0].mxu0
        %2532 = vmatprep.mubr.f32.mxu0 0.0
        %2533 = vmatmul.mubr.f32.gmra.mrb[0].mxu0 %v2316
        %v2534 = vpop.f32.mrb[0].mxu0
        %v2535 = vadd.f32 0.0, %v2534
        %v2536 = vpop.f32.mrb[0].mxu0
        %2537 = vmatprep.mubr.f32.mxu0 0.0
        %2538 = vmatmul.mubr.f32.gmra.mrb[0].mxu0 %v2319
        %v2539 = vpop.f32.mrb[0].mxu0
        %v2540 = vadd.f32 0.0, %v2539
        %v2541 = vpop.f32.mrb[0].mxu0
        %2542 = vmatprep.mubr.f32.mxu0 0.0
        %2543 = vmatmul.mubr.f32.gmra.mrb[0].mxu0 %v2322
        %v2544 = vpop.f32.mrb[0].mxu0
        %v2545 = vadd.f32 0.0, %v2544
        %v2546 = vpop.f32.mrb[0].mxu0
        %2547 = vmatprep.mubr.f32.mxu0 0.0
        %2548 = vmatmul.mubr.f32.gmra.mrb[0].mxu0 %v2325
        %v2549 = vpop.f32.mrb[0].mxu0
        %v2550 = vadd.f32 0.0, %v2549
        %v2551 = vpop.f32.mrb[0].mxu0
        %2552 = vmatprep.mubr.f32.mxu0 0.0
        %2553 = vmatmul.mubr.f32.gmra.mrb[0].mxu0 %v2328
        %v2554 = vpop.f32.mrb[0].mxu0
        %v2555 = vadd.f32 0.0, %v2554
        %v2556 = vpop.f32.mrb[0].mxu0
        %2557 = vdwg.mxu0
        %v2558 = vadd.f32 %v2200, %v2400
        %v2559 = vadd.f32 %v2201, %v2405
        %v2560 = vadd.f32 %v2202, %v2410
        %v2561 = vadd.f32 %v2203, %v2415
        %v2562 = vadd.f32 %v2204, %v2420
        %v2563 = vadd.f32 %v2205, %v2425
        %v2564 = vadd.f32 %v2206, %v2430
        %v2565 = vadd.f32 %v2207, %v2435
        %v2566 = vadd.f32 %v2208, %v2440
        %v2567 = vadd.f32 %v2209, %v2445
        %v2568 = vadd.f32 %v2210, %v2450
        %v2569 = vadd.f32 %v2211, %v2455
        %v2570 = vadd.f32 %v2212, %v2460
        %v2571 = vadd.f32 %v2213, %v2465
        %v2572 = vadd.f32 %v2214, %v2470
        %v2573 = vadd.f32 %v2215, %v2475
        %v2574 = vadd.f32 %v2216, %v2480
        %v2575 = vadd.f32 %v2217, %v2485
        %v2576 = vadd.f32 %v2218, %v2490
        %v2577 = vadd.f32 %v2219, %v2495
        %v2578 = vadd.f32 %v2220, %v2500
        %v2579 = vadd.f32 %v2221, %v2505
        %v2580 = vadd.f32 %v2222, %v2510
        %v2581 = vadd.f32 %v2223, %v2515
        %v2582 = vadd.f32 %v2224, %v2520
        %v2583 = vadd.f32 %v2225, %v2525
        %v2584 = vadd.f32 %v2226, %v2530
        %v2585 = vadd.f32 %v2227, %v2535
        %v2586 = vadd.f32 %v2228, %v2540
        %v2587 = vadd.f32 %v2229, %v2545
        %v2588 = vadd.f32 %v2230, %v2550
        %v2589 = vadd.f32 %v2231, %v2555
        %s2590 = scalar_lea.vmem %s1, 24
        %v2591 = vld [vmem:[%s2590] sm:$0xf]
        %v2593 = vsel %vm508, %v403, 0
        %v2596 = vsel %vm508, %v404, 0
        %v2599 = vsel %vm508, %v405, 0
        %v2602 = vsel %vm508, %v406, 0
        %v2605 = vsel %vm508, %v407, 0
        %v2608 = vsel %vm508, %v408, 0
        %v2611 = vsel %vm508, %v409, 0
        %v2614 = vsel %vm508, %v410, 0
        %v2617 = vsel %vm508, %v411, 0
        %v2620 = vsel %vm508, %v412, 0
        %v2623 = vsel %vm508, %v413, 0
        %v2626 = vsel %vm508, %v414, 0
        %v2629 = vsel %vm508, %v415, 0
        %v2632 = vsel %vm508, %v416, 0
        %v2635 = vsel %vm508, %v417, 0
        %v2638 = vsel %vm508, %v418, 0
        %v2641 = vsel %vm508, %v419, 0
        %v2644 = vsel %vm508, %v420, 0
        %v2647 = vsel %vm508, %v421, 0
        %v2650 = vsel %vm508, %v422, 0
        %v2653 = vsel %vm508, %v423, 0
        %v2656 = vsel %vm508, %v424, 0
        %v2659 = vsel %vm508, %v425, 0
        %v2662 = vsel %vm508, %v426, 0
        %v2665 = vsel %vm508, %v427, 0
        %v2668 = vsel %vm508, %v428, 0
        %v2671 = vsel %vm508, %v429, 0
        %v2674 = vsel %vm508, %v430, 0
        %v2677 = vsel %vm508, %v431, 0
        %v2680 = vsel %vm508, %v432, 0
        %v2683 = vsel %vm508, %v433, 0
        %v2686 = vsel %vm508, %v434, 0
        %v2689 = vsel %vm605, %v2591, 0
        %2691 = vmatprep.subr.mxu0 0.0
        %2692 = vmatpush1.msra.mxu0 %v2689
        %2693 = vmatprep.subr.mxu0 0.0
        %2694 = vmatpush1.msra.mxu0 0.0
        %2695 = vmatprep.subr.mxu0 0.0
        %2696 = vmatpush1.msra.mxu0 0.0
        %2697 = vmatprep.subr.mxu0 0.0
        %2698 = vmatpush1.msra.mxu0 0.0
        %2699 = vmatprep.subr.mxu0 0.0
        %2700 = vmatpush1.msra.mxu0 0.0
        %2701 = vmatprep.subr.mxu0 0.0
        %2702 = vmatpush1.msra.mxu0 0.0
        %2703 = vmatprep.subr.mxu0 0.0
        %2704 = vmatpush1.msra.mxu0 0.0
        %2705 = vmatprep.subr.mxu0 0.0
        %2706 = vmatpush1.msra.mxu0 0.0
        %2707 = vmatprep.subr.mxu0 0.0
        %2708 = vmatpush1.msra.mxu0 0.0
        %2709 = vmatprep.subr.mxu0 0.0
        %2710 = vmatpush1.msra.mxu0 0.0
        %2711 = vmatprep.subr.mxu0 0.0
        %2712 = vmatpush1.msra.mxu0 0.0
        %2713 = vmatprep.subr.mxu0 0.0
        %2714 = vmatpush1.msra.mxu0 0.0
        %2715 = vmatprep.subr.mxu0 0.0
        %2716 = vmatpush1.msra.mxu0 0.0
        %2717 = vmatprep.subr.mxu0 0.0
        %2718 = vmatpush1.msra.mxu0 0.0
        %2719 = vmatprep.subr.mxu0 0.0
        %2720 = vmatpush1.msra.mxu0 0.0
        %2721 = vmatprep.subr.mxu0 0.0
        %2722 = vmatpush1.msra.mxu0 0.0
        %2723 = vmatprep.subr.mxu0 0.0
        %2724 = vmatpush1.msra.mxu0 0.0
        %2725 = vmatprep.subr.mxu0 0.0
        %2726 = vmatpush1.msra.mxu0 0.0
        %2727 = vmatprep.subr.mxu0 0.0
        %2728 = vmatpush1.msra.mxu0 0.0
        %2729 = vmatprep.subr.mxu0 0.0
        %2730 = vmatpush1.msra.mxu0 0.0
        %2731 = vmatprep.subr.mxu0 0.0
        %2732 = vmatpush1.msra.mxu0 0.0
        %2733 = vmatprep.subr.mxu0 0.0
        %2734 = vmatpush1.msra.mxu0 0.0
        %2735 = vmatprep.subr.mxu0 0.0
        %2736 = vmatpush1.msra.mxu0 0.0
        %2737 = vmatprep.subr.mxu0 0.0
        %2738 = vmatpush1.msra.mxu0 0.0
        %2739 = vmatprep.subr.mxu0 0.0
        %2740 = vmatpush1.msra.mxu0 0.0
        %2741 = vmatprep.subr.mxu0 0.0
        %2742 = vmatpush1.msra.mxu0 0.0
        %2743 = vmatprep.subr.mxu0 0.0
        %2744 = vmatpush1.msra.mxu0 0.0
        %2745 = vmatprep.subr.mxu0 0.0
        %2746 = vmatpush1.msra.mxu0 0.0
        %2747 = vmatprep.subr.mxu0 0.0
        %2748 = vmatpush1.msra.mxu0 0.0
        %2749 = vmatprep.subr.mxu0 0.0
        %2750 = vmatpush1.msra.mxu0 0.0
        %2751 = vmatprep.subr.mxu0 0.0
        %2752 = vmatpush1.msra.mxu0 0.0
        %2753 = vmatprep.subr.mxu0 0.0
        %2754 = vmatpush1.msra.mxu0 0.0
        %2755 = vmatprep.mubr.f32.mxu0 0.0
        %2756 = vmatmul.mubr.f32.gmra.mrb[0].mxu0 %v2593
        %v2757 = vpop.f32.mrb[0].mxu0
        %v2758 = vadd.f32 0.0, %v2757
        %v2759 = vpop.f32.mrb[0].mxu0
        %2760 = vmatprep.mubr.f32.mxu0 0.0
        %2761 = vmatmul.mubr.f32.gmra.mrb[0].mxu0 %v2596
        %v2762 = vpop.f32.mrb[0].mxu0
        %v2763 = vadd.f32 0.0, %v2762
        %v2764 = vpop.f32.mrb[0].mxu0
        %2765 = vmatprep.mubr.f32.mxu0 0.0
        %2766 = vmatmul.mubr.f32.gmra.mrb[0].mxu0 %v2599
        %v2767 = vpop.f32.mrb[0].mxu0
        %v2768 = vadd.f32 0.0, %v2767
        %v2769 = vpop.f32.mrb[0].mxu0
        %2770 = vmatprep.mubr.f32.mxu0 0.0
        %2771 = vmatmul.mubr.f32.gmra.mrb[0].mxu0 %v2602
        %v2772 = vpop.f32.mrb[0].mxu0
        %v2773 = vadd.f32 0.0, %v2772
        %v2774 = vpop.f32.mrb[0].mxu0
        %2775 = vmatprep.mubr.f32.mxu0 0.0
        %2776 = vmatmul.mubr.f32.gmra.mrb[0].mxu0 %v2605
        %v2777 = vpop.f32.mrb[0].mxu0
        %v2778 = vadd.f32 0.0, %v2777
        %v2779 = vpop.f32.mrb[0].mxu0
        %2780 = vmatprep.mubr.f32.mxu0 0.0
        %2781 = vmatmul.mubr.f32.gmra.mrb[0].mxu0 %v2608
        %v2782 = vpop.f32.mrb[0].mxu0
        %v2783 = vadd.f32 0.0, %v2782
        %v2784 = vpop.f32.mrb[0].mxu0
        %2785 = vmatprep.mubr.f32.mxu0 0.0
        %2786 = vmatmul.mubr.f32.gmra.mrb[0].mxu0 %v2611
        %v2787 = vpop.f32.mrb[0].mxu0
        %v2788 = vadd.f32 0.0, %v2787
        %v2789 = vpop.f32.mrb[0].mxu0
        %2790 = vmatprep.mubr.f32.mxu0 0.0
        %2791 = vmatmul.mubr.f32.gmra.mrb[0].mxu0 %v2614
        %v2792 = vpop.f32.mrb[0].mxu0
        %v2793 = vadd.f32 0.0, %v2792
        %v2794 = vpop.f32.mrb[0].mxu0
        %2795 = vmatprep.mubr.f32.mxu0 0.0
        %2796 = vmatmul.mubr.f32.gmra.mrb[0].mxu0 %v2617
        %v2797 = vpop.f32.mrb[0].mxu0
        %v2798 = vadd.f32 0.0, %v2797
        %v2799 = vpop.f32.mrb[0].mxu0
        %2800 = vmatprep.mubr.f32.mxu0 0.0
        %2801 = vmatmul.mubr.f32.gmra.mrb[0].mxu0 %v2620
        %v2802 = vpop.f32.mrb[0].mxu0
        %v2803 = vadd.f32 0.0, %v2802
        %v2804 = vpop.f32.mrb[0].mxu0
        %2805 = vmatprep.mubr.f32.mxu0 0.0
        %2806 = vmatmul.mubr.f32.gmra.mrb[0].mxu0 %v2623
        %v2807 = vpop.f32.mrb[0].mxu0
        %v2808 = vadd.f32 0.0, %v2807
        %v2809 = vpop.f32.mrb[0].mxu0
        %2810 = vmatprep.mubr.f32.mxu0 0.0
        %2811 = vmatmul.mubr.f32.gmra.mrb[0].mxu0 %v2626
        %v2812 = vpop.f32.mrb[0].mxu0
        %v2813 = vadd.f32 0.0, %v2812
        %v2814 = vpop.f32.mrb[0].mxu0
        %2815 = vmatprep.mubr.f32.mxu0 0.0
        %2816 = vmatmul.mubr.f32.gmra.mrb[0].mxu0 %v2629
        %v2817 = vpop.f32.mrb[0].mxu0
        %v2818 = vadd.f32 0.0, %v2817
        %v2819 = vpop.f32.mrb[0].mxu0
        %2820 = vmatprep.mubr.f32.mxu0 0.0
        %2821 = vmatmul.mubr.f32.gmra.mrb[0].mxu0 %v2632
        %v2822 = vpop.f32.mrb[0].mxu0
        %v2823 = vadd.f32 0.0, %v2822
        %v2824 = vpop.f32.mrb[0].mxu0
        %2825 = vmatprep.mubr.f32.mxu0 0.0
        %2826 = vmatmul.mubr.f32.gmra.mrb[0].mxu0 %v2635
        %v2827 = vpop.f32.mrb[0].mxu0
        %v2828 = vadd.f32 0.0, %v2827
        %v2829 = vpop.f32.mrb[0].mxu0
        %2830 = vmatprep.mubr.f32.mxu0 0.0
        %2831 = vmatmul.mubr.f32.gmra.mrb[0].mxu0 %v2638
        %v2832 = vpop.f32.mrb[0].mxu0
        %v2833 = vadd.f32 0.0, %v2832
        %v2834 = vpop.f32.mrb[0].mxu0
        %2835 = vmatprep.mubr.f32.mxu0 0.0
        %2836 = vmatmul.mubr.f32.gmra.mrb[0].mxu0 %v2641
        %v2837 = vpop.f32.mrb[0].mxu0
        %v2838 = vadd.f32 0.0, %v2837
        %v2839 = vpop.f32.mrb[0].mxu0
        %2840 = vmatprep.mubr.f32.mxu0 0.0
        %2841 = vmatmul.mubr.f32.gmra.mrb[0].mxu0 %v2644
        %v2842 = vpop.f32.mrb[0].mxu0
        %v2843 = vadd.f32 0.0, %v2842
        %v2844 = vpop.f32.mrb[0].mxu0
        %2845 = vmatprep.mubr.f32.mxu0 0.0
        %2846 = vmatmul.mubr.f32.gmra.mrb[0].mxu0 %v2647
        %v2847 = vpop.f32.mrb[0].mxu0
        %v2848 = vadd.f32 0.0, %v2847
        %v2849 = vpop.f32.mrb[0].mxu0
        %2850 = vmatprep.mubr.f32.mxu0 0.0
        %2851 = vmatmul.mubr.f32.gmra.mrb[0].mxu0 %v2650
        %v2852 = vpop.f32.mrb[0].mxu0
        %v2853 = vadd.f32 0.0, %v2852
        %v2854 = vpop.f32.mrb[0].mxu0
        %2855 = vmatprep.mubr.f32.mxu0 0.0
        %2856 = vmatmul.mubr.f32.gmra.mrb[0].mxu0 %v2653
        %v2857 = vpop.f32.mrb[0].mxu0
        %v2858 = vadd.f32 0.0, %v2857
        %v2859 = vpop.f32.mrb[0].mxu0
        %2860 = vmatprep.mubr.f32.mxu0 0.0
        %2861 = vmatmul.mubr.f32.gmra.mrb[0].mxu0 %v2656
        %v2862 = vpop.f32.mrb[0].mxu0
        %v2863 = vadd.f32 0.0, %v2862
        %v2864 = vpop.f32.mrb[0].mxu0
        %2865 = vmatprep.mubr.f32.mxu0 0.0
        %2866 = vmatmul.mubr.f32.gmra.mrb[0].mxu0 %v2659
        %v2867 = vpop.f32.mrb[0].mxu0
        %v2868 = vadd.f32 0.0, %v2867
        %v2869 = vpop.f32.mrb[0].mxu0
        %2870 = vmatprep.mubr.f32.mxu0 0.0
        %2871 = vmatmul.mubr.f32.gmra.mrb[0].mxu0 %v2662
        %v2872 = vpop.f32.mrb[0].mxu0
        %v2873 = vadd.f32 0.0, %v2872
        %v2874 = vpop.f32.mrb[0].mxu0
        %2875 = vmatprep.mubr.f32.mxu0 0.0
        %2876 = vmatmul.mubr.f32.gmra.mrb[0].mxu0 %v2665
        %v2877 = vpop.f32.mrb[0].mxu0
        %v2878 = vadd.f32 0.0, %v2877
        %v2879 = vpop.f32.mrb[0].mxu0
        %2880 = vmatprep.mubr.f32.mxu0 0.0
        %2881 = vmatmul.mubr.f32.gmra.mrb[0].mxu0 %v2668
        %v2882 = vpop.f32.mrb[0].mxu0
        %v2883 = vadd.f32 0.0, %v2882
        %v2884 = vpop.f32.mrb[0].mxu0
        %2885 = vmatprep.mubr.f32.mxu0 0.0
        %2886 = vmatmul.mubr.f32.gmra.mrb[0].mxu0 %v2671
        %v2887 = vpop.f32.mrb[0].mxu0
        %v2888 = vadd.f32 0.0, %v2887
        %v2889 = vpop.f32.mrb[0].mxu0
        %2890 = vmatprep.mubr.f32.mxu0 0.0
        %2891 = vmatmul.mubr.f32.gmra.mrb[0].mxu0 %v2674
        %v2892 = vpop.f32.mrb[0].mxu0
        %v2893 = vadd.f32 0.0, %v2892
        %v2894 = vpop.f32.mrb[0].mxu0
        %2895 = vmatprep.mubr.f32.mxu0 0.0
        %2896 = vmatmul.mubr.f32.gmra.mrb[0].mxu0 %v2677
        %v2897 = vpop.f32.mrb[0].mxu0
        %v2898 = vadd.f32 0.0, %v2897
        %v2899 = vpop.f32.mrb[0].mxu0
        %2900 = vmatprep.mubr.f32.mxu0 0.0
        %2901 = vmatmul.mubr.f32.gmra.mrb[0].mxu0 %v2680
        %v2902 = vpop.f32.mrb[0].mxu0
        %v2903 = vadd.f32 0.0, %v2902
        %v2904 = vpop.f32.mrb[0].mxu0
        %2905 = vmatprep.mubr.f32.mxu0 0.0
        %2906 = vmatmul.mubr.f32.gmra.mrb[0].mxu0 %v2683
        %v2907 = vpop.f32.mrb[0].mxu0
        %v2908 = vadd.f32 0.0, %v2907
        %v2909 = vpop.f32.mrb[0].mxu0
        %2910 = vmatprep.mubr.f32.mxu0 0.0
        %2911 = vmatmul.mubr.f32.gmra.mrb[0].mxu0 %v2686
        %v2912 = vpop.f32.mrb[0].mxu0
        %v2913 = vadd.f32 0.0, %v2912
        %v2914 = vpop.f32.mrb[0].mxu0
        %2915 = vdwg.mxu0
        %v2916 = vadd.f32 %v2558, %v2758
        %v2917 = vadd.f32 %v2559, %v2763
        %v2918 = vadd.f32 %v2560, %v2768
        %v2919 = vadd.f32 %v2561, %v2773
        %v2920 = vadd.f32 %v2562, %v2778
        %v2921 = vadd.f32 %v2563, %v2783
        %v2922 = vadd.f32 %v2564, %v2788
        %v2923 = vadd.f32 %v2565, %v2793
        %v2924 = vadd.f32 %v2566, %v2798
        %v2925 = vadd.f32 %v2567, %v2803
        %v2926 = vadd.f32 %v2568, %v2808
        %v2927 = vadd.f32 %v2569, %v2813
        %v2928 = vadd.f32 %v2570, %v2818
        %v2929 = vadd.f32 %v2571, %v2823
        %v2930 = vadd.f32 %v2572, %v2828
        %v2931 = vadd.f32 %v2573, %v2833
        %v2932 = vadd.f32 %v2574, %v2838
        %v2933 = vadd.f32 %v2575, %v2843
        %v2934 = vadd.f32 %v2576, %v2848
        %v2935 = vadd.f32 %v2577, %v2853
        %v2936 = vadd.f32 %v2578, %v2858
        %v2937 = vadd.f32 %v2579, %v2863
        %v2938 = vadd.f32 %v2580, %v2868
        %v2939 = vadd.f32 %v2581, %v2873
        %v2940 = vadd.f32 %v2582, %v2878
        %v2941 = vadd.f32 %v2583, %v2883
        %v2942 = vadd.f32 %v2584, %v2888
        %v2943 = vadd.f32 %v2585, %v2893
        %v2944 = vadd.f32 %v2586, %v2898
        %v2945 = vadd.f32 %v2587, %v2903
        %v2946 = vadd.f32 %v2588, %v2908
        %v2947 = vadd.f32 %v2589, %v2913
        %s2948 = scalar_lea.vmem %s1, 28
        %v2949 = vld [vmem:[%s2948] sm:$0xf]
        %v2951 = vsel %vm508, %v438, 0
        %v2954 = vsel %vm508, %v439, 0
        %v2957 = vsel %vm508, %v440, 0
        %v2960 = vsel %vm508, %v441, 0
        %v2963 = vsel %vm508, %v442, 0
        %v2966 = vsel %vm508, %v443, 0
        %v2969 = vsel %vm508, %v444, 0
        %v2972 = vsel %vm508, %v445, 0
        %v2975 = vsel %vm508, %v446, 0
        %v2978 = vsel %vm508, %v447, 0
        %v2981 = vsel %vm508, %v448, 0
        %v2984 = vsel %vm508, %v449, 0
        %v2987 = vsel %vm508, %v450, 0
        %v2990 = vsel %vm508, %v451, 0
        %v2993 = vsel %vm508, %v452, 0
        %v2996 = vsel %vm508, %v453, 0
        %v2999 = vsel %vm508, %v454, 0
        %v3002 = vsel %vm508, %v455, 0
        %v3005 = vsel %vm508, %v456, 0
        %v3008 = vsel %vm508, %v457, 0
        %v3011 = vsel %vm508, %v458, 0
        %v3014 = vsel %vm508, %v459, 0
        %v3017 = vsel %vm508, %v460, 0
        %v3020 = vsel %vm508, %v461, 0
        %v3023 = vsel %vm508, %v462, 0
        %v3026 = vsel %vm508, %v463, 0
        %v3029 = vsel %vm508, %v464, 0
        %v3032 = vsel %vm508, %v465, 0
        %v3035 = vsel %vm508, %v466, 0
        %v3038 = vsel %vm508, %v467, 0
        %v3041 = vsel %vm508, %v468, 0
        %v3044 = vsel %vm508, %v469, 0
        %v3047 = vsel %vm605, %v2949, 0
        %3049 = vmatprep.subr.mxu0 0.0
        %3050 = vmatpush1.msra.mxu0 %v3047
        %3051 = vmatprep.subr.mxu0 0.0
        %3052 = vmatpush1.msra.mxu0 0.0
        %3053 = vmatprep.subr.mxu0 0.0
        %3054 = vmatpush1.msra.mxu0 0.0
        %3055 = vmatprep.subr.mxu0 0.0
        %3056 = vmatpush1.msra.mxu0 0.0
        %3057 = vmatprep.subr.mxu0 0.0
        %3058 = vmatpush1.msra.mxu0 0.0
        %3059 = vmatprep.subr.mxu0 0.0
        %3060 = vmatpush1.msra.mxu0 0.0
        %3061 = vmatprep.subr.mxu0 0.0
        %3062 = vmatpush1.msra.mxu0 0.0
        %3063 = vmatprep.subr.mxu0 0.0
        %3064 = vmatpush1.msra.mxu0 0.0
        %3065 = vmatprep.subr.mxu0 0.0
        %3066 = vmatpush1.msra.mxu0 0.0
        %3067 = vmatprep.subr.mxu0 0.0
        %3068 = vmatpush1.msra.mxu0 0.0
        %3069 = vmatprep.subr.mxu0 0.0
        %3070 = vmatpush1.msra.mxu0 0.0
        %3071 = vmatprep.subr.mxu0 0.0
        %3072 = vmatpush1.msra.mxu0 0.0
        %3073 = vmatprep.subr.mxu0 0.0
        %3074 = vmatpush1.msra.mxu0 0.0
        %3075 = vmatprep.subr.mxu0 0.0
        %3076 = vmatpush1.msra.mxu0 0.0
        %3077 = vmatprep.subr.mxu0 0.0
        %3078 = vmatpush1.msra.mxu0 0.0
        %3079 = vmatprep.subr.mxu0 0.0
        %3080 = vmatpush1.msra.mxu0 0.0
        %3081 = vmatprep.subr.mxu0 0.0
        %3082 = vmatpush1.msra.mxu0 0.0
        %3083 = vmatprep.subr.mxu0 0.0
        %3084 = vmatpush1.msra.mxu0 0.0
        %3085 = vmatprep.subr.mxu0 0.0
        %3086 = vmatpush1.msra.mxu0 0.0
        %3087 = vmatprep.subr.mxu0 0.0
        %3088 = vmatpush1.msra.mxu0 0.0
        %3089 = vmatprep.subr.mxu0 0.0
        %3090 = vmatpush1.msra.mxu0 0.0
        %3091 = vmatprep.subr.mxu0 0.0
        %3092 = vmatpush1.msra.mxu0 0.0
        %3093 = vmatprep.subr.mxu0 0.0
        %3094 = vmatpush1.msra.mxu0 0.0
        %3095 = vmatprep.subr.mxu0 0.0
        %3096 = vmatpush1.msra.mxu0 0.0
        %3097 = vmatprep.subr.mxu0 0.0
        %3098 = vmatpush1.msra.mxu0 0.0
        %3099 = vmatprep.subr.mxu0 0.0
        %3100 = vmatpush1.msra.mxu0 0.0
        %3101 = vmatprep.subr.mxu0 0.0
        %3102 = vmatpush1.msra.mxu0 0.0
        %3103 = vmatprep.subr.mxu0 0.0
        %3104 = vmatpush1.msra.mxu0 0.0
        %3105 = vmatprep.subr.mxu0 0.0
        %3106 = vmatpush1.msra.mxu0 0.0
        %3107 = vmatprep.subr.mxu0 0.0
        %3108 = vmatpush1.msra.mxu0 0.0
        %3109 = vmatprep.subr.mxu0 0.0
        %3110 = vmatpush1.msra.mxu0 0.0
        %3111 = vmatprep.subr.mxu0 0.0
        %3112 = vmatpush1.msra.mxu0 0.0
        %3113 = vmatprep.mubr.f32.mxu0 0.0
        %3114 = vmatmul.mubr.f32.gmra.mrb[0].mxu0 %v2951
        %v3115 = vpop.f32.mrb[0].mxu0
        %v3116 = vadd.f32 0.0, %v3115
        %v3117 = vpop.f32.mrb[0].mxu0
        %3118 = vmatprep.mubr.f32.mxu0 0.0
        %3119 = vmatmul.mubr.f32.gmra.mrb[0].mxu0 %v2954
        %v3120 = vpop.f32.mrb[0].mxu0
        %v3121 = vadd.f32 0.0, %v3120
        %v3122 = vpop.f32.mrb[0].mxu0
        %3123 = vmatprep.mubr.f32.mxu0 0.0
        %3124 = vmatmul.mubr.f32.gmra.mrb[0].mxu0 %v2957
        %v3125 = vpop.f32.mrb[0].mxu0
        %v3126 = vadd.f32 0.0, %v3125
        %v3127 = vpop.f32.mrb[0].mxu0
        %3128 = vmatprep.mubr.f32.mxu0 0.0
        %3129 = vmatmul.mubr.f32.gmra.mrb[0].mxu0 %v2960
        %v3130 = vpop.f32.mrb[0].mxu0
        %v3131 = vadd.f32 0.0, %v3130
        %v3132 = vpop.f32.mrb[0].mxu0
        %3133 = vmatprep.mubr.f32.mxu0 0.0
        %3134 = vmatmul.mubr.f32.gmra.mrb[0].mxu0 %v2963
        %v3135 = vpop.f32.mrb[0].mxu0
        %v3136 = vadd.f32 0.0, %v3135
        %v3137 = vpop.f32.mrb[0].mxu0
        %3138 = vmatprep.mubr.f32.mxu0 0.0
        %3139 = vmatmul.mubr.f32.gmra.mrb[0].mxu0 %v2966
        %v3140 = vpop.f32.mrb[0].mxu0
        %v3141 = vadd.f32 0.0, %v3140
        %v3142 = vpop.f32.mrb[0].mxu0
        %3143 = vmatprep.mubr.f32.mxu0 0.0
        %3144 = vmatmul.mubr.f32.gmra.mrb[0].mxu0 %v2969
        %v3145 = vpop.f32.mrb[0].mxu0
        %v3146 = vadd.f32 0.0, %v3145
        %v3147 = vpop.f32.mrb[0].mxu0
        %3148 = vmatprep.mubr.f32.mxu0 0.0
        %3149 = vmatmul.mubr.f32.gmra.mrb[0].mxu0 %v2972
        %v3150 = vpop.f32.mrb[0].mxu0
        %v3151 = vadd.f32 0.0, %v3150
        %v3152 = vpop.f32.mrb[0].mxu0
        %3153 = vmatprep.mubr.f32.mxu0 0.0
        %3154 = vmatmul.mubr.f32.gmra.mrb[0].mxu0 %v2975
        %v3155 = vpop.f32.mrb[0].mxu0
        %v3156 = vadd.f32 0.0, %v3155
        %v3157 = vpop.f32.mrb[0].mxu0
        %3158 = vmatprep.mubr.f32.mxu0 0.0
        %3159 = vmatmul.mubr.f32.gmra.mrb[0].mxu0 %v2978
        %v3160 = vpop.f32.mrb[0].mxu0
        %v3161 = vadd.f32 0.0, %v3160
        %v3162 = vpop.f32.mrb[0].mxu0
        %3163 = vmatprep.mubr.f32.mxu0 0.0
        %3164 = vmatmul.mubr.f32.gmra.mrb[0].mxu0 %v2981
        %v3165 = vpop.f32.mrb[0].mxu0
        %v3166 = vadd.f32 0.0, %v3165
        %v3167 = vpop.f32.mrb[0].mxu0
        %3168 = vmatprep.mubr.f32.mxu0 0.0
        %3169 = vmatmul.mubr.f32.gmra.mrb[0].mxu0 %v2984
        %v3170 = vpop.f32.mrb[0].mxu0
        %v3171 = vadd.f32 0.0, %v3170
        %v3172 = vpop.f32.mrb[0].mxu0
        %3173 = vmatprep.mubr.f32.mxu0 0.0
        %3174 = vmatmul.mubr.f32.gmra.mrb[0].mxu0 %v2987
        %v3175 = vpop.f32.mrb[0].mxu0
        %v3176 = vadd.f32 0.0, %v3175
        %v3177 = vpop.f32.mrb[0].mxu0
        %3178 = vmatprep.mubr.f32.mxu0 0.0
        %3179 = vmatmul.mubr.f32.gmra.mrb[0].mxu0 %v2990
        %v3180 = vpop.f32.mrb[0].mxu0
        %v3181 = vadd.f32 0.0, %v3180
        %v3182 = vpop.f32.mrb[0].mxu0
        %3183 = vmatprep.mubr.f32.mxu0 0.0
        %3184 = vmatmul.mubr.f32.gmra.mrb[0].mxu0 %v2993
        %v3185 = vpop.f32.mrb[0].mxu0
        %v3186 = vadd.f32 0.0, %v3185
        %v3187 = vpop.f32.mrb[0].mxu0
        %3188 = vmatprep.mubr.f32.mxu0 0.0
        %3189 = vmatmul.mubr.f32.gmra.mrb[0].mxu0 %v2996
        %v3190 = vpop.f32.mrb[0].mxu0
        %v3191 = vadd.f32 0.0, %v3190
        %v3192 = vpop.f32.mrb[0].mxu0
        %3193 = vmatprep.mubr.f32.mxu0 0.0
        %3194 = vmatmul.mubr.f32.gmra.mrb[0].mxu0 %v2999
        %v3195 = vpop.f32.mrb[0].mxu0
        %v3196 = vadd.f32 0.0, %v3195
        %v3197 = vpop.f32.mrb[0].mxu0
        %3198 = vmatprep.mubr.f32.mxu0 0.0
        %3199 = vmatmul.mubr.f32.gmra.mrb[0].mxu0 %v3002
        %v3200 = vpop.f32.mrb[0].mxu0
        %v3201 = vadd.f32 0.0, %v3200
        %v3202 = vpop.f32.mrb[0].mxu0
        %3203 = vmatprep.mubr.f32.mxu0 0.0
        %3204 = vmatmul.mubr.f32.gmra.mrb[0].mxu0 %v3005
        %v3205 = vpop.f32.mrb[0].mxu0
        %v3206 = vadd.f32 0.0, %v3205
        %v3207 = vpop.f32.mrb[0].mxu0
        %3208 = vmatprep.mubr.f32.mxu0 0.0
        %3209 = vmatmul.mubr.f32.gmra.mrb[0].mxu0 %v3008
        %v3210 = vpop.f32.mrb[0].mxu0
        %v3211 = vadd.f32 0.0, %v3210
        %v3212 = vpop.f32.mrb[0].mxu0
        %3213 = vmatprep.mubr.f32.mxu0 0.0
        %3214 = vmatmul.mubr.f32.gmra.mrb[0].mxu0 %v3011
        %v3215 = vpop.f32.mrb[0].mxu0
        %v3216 = vadd.f32 0.0, %v3215
        %v3217 = vpop.f32.mrb[0].mxu0
        %3218 = vmatprep.mubr.f32.mxu0 0.0
        %3219 = vmatmul.mubr.f32.gmra.mrb[0].mxu0 %v3014
        %v3220 = vpop.f32.mrb[0].mxu0
        %v3221 = vadd.f32 0.0, %v3220
        %v3222 = vpop.f32.mrb[0].mxu0
        %3223 = vmatprep.mubr.f32.mxu0 0.0
        %3224 = vmatmul.mubr.f32.gmra.mrb[0].mxu0 %v3017
        %v3225 = vpop.f32.mrb[0].mxu0
        %v3226 = vadd.f32 0.0, %v3225
        %v3227 = vpop.f32.mrb[0].mxu0
        %3228 = vmatprep.mubr.f32.mxu0 0.0
        %3229 = vmatmul.mubr.f32.gmra.mrb[0].mxu0 %v3020
        %v3230 = vpop.f32.mrb[0].mxu0
        %v3231 = vadd.f32 0.0, %v3230
        %v3232 = vpop.f32.mrb[0].mxu0
        %3233 = vmatprep.mubr.f32.mxu0 0.0
        %3234 = vmatmul.mubr.f32.gmra.mrb[0].mxu0 %v3023
        %v3235 = vpop.f32.mrb[0].mxu0
        %v3236 = vadd.f32 0.0, %v3235
        %v3237 = vpop.f32.mrb[0].mxu0
        %3238 = vmatprep.mubr.f32.mxu0 0.0
        %3239 = vmatmul.mubr.f32.gmra.mrb[0].mxu0 %v3026
        %v3240 = vpop.f32.mrb[0].mxu0
        %v3241 = vadd.f32 0.0, %v3240
        %v3242 = vpop.f32.mrb[0].mxu0
        %3243 = vmatprep.mubr.f32.mxu0 0.0
        %3244 = vmatmul.mubr.f32.gmra.mrb[0].mxu0 %v3029
        %v3245 = vpop.f32.mrb[0].mxu0
        %v3246 = vadd.f32 0.0, %v3245
        %v3247 = vpop.f32.mrb[0].mxu0
        %3248 = vmatprep.mubr.f32.mxu0 0.0
        %3249 = vmatmul.mubr.f32.gmra.mrb[0].mxu0 %v3032
        %v3250 = vpop.f32.mrb[0].mxu0
        %v3251 = vadd.f32 0.0, %v3250
        %v3252 = vpop.f32.mrb[0].mxu0
        %3253 = vmatprep.mubr.f32.mxu0 0.0
        %3254 = vmatmul.mubr.f32.gmra.mrb[0].mxu0 %v3035
        %v3255 = vpop.f32.mrb[0].mxu0
        %v3256 = vadd.f32 0.0, %v3255
        %v3257 = vpop.f32.mrb[0].mxu0
        %3258 = vmatprep.mubr.f32.mxu0 0.0
        %3259 = vmatmul.mubr.f32.gmra.mrb[0].mxu0 %v3038
        %v3260 = vpop.f32.mrb[0].mxu0
        %v3261 = vadd.f32 0.0, %v3260
        %v3262 = vpop.f32.mrb[0].mxu0
        %3263 = vmatprep.mubr.f32.mxu0 0.0
        %3264 = vmatmul.mubr.f32.gmra.mrb[0].mxu0 %v3041
        %v3265 = vpop.f32.mrb[0].mxu0
        %v3266 = vadd.f32 0.0, %v3265
        %v3267 = vpop.f32.mrb[0].mxu0
        %3268 = vmatprep.mubr.f32.mxu0 0.0
        %3269 = vmatmul.mubr.f32.gmra.mrb[0].mxu0 %v3044
        %v3270 = vpop.f32.mrb[0].mxu0
        %v3271 = vadd.f32 0.0, %v3270
        %v3272 = vpop.f32.mrb[0].mxu0
        %3273 = vdwg.mxu0
        %v3274 = vadd.f32 %v2916, %v3116
        %v3275 = vadd.f32 %v2917, %v3121
        %v3276 = vadd.f32 %v2918, %v3126
        %v3277 = vadd.f32 %v2919, %v3131
        %v3278 = vadd.f32 %v2920, %v3136
        %v3279 = vadd.f32 %v2921, %v3141
        %v3280 = vadd.f32 %v2922, %v3146
        %v3281 = vadd.f32 %v2923, %v3151
        %v3282 = vadd.f32 %v2924, %v3156
        %v3283 = vadd.f32 %v2925, %v3161
        %v3284 = vadd.f32 %v2926, %v3166
        %v3285 = vadd.f32 %v2927, %v3171
        %v3286 = vadd.f32 %v2928, %v3176
        %v3287 = vadd.f32 %v2929, %v3181
        %v3288 = vadd.f32 %v2930, %v3186
        %v3289 = vadd.f32 %v2931, %v3191
        %v3290 = vadd.f32 %v2932, %v3196
        %v3291 = vadd.f32 %v2933, %v3201
        %v3292 = vadd.f32 %v2934, %v3206
        %v3293 = vadd.f32 %v2935, %v3211
        %v3294 = vadd.f32 %v2936, %v3216
        %v3295 = vadd.f32 %v2937, %v3221
        %v3296 = vadd.f32 %v2938, %v3226
        %v3297 = vadd.f32 %v2939, %v3231
        %v3298 = vadd.f32 %v2940, %v3236
        %v3299 = vadd.f32 %v2941, %v3241
        %v3300 = vadd.f32 %v2942, %v3246
        %v3301 = vadd.f32 %v2943, %v3251
        %v3302 = vadd.f32 %v2944, %v3256
        %v3303 = vadd.f32 %v2945, %v3261
        %v3304 = vadd.f32 %v2946, %v3266
        %v3305 = vadd.f32 %v2947, %v3271
        %s3306 = scalar_lea.vmem %s1, 32
        %v3307 = vld [vmem:[%s3306] sm:$0xf]
        %v3309 = vsel %vm508, %v473, 0
        %v3312 = vsel %vm508, %v474, 0
        %v3315 = vsel %vm508, %v475, 0
        %v3318 = vsel %vm508, %v476, 0
        %v3321 = vsel %vm508, %v477, 0
        %v3324 = vsel %vm508, %v478, 0
        %v3327 = vsel %vm508, %v479, 0
        %v3330 = vsel %vm508, %v480, 0
        %v3333 = vsel %vm508, %v481, 0
        %v3336 = vsel %vm508, %v482, 0
        %v3339 = vsel %vm508, %v483, 0
        %v3342 = vsel %vm508, %v484, 0
        %v3345 = vsel %vm508, %v485, 0
        %v3348 = vsel %vm508, %v486, 0
        %v3351 = vsel %vm508, %v487, 0
        %v3354 = vsel %vm508, %v488, 0
        %v3357 = vsel %vm508, %v489, 0
        %v3360 = vsel %vm508, %v490, 0
        %v3363 = vsel %vm508, %v491, 0
        %v3366 = vsel %vm508, %v492, 0
        %v3369 = vsel %vm508, %v493, 0
        %v3372 = vsel %vm508, %v494, 0
        %v3375 = vsel %vm508, %v495, 0
        %v3378 = vsel %vm508, %v496, 0
        %v3381 = vsel %vm508, %v497, 0
        %v3384 = vsel %vm508, %v498, 0
        %v3387 = vsel %vm508, %v499, 0
        %v3390 = vsel %vm508, %v500, 0
        %v3393 = vsel %vm508, %v501, 0
        %v3396 = vsel %vm508, %v502, 0
        %v3399 = vsel %vm508, %v503, 0
        %v3402 = vsel %vm508, %v504, 0
        %v3405 = vsel %vm605, %v3307, 0
        %3407 = vmatprep.subr.mxu0 0.0
        %3408 = vmatpush1.msra.mxu0 %v3405
        %3409 = vmatprep.subr.mxu0 0.0
        %3410 = vmatpush1.msra.mxu0 0.0
        %3411 = vmatprep.subr.mxu0 0.0
        %3412 = vmatpush1.msra.mxu0 0.0
        %3413 = vmatprep.subr.mxu0 0.0
        %3414 = vmatpush1.msra.mxu0 0.0
        %3415 = vmatprep.subr.mxu0 0.0
        %3416 = vmatpush1.msra.mxu0 0.0
        %3417 = vmatprep.subr.mxu0 0.0
        %3418 = vmatpush1.msra.mxu0 0.0
        %3419 = vmatprep.subr.mxu0 0.0
        %3420 = vmatpush1.msra.mxu0 0.0
        %3421 = vmatprep.subr.mxu0 0.0
        %3422 = vmatpush1.msra.mxu0 0.0
        %3423 = vmatprep.subr.mxu0 0.0
        %3424 = vmatpush1.msra.mxu0 0.0
        %3425 = vmatprep.subr.mxu0 0.0
        %3426 = vmatpush1.msra.mxu0 0.0
        %3427 = vmatprep.subr.mxu0 0.0
        %3428 = vmatpush1.msra.mxu0 0.0
        %3429 = vmatprep.subr.mxu0 0.0
        %3430 = vmatpush1.msra.mxu0 0.0
        %3431 = vmatprep.subr.mxu0 0.0
        %3432 = vmatpush1.msra.mxu0 0.0
        %3433 = vmatprep.subr.mxu0 0.0
        %3434 = vmatpush1.msra.mxu0 0.0
        %3435 = vmatprep.subr.mxu0 0.0
        %3436 = vmatpush1.msra.mxu0 0.0
        %3437 = vmatprep.subr.mxu0 0.0
        %3438 = vmatpush1.msra.mxu0 0.0
        %3439 = vmatprep.subr.mxu0 0.0
        %3440 = vmatpush1.msra.mxu0 0.0
        %3441 = vmatprep.subr.mxu0 0.0
        %3442 = vmatpush1.msra.mxu0 0.0
        %3443 = vmatprep.subr.mxu0 0.0
        %3444 = vmatpush1.msra.mxu0 0.0
        %3445 = vmatprep.subr.mxu0 0.0
        %3446 = vmatpush1.msra.mxu0 0.0
        %3447 = vmatprep.subr.mxu0 0.0
        %3448 = vmatpush1.msra.mxu0 0.0
        %3449 = vmatprep.subr.mxu0 0.0
        %3450 = vmatpush1.msra.mxu0 0.0
        %3451 = vmatprep.subr.mxu0 0.0
        %3452 = vmatpush1.msra.mxu0 0.0
        %3453 = vmatprep.subr.mxu0 0.0
        %3454 = vmatpush1.msra.mxu0 0.0
        %3455 = vmatprep.subr.mxu0 0.0
        %3456 = vmatpush1.msra.mxu0 0.0
        %3457 = vmatprep.subr.mxu0 0.0
        %3458 = vmatpush1.msra.mxu0 0.0
        %3459 = vmatprep.subr.mxu0 0.0
        %3460 = vmatpush1.msra.mxu0 0.0
        %3461 = vmatprep.subr.mxu0 0.0
        %3462 = vmatpush1.msra.mxu0 0.0
        %3463 = vmatprep.subr.mxu0 0.0
        %3464 = vmatpush1.msra.mxu0 0.0
        %3465 = vmatprep.subr.mxu0 0.0
        %3466 = vmatpush1.msra.mxu0 0.0
        %3467 = vmatprep.subr.mxu0 0.0
        %3468 = vmatpush1.msra.mxu0 0.0
        %3469 = vmatprep.subr.mxu0 0.0
        %3470 = vmatpush1.msra.mxu0 0.0
        %3471 = vmatprep.mubr.f32.mxu0 0.0
        %3472 = vmatmul.mubr.f32.gmra.mrb[0].mxu0 %v3309
        %v3473 = vpop.f32.mrb[0].mxu0
        %v3474 = vadd.f32 0.0, %v3473
        %v3475 = vpop.f32.mrb[0].mxu0
        %3476 = vmatprep.mubr.f32.mxu0 0.0
        %3477 = vmatmul.mubr.f32.gmra.mrb[0].mxu0 %v3312
        %v3478 = vpop.f32.mrb[0].mxu0
        %v3479 = vadd.f32 0.0, %v3478
        %v3480 = vpop.f32.mrb[0].mxu0
        %3481 = vmatprep.mubr.f32.mxu0 0.0
        %3482 = vmatmul.mubr.f32.gmra.mrb[0].mxu0 %v3315
        %v3483 = vpop.f32.mrb[0].mxu0
        %v3484 = vadd.f32 0.0, %v3483
        %v3485 = vpop.f32.mrb[0].mxu0
        %3486 = vmatprep.mubr.f32.mxu0 0.0
        %3487 = vmatmul.mubr.f32.gmra.mrb[0].mxu0 %v3318
        %v3488 = vpop.f32.mrb[0].mxu0
        %v3489 = vadd.f32 0.0, %v3488
        %v3490 = vpop.f32.mrb[0].mxu0
        %3491 = vmatprep.mubr.f32.mxu0 0.0
        %3492 = vmatmul.mubr.f32.gmra.mrb[0].mxu0 %v3321
        %v3493 = vpop.f32.mrb[0].mxu0
        %v3494 = vadd.f32 0.0, %v3493
        %v3495 = vpop.f32.mrb[0].mxu0
        %3496 = vmatprep.mubr.f32.mxu0 0.0
        %3497 = vmatmul.mubr.f32.gmra.mrb[0].mxu0 %v3324
        %v3498 = vpop.f32.mrb[0].mxu0
        %v3499 = vadd.f32 0.0, %v3498
        %v3500 = vpop.f32.mrb[0].mxu0
        %3501 = vmatprep.mubr.f32.mxu0 0.0
        %3502 = vmatmul.mubr.f32.gmra.mrb[0].mxu0 %v3327
        %v3503 = vpop.f32.mrb[0].mxu0
        %v3504 = vadd.f32 0.0, %v3503
        %v3505 = vpop.f32.mrb[0].mxu0
        %3506 = vmatprep.mubr.f32.mxu0 0.0
        %3507 = vmatmul.mubr.f32.gmra.mrb[0].mxu0 %v3330
        %v3508 = vpop.f32.mrb[0].mxu0
        %v3509 = vadd.f32 0.0, %v3508
        %v3510 = vpop.f32.mrb[0].mxu0
        %3511 = vmatprep.mubr.f32.mxu0 0.0
        %3512 = vmatmul.mubr.f32.gmra.mrb[0].mxu0 %v3333
        %v3513 = vpop.f32.mrb[0].mxu0
        %v3514 = vadd.f32 0.0, %v3513
        %v3515 = vpop.f32.mrb[0].mxu0
        %3516 = vmatprep.mubr.f32.mxu0 0.0
        %3517 = vmatmul.mubr.f32.gmra.mrb[0].mxu0 %v3336
        %v3518 = vpop.f32.mrb[0].mxu0
        %v3519 = vadd.f32 0.0, %v3518
        %v3520 = vpop.f32.mrb[0].mxu0
        %3521 = vmatprep.mubr.f32.mxu0 0.0
        %3522 = vmatmul.mubr.f32.gmra.mrb[0].mxu0 %v3339
        %v3523 = vpop.f32.mrb[0].mxu0
        %v3524 = vadd.f32 0.0, %v3523
        %v3525 = vpop.f32.mrb[0].mxu0
        %3526 = vmatprep.mubr.f32.mxu0 0.0
        %3527 = vmatmul.mubr.f32.gmra.mrb[0].mxu0 %v3342
        %v3528 = vpop.f32.mrb[0].mxu0
        %v3529 = vadd.f32 0.0, %v3528
        %v3530 = vpop.f32.mrb[0].mxu0
        %3531 = vmatprep.mubr.f32.mxu0 0.0
        %3532 = vmatmul.mubr.f32.gmra.mrb[0].mxu0 %v3345
        %v3533 = vpop.f32.mrb[0].mxu0
        %v3534 = vadd.f32 0.0, %v3533
        %v3535 = vpop.f32.mrb[0].mxu0
        %3536 = vmatprep.mubr.f32.mxu0 0.0
        %3537 = vmatmul.mubr.f32.gmra.mrb[0].mxu0 %v3348
        %v3538 = vpop.f32.mrb[0].mxu0
        %v3539 = vadd.f32 0.0, %v3538
        %v3540 = vpop.f32.mrb[0].mxu0
        %3541 = vmatprep.mubr.f32.mxu0 0.0
        %3542 = vmatmul.mubr.f32.gmra.mrb[0].mxu0 %v3351
        %v3543 = vpop.f32.mrb[0].mxu0
        %v3544 = vadd.f32 0.0, %v3543
        %v3545 = vpop.f32.mrb[0].mxu0
        %3546 = vmatprep.mubr.f32.mxu0 0.0
        %3547 = vmatmul.mubr.f32.gmra.mrb[0].mxu0 %v3354
        %v3548 = vpop.f32.mrb[0].mxu0
        %v3549 = vadd.f32 0.0, %v3548
        %v3550 = vpop.f32.mrb[0].mxu0
        %3551 = vmatprep.mubr.f32.mxu0 0.0
        %3552 = vmatmul.mubr.f32.gmra.mrb[0].mxu0 %v3357
        %v3553 = vpop.f32.mrb[0].mxu0
        %v3554 = vadd.f32 0.0, %v3553
        %v3555 = vpop.f32.mrb[0].mxu0
        %3556 = vmatprep.mubr.f32.mxu0 0.0
        %3557 = vmatmul.mubr.f32.gmra.mrb[0].mxu0 %v3360
        %v3558 = vpop.f32.mrb[0].mxu0
        %v3559 = vadd.f32 0.0, %v3558
        %v3560 = vpop.f32.mrb[0].mxu0
        %3561 = vmatprep.mubr.f32.mxu0 0.0
        %3562 = vmatmul.mubr.f32.gmra.mrb[0].mxu0 %v3363
        %v3563 = vpop.f32.mrb[0].mxu0
        %v3564 = vadd.f32 0.0, %v3563
        %v3565 = vpop.f32.mrb[0].mxu0
        %3566 = vmatprep.mubr.f32.mxu0 0.0
        %3567 = vmatmul.mubr.f32.gmra.mrb[0].mxu0 %v3366
        %v3568 = vpop.f32.mrb[0].mxu0
        %v3569 = vadd.f32 0.0, %v3568
        %v3570 = vpop.f32.mrb[0].mxu0
        %3571 = vmatprep.mubr.f32.mxu0 0.0
        %3572 = vmatmul.mubr.f32.gmra.mrb[0].mxu0 %v3369
        %v3573 = vpop.f32.mrb[0].mxu0
        %v3574 = vadd.f32 0.0, %v3573
        %v3575 = vpop.f32.mrb[0].mxu0
        %3576 = vmatprep.mubr.f32.mxu0 0.0
        %3577 = vmatmul.mubr.f32.gmra.mrb[0].mxu0 %v3372
        %v3578 = vpop.f32.mrb[0].mxu0
        %v3579 = vadd.f32 0.0, %v3578
        %v3580 = vpop.f32.mrb[0].mxu0
        %3581 = vmatprep.mubr.f32.mxu0 0.0
        %3582 = vmatmul.mubr.f32.gmra.mrb[0].mxu0 %v3375
        %v3583 = vpop.f32.mrb[0].mxu0
        %v3584 = vadd.f32 0.0, %v3583
        %v3585 = vpop.f32.mrb[0].mxu0
        %3586 = vmatprep.mubr.f32.mxu0 0.0
        %3587 = vmatmul.mubr.f32.gmra.mrb[0].mxu0 %v3378
        %v3588 = vpop.f32.mrb[0].mxu0
        %v3589 = vadd.f32 0.0, %v3588
        %v3590 = vpop.f32.mrb[0].mxu0
        %3591 = vmatprep.mubr.f32.mxu0 0.0
        %3592 = vmatmul.mubr.f32.gmra.mrb[0].mxu0 %v3381
        %v3593 = vpop.f32.mrb[0].mxu0
        %v3594 = vadd.f32 0.0, %v3593
        %v3595 = vpop.f32.mrb[0].mxu0
        %3596 = vmatprep.mubr.f32.mxu0 0.0
        %3597 = vmatmul.mubr.f32.gmra.mrb[0].mxu0 %v3384
        %v3598 = vpop.f32.mrb[0].mxu0
        %v3599 = vadd.f32 0.0, %v3598
        %v3600 = vpop.f32.mrb[0].mxu0
        %3601 = vmatprep.mubr.f32.mxu0 0.0
        %3602 = vmatmul.mubr.f32.gmra.mrb[0].mxu0 %v3387
        %v3603 = vpop.f32.mrb[0].mxu0
        %v3604 = vadd.f32 0.0, %v3603
        %v3605 = vpop.f32.mrb[0].mxu0
        %3606 = vmatprep.mubr.f32.mxu0 0.0
        %3607 = vmatmul.mubr.f32.gmra.mrb[0].mxu0 %v3390
        %v3608 = vpop.f32.mrb[0].mxu0
        %v3609 = vadd.f32 0.0, %v3608
        %v3610 = vpop.f32.mrb[0].mxu0
        %3611 = vmatprep.mubr.f32.mxu0 0.0
        %3612 = vmatmul.mubr.f32.gmra.mrb[0].mxu0 %v3393
        %v3613 = vpop.f32.mrb[0].mxu0
        %v3614 = vadd.f32 0.0, %v3613
        %v3615 = vpop.f32.mrb[0].mxu0
        %3616 = vmatprep.mubr.f32.mxu0 0.0
        %3617 = vmatmul.mubr.f32.gmra.mrb[0].mxu0 %v3396
        %v3618 = vpop.f32.mrb[0].mxu0
        %v3619 = vadd.f32 0.0, %v3618
        %v3620 = vpop.f32.mrb[0].mxu0
        %3621 = vmatprep.mubr.f32.mxu0 0.0
        %3622 = vmatmul.mubr.f32.gmra.mrb[0].mxu0 %v3399
        %v3623 = vpop.f32.mrb[0].mxu0
        %v3624 = vadd.f32 0.0, %v3623
        %v3625 = vpop.f32.mrb[0].mxu0
        %3626 = vmatprep.mubr.f32.mxu0 0.0
        %3627 = vmatmul.mubr.f32.gmra.mrb[0].mxu0 %v3402
        %v3628 = vpop.f32.mrb[0].mxu0
        %v3629 = vadd.f32 0.0, %v3628
        %v3630 = vpop.f32.mrb[0].mxu0
        %3631 = vdwg.mxu0
        %v3632 = vadd.f32 %v3274, %v3474
        %v3633 = vadd.f32 %v3275, %v3479
        %v3634 = vadd.f32 %v3276, %v3484
        %v3635 = vadd.f32 %v3277, %v3489
        %v3636 = vadd.f32 %v3278, %v3494
        %v3637 = vadd.f32 %v3279, %v3499
        %v3638 = vadd.f32 %v3280, %v3504
        %v3639 = vadd.f32 %v3281, %v3509
        %v3640 = vadd.f32 %v3282, %v3514
        %v3641 = vadd.f32 %v3283, %v3519
        %v3642 = vadd.f32 %v3284, %v3524
        %v3643 = vadd.f32 %v3285, %v3529
        %v3644 = vadd.f32 %v3286, %v3534
        %v3645 = vadd.f32 %v3287, %v3539
        %v3646 = vadd.f32 %v3288, %v3544
        %v3647 = vadd.f32 %v3289, %v3549
        %v3648 = vadd.f32 %v3290, %v3554
        %v3649 = vadd.f32 %v3291, %v3559
        %v3650 = vadd.f32 %v3292, %v3564
        %v3651 = vadd.f32 %v3293, %v3569
        %v3652 = vadd.f32 %v3294, %v3574
        %v3653 = vadd.f32 %v3295, %v3579
        %v3654 = vadd.f32 %v3296, %v3584
        %v3655 = vadd.f32 %v3297, %v3589
        %v3656 = vadd.f32 %v3298, %v3594
        %v3657 = vadd.f32 %v3299, %v3599
        %v3658 = vadd.f32 %v3300, %v3604
        %v3659 = vadd.f32 %v3301, %v3609
        %v3660 = vadd.f32 %v3302, %v3614
        %v3661 = vadd.f32 %v3303, %v3619
        %v3662 = vadd.f32 %v3304, %v3624
        %v3663 = vadd.f32 %v3305, %v3629
        %p3664 = scmp.eq.s32.totalorder %s26, 0
        // Predicated region
        $region29: #{tpu_custom_call.1} parent=27 // pred_check
          %p3665 = pneg %p3664
        $region30: #{tpu_custom_call.1} parent=27 // pred_check_branch
          %3667 = sbr.rel (%p3665) target = $region32
        $region31: #{tpu_custom_call.1} parent=27 // pred_region
          %3668 = vst [vmem:[%s178] sm:$0x1] 0.0
          %3669 = vst [vmem:[%s184] sm:$0x1] 0.0
        $region32: #{tpu_custom_call.1} parent=27 // pred_fallthru
          _
        %v3670 = vld [vmem:[%s178] sm:$0x1]
        %v3671 = vadd.f32 %v3632, %v3633
        %v3672 = vadd.f32 %v3671, %v3634
        %v3673 = vadd.f32 %v3672, %v3635
        %v3674 = vadd.f32 %v3673, %v3636
        %v3675 = vadd.f32 %v3674, %v3637
        %v3676 = vadd.f32 %v3675, %v3638
        %v3677 = vadd.f32 %v3676, %v3639
        %v3678 = vadd.f32 %v3677, %v3640
        %v3679 = vadd.f32 %v3678, %v3641
        %v3680 = vadd.f32 %v3679, %v3642
        %v3681 = vadd.f32 %v3680, %v3643
        %v3682 = vadd.f32 %v3681, %v3644
        %v3683 = vadd.f32 %v3682, %v3645
        %v3684 = vadd.f32 %v3683, %v3646
        %v3685 = vadd.f32 %v3684, %v3647
        %v3686 = vadd.f32 %v3685, %v3648
        %v3687 = vadd.f32 %v3686, %v3649
        %v3688 = vadd.f32 %v3687, %v3650
        %v3689 = vadd.f32 %v3688, %v3651
        %v3690 = vadd.f32 %v3689, %v3652
        %v3691 = vadd.f32 %v3690, %v3653
        %v3692 = vadd.f32 %v3691, %v3654
        %v3693 = vadd.f32 %v3692, %v3655
        %v3694 = vadd.f32 %v3693, %v3656
        %v3695 = vadd.f32 %v3694, %v3657
        %v3696 = vadd.f32 %v3695, %v3658
        %v3697 = vadd.f32 %v3696, %v3659
        %v3698 = vadd.f32 %v3697, %v3660
        %v3699 = vadd.f32 %v3698, %v3661
        %v3700 = vadd.f32 %v3699, %v3662
        %v3701 = vadd.f32 %v3700, %v3663
        %v3702 = vrot.slane %v3701, 4
        %v3703 = vadd.f32 %v3701, %v3702
        %v3704 = vrot.slane %v3703, 2
        %v3705 = vadd.f32 %v3703, %v3704
        %v3706 = vrot.slane %v3705, 1
        %v3707 = vadd.f32 %v3705, %v3706
        %v3708 = vadd.f32 %v3670, %v3707
        %3709 = vst [vmem:[%s178] sm:$0x1] %v3708
        %v3710 = vld [vmem:[%s184] sm:$0x1]
        %v3711 = vmul.f32 %v3632, %v3632
        %v3712 = vmul.f32 %v3633, %v3633
        %v3713 = vmul.f32 %v3634, %v3634
        %v3714 = vmul.f32 %v3635, %v3635
        %v3715 = vmul.f32 %v3636, %v3636
        %v3716 = vmul.f32 %v3637, %v3637
        %v3717 = vmul.f32 %v3638, %v3638
        %v3718 = vmul.f32 %v3639, %v3639
        %v3719 = vmul.f32 %v3640, %v3640
        %v3720 = vmul.f32 %v3641, %v3641
        %v3721 = vmul.f32 %v3642, %v3642
        %v3722 = vmul.f32 %v3643, %v3643
        %v3723 = vmul.f32 %v3644, %v3644
        %v3724 = vmul.f32 %v3645, %v3645
        %v3725 = vmul.f32 %v3646, %v3646
        %v3726 = vmul.f32 %v3647, %v3647
        %v3727 = vmul.f32 %v3648, %v3648
        %v3728 = vmul.f32 %v3649, %v3649
        %v3729 = vmul.f32 %v3650, %v3650
        %v3730 = vmul.f32 %v3651, %v3651
        %v3731 = vmul.f32 %v3652, %v3652
        %v3732 = vmul.f32 %v3653, %v3653
        %v3733 = vmul.f32 %v3654, %v3654
        %v3734 = vmul.f32 %v3655, %v3655
        %v3735 = vmul.f32 %v3656, %v3656
        %v3736 = vmul.f32 %v3657, %v3657
        %v3737 = vmul.f32 %v3658, %v3658
        %v3738 = vmul.f32 %v3659, %v3659
        %v3739 = vmul.f32 %v3660, %v3660
        %v3740 = vmul.f32 %v3661, %v3661
        %v3741 = vmul.f32 %v3662, %v3662
        %v3742 = vmul.f32 %v3663, %v3663
        %v3743 = vadd.f32 %v3711, %v3712
        %v3744 = vadd.f32 %v3743, %v3713
        %v3745 = vadd.f32 %v3744, %v3714
        %v3746 = vadd.f32 %v3745, %v3715
        %v3747 = vadd.f32 %v3746, %v3716
        %v3748 = vadd.f32 %v3747, %v3717
        %v3749 = vadd.f32 %v3748, %v3718
        %v3750 = vadd.f32 %v3749, %v3719
        %v3751 = vadd.f32 %v3750, %v3720
        %v3752 = vadd.f32 %v3751, %v3721
        %v3753 = vadd.f32 %v3752, %v3722
        %v3754 = vadd.f32 %v3753, %v3723
        %v3755 = vadd.f32 %v3754, %v3724
        %v3756 = vadd.f32 %v3755, %v3725
        %v3757 = vadd.f32 %v3756, %v3726
        %v3758 = vadd.f32 %v3757, %v3727
        %v3759 = vadd.f32 %v3758, %v3728
        %v3760 = vadd.f32 %v3759, %v3729
        %v3761 = vadd.f32 %v3760, %v3730
        %v3762 = vadd.f32 %v3761, %v3731
        %v3763 = vadd.f32 %v3762, %v3732
        %v3764 = vadd.f32 %v3763, %v3733
        %v3765 = vadd.f32 %v3764, %v3734
        %v3766 = vadd.f32 %v3765, %v3735
        %v3767 = vadd.f32 %v3766, %v3736
        %v3768 = vadd.f32 %v3767, %v3737
        %v3769 = vadd.f32 %v3768, %v3738
        %v3770 = vadd.f32 %v3769, %v3739
        %v3771 = vadd.f32 %v3770, %v3740
        %v3772 = vadd.f32 %v3771, %v3741
        %v3773 = vadd.f32 %v3772, %v3742
        %v3774 = vrot.slane %v3773, 4
        %v3775 = vadd.f32 %v3773, %v3774
        %v3776 = vrot.slane %v3775, 2
        %v3777 = vadd.f32 %v3775, %v3776
        %v3778 = vrot.slane %v3777, 1
        %v3779 = vadd.f32 %v3777, %v3778
        %v3780 = vadd.f32 %v3710, %v3779
        %3781 = vst [vmem:[%s184] sm:$0x1] %v3780
        %s3782 = sand.u32 %s88, 1
        %s3783 = scalar_lea.sflag [#allocation3], %s3782
        %s3784 = sand.u32 %s88, 1
        %s3785 = scalar_lea.vmem [#allocation2], %s3784
        %s3786 = sand.u32 %s114, 1
        %s3787 = scalar_lea.sflag [#allocation5], %s3786
        %s3788 = sand.u32 %s114, 1
        %s3789 = scalar_lea.vmem [#allocation4], %s3788
        // Predicated region
        $region33: #{tpu_custom_call.1} parent=27 // pred_check
          %p3790 = pneg %p98
        $region34: #{tpu_custom_call.1} parent=27 // pred_check_branch
          %3792 = sbr.rel (%p3790) target = $region36
        $region35: #{tpu_custom_call.1} parent=27 // pred_region
          %s3794 = ssub.s32 16, 16
          %3795 = vsyncadd %s3783, %s3794
          %s3796 = smul.addr %s25, 16
          %s3797 = scalar_lea.hbm %s2, %s3796
          %s3799 = sshll.u32 %s3785, 4
          %s3800 = int_to_ptr.vmem [resolvable:$true] %s3799
          %3802 = dma.vmem_to_hbm [thread:$0]  %s3800, 16, %s3797, %s3783
        $region36: #{tpu_custom_call.1} parent=27 // pred_fallthru
          _
        // Predicated region
        $region37: #{tpu_custom_call.1} parent=27 // pred_check
          %p3803 = pneg %p124
        $region38: #{tpu_custom_call.1} parent=27 // pred_check_branch
          %3805 = sbr.rel (%p3803) target = $region40
        $region39: #{tpu_custom_call.1} parent=27 // pred_region
          %s3807 = ssub.s32 16, 16
          %3808 = vsyncadd %s3787, %s3807
          %s3809 = smul.addr %s25, 16
          %s3810 = scalar_lea.hbm %s3, %s3809
          %s3812 = sshll.u32 %s3789, 4
          %s3813 = int_to_ptr.vmem [resolvable:$true] %s3812
          %3815 = dma.vmem_to_hbm [thread:$0]  %s3813, 16, %s3810, %s3787
        $region40: #{tpu_custom_call.1} parent=27 // pred_fallthru
          _
      $region28: #{tpu_custom_call.1} parent=5 // pred_fallthru
        _
      %p3816 = scmp.le.s32.totalorder 2, %s16
      // Predicated region
      $region41: #{tpu_custom_call.1} parent=5 // pred_check
        %p3817 = pneg %p3816
      $region42: #{tpu_custom_call.1} parent=5 // pred_check_branch
        %3819 = sbr.rel (%p3817) target = $region44
      $region43: #{tpu_custom_call.1} parent=5 // pred_region
        %s3820 = ssub.s32 %s16, 2
        // Predicated region
        $region45: #{tpu_custom_call.1} parent=43 // pred_check
          %p3821 = pneg %p104
        $region46: #{tpu_custom_call.1} parent=43 // pred_check_branch
          %3823 = sbr.rel (%p3821) target = $region48
        $region47: #{tpu_custom_call.1} parent=43 // pred_region
          %s3824 = sand.u32 %s89, 1
          %s3825 = scalar_lea.sflag [#allocation3], %s3824
          %s3826 = sand.u32 %s89, 1
          %s3827 = scalar_lea.vmem [#allocation2], %s3826
          %3828 = dma.done %s3825, 16
        $region48: #{tpu_custom_call.1} parent=43 // pred_fallthru
          _
        // Predicated region
        $region49: #{tpu_custom_call.1} parent=43 // pred_check
          %p3829 = pneg %p130
        $region50: #{tpu_custom_call.1} parent=43 // pred_check_branch
          %3831 = sbr.rel (%p3829) target = $region52
        $region51: #{tpu_custom_call.1} parent=43 // pred_region
          %s3832 = sand.u32 %s115, 1
          %s3833 = scalar_lea.sflag [#allocation5], %s3832
          %s3834 = sand.u32 %s115, 1
          %s3835 = scalar_lea.vmem [#allocation4], %s3834
          %3836 = dma.done %s3833, 16
        $region52: #{tpu_custom_call.1} parent=43 // pred_fallthru
          _
      $region44: #{tpu_custom_call.1} parent=5 // pred_fallthru
        _
    $region6: #{tpu_custom_call.1} parent=1 // loop_footer
      %s20 = sadd.s32 1, %s16
    $region7: #{tpu_custom_call.1} parent=1 // loop_footer_branch
      %15 = sbr.rel target = $region3
    $region8: #{tpu_custom_call.1} parent=1 // loop_exit
      _
    %3837 = vsyncpa [#allocation3], 1
    %s3838 = scalar_lea.sflag [#allocation3], 1
    %3839 = vsyncpa %s3838, 1
    %3840 = vsyncpa [#allocation5], 1
    %s3841 = scalar_lea.sflag [#allocation5], 1
    %3842 = vsyncpa %s3841, 1

</llo_original>
